<compile_context>
chip_gen: v7x
topology: tpu7x:2x2x1
jax: 0.10.0
libtpu: 0.0.40
codegen_flags: <defaults>
</compile_context>

<pallas_src>
import math

import jax
import jax.numpy as jnp
from jax.experimental import pallas as pl
from jax.experimental.pallas import tpu as pltpu


_TOP_PAD = 8   # interior rows start on a full sublane group (bf16-pack aligned)


def _rup(x, m):
    return (x + m - 1) // m * m


def _sec_rows(H):
    # Rows per image in the halo slab: unused top rows, 1 real top-halo row,
    # H interior rows, 1 bottom-halo row, rounded to a sublane group.
    return _rup(_TOP_PAD + H + 1, 8)


# ---------------------------------------------------------------------------
# Pallas kernels
# ---------------------------------------------------------------------------

def _make_conv_kernel(nb, bt, H, K, N, sec, has_se):
    """3x3 conv (3 row-shifted banded matmuls) + bias + (masked) SiLU [+ SE]."""

    def fill_slab(x_refs, pad_ref):
        zrow = jnp.zeros((1, nb * K), pad_ref.dtype)
        for b in range(bt):
            r0 = b * sec
            # Zero only the 2 halo rows.  Done every step (tiny) so it stays
            # correct when the parallel grid axis is split across TensorCores.
            pad_ref[r0 + _TOP_PAD - 1:r0 + _TOP_PAD, :] = zrow
            pad_ref[r0 + _TOP_PAD + H:r0 + _TOP_PAD + H + 1, :] = zrow
            for j in range(nb):
                # One aligned, unmasked copy of the input (lane offset j*K is a
                # multiple of 128, row offset _TOP_PAD is a full sublane group).
                pad_ref[r0 + _TOP_PAD:r0 + _TOP_PAD + H, j * K:(j + 1) * K] = (
                    x_refs[j][b * H:(b + 1) * H, :])

    def conv_rows(w_refs, pad_ref, bias_ref, b):
        r0 = b * sec
        acc = None
        for j in range(nb):                       # input branches (concat fusion)
            for ky in range(3):                   # vertical taps
                lhs = pad_ref[r0 + _TOP_PAD - 1 + ky:r0 + _TOP_PAD - 1 + ky + H,
                              j * K:(j + 1) * K]
                part = jnp.dot(lhs, w_refs[j][ky],
                               preferred_element_type=jnp.float32)
                acc = part if acc is None else acc + part
        return acc + bias_ref[...]                # (H, N) f32

    if not has_se:
        def kernel(*args):
            x_refs = args[:nb]
            w_refs = args[nb:2 * nb]
            bias_ref, mask_ref, o_ref, pad_ref = args[2 * nb:2 * nb + 4]
            fill_slab(x_refs, pad_ref)
            m = mask_ref[...]                     # (1, N): 1 -> SiLU, 0 -> copy
            for b in range(bt):
                acc = conv_rows(w_refs, pad_ref, bias_ref, b)
                y = acc * (m * jax.nn.sigmoid(acc) + (1.0 - m))   # masked SiLU
                o_ref[b * H:(b + 1) * H, :] = y.astype(o_ref.dtype)
        return kernel

    def kernel(*args):
        x_refs = args[:nb]
        w_refs = args[nb:2 * nb]
        (bias_ref, pool_ref, tile_ref, w1_ref, b1_ref, w2_ref, b2_ref,
         o_ref, pad_ref) = args[2 * nb:2 * nb + 9]
        fill_slab(x_refs, pad_ref)
        for b in range(bt):
            acc = conv_rows(w_refs, pad_ref, bias_ref, b)
            y = acc * jax.nn.sigmoid(acc)                         # SiLU, f32
            # --- SE on the conv output already resident in registers ---
            rowsum = jnp.sum(y, axis=0, keepdims=True)            # (1, N)
            pooled = jnp.dot(rowsum, pool_ref[...],
                             preferred_element_type=jnp.float32)  # (1, C)
            h = jnp.dot(pooled, w1_ref[...],
                        preferred_element_type=jnp.float32) + b1_ref[...]
            h = h * jax.nn.sigmoid(h)                             # SiLU
            g = jax.nn.sigmoid(
                jnp.dot(h, w2_ref[...],
                        preferred_element_type=jnp.float32) + b2_ref[...])
            gw = jnp.dot(g, tile_ref[...],
                         preferred_element_type=jnp.float32)      # (1, N) gate
            o_ref[b * H:(b + 1) * H, :] = (y * gw).astype(o_ref.dtype)
    return kernel


# ---------------------------------------------------------------------------
# VMEM sizing / wrapper
# ---------------------------------------------------------------------------

def _vmem_limit_bytes():
    cap = 64 * 1024 * 1024                       # v7x per-TC floor
    try:
        cap = int(getattr(pltpu.get_tpu_info(), "vmem_capacity_bytes", cap))
    except Exception:
        pass
    return min(cap * 3 // 4, 96 * 1024 * 1024)   # ~48 MiB v7x, 96 MiB v5e/v6e


def _tile_bytes(rows, cols, itemsize):
    # Mosaic pads the last dim to 128 lanes and the 2nd-to-last to a sublane
    # group (8 for f32, 16 for bf16).
    sub = 8 if itemsize >= 4 else 8 * (4 // itemsize)
    return _rup(max(rows, 1), sub) * _rup(max(cols, 1), 128) * itemsize


def _pick_bt(B, H, nb, K, N, itemsize, budget):
    sec = _sec_rows(H)

    def footprint(bt):
        fp = nb * 2 * _tile_bytes(bt * H, K, itemsize)   # inputs (double buffer)
        fp += 2 * _tile_bytes(bt * H, N, itemsize)       # output (double buffer)
        fp += nb * _tile_bytes(3 * K, N, itemsize)       # banded weights
        fp += _tile_bytes(bt * sec, nb * K, itemsize)    # halo slab scratch
        fp += 2 * _tile_bytes(H, N, 4)                   # f32 accum / epilogue
        return fp

    best = 1
    # Cap at B//2 so the grid keeps >= 2 parallel steps (both v7x TensorCores).
    for cand in range(1, max(1, B // 2) + 1):
        if B % cand == 0 and footprint(cand) <= budget:
            best = cand
    return best


def conv_block_apply(xs, w_list, bias_wide, mask_wide=None, se=None, *,
                     B, H, compute_dtype):
    """Fused RepVGG 3x3 conv (pad=1, stride=1) + bias + (masked) SiLU [+ SE].

    xs:     list of lane-dense activations, each (B*H, W*Cin_branch).
    w_list: matching list of banded weights, each (3, W*Cin_branch, W*Cout).
    """
    nb = len(xs)
    cdt = compute_dtype
    K = xs[0].shape[1]
    N = w_list[0].shape[2]
    itemsize = jnp.dtype(cdt).itemsize
    vmem_limit = _vmem_limit_bytes()
    bt = _pick_bt(B, H, nb, K, N, itemsize, budget=vmem_limit * 3 // 5)
    sec = _sec_rows(H)

    kernel = _make_conv_kernel(nb, bt, H, K, N, sec, has_se=se is not None)

    def full_spec(shape):
        r = len(shape)
        return pl.BlockSpec(shape, lambda i, _r=r: (0,) * _r)

    in_specs, args = [], []
    for x in xs:
        in_specs.append(pl.BlockSpec((bt * H, K), lambda i: (i, 0)))
        args.append(x)
    for w in w_list:
        in_specs.append(full_spec((3, K, N)))
        args.append(w.astype(cdt))
    in_specs.append(full_spec((1, N)))
    args.append(bias_wide.astype(jnp.float32))
    if se is None:
        if mask_wide is None:
            mask_wide = jnp.ones((1, N), jnp.float32)
        in_specs.append(full_spec((1, N)))
        args.append(mask_wide.astype(jnp.float32))
    else:
        for a in (se["pool"], se["tile"], se["w1"], se["b1"], se["w2"], se["b2"]):
            in_specs.append(full_spec(a.shape))
            args.append(a.astype(jnp.float32))

    return pl.pallas_call(
        kernel,
        out_shape=jax.ShapeDtypeStruct((B * H, N), cdt),
        grid_spec=pltpu.PrefetchScalarGridSpec(
            num_scalar_prefetch=0,
            grid=(B // bt,),
            in_specs=in_specs,
            out_specs=pl.BlockSpec((bt * H, N), lambda i: (i, 0)),
            scratch_shapes=[pltpu.VMEM((bt * sec, nb * K), cdt)],
        ),
        compiler_params=pltpu.CompilerParams(
            dimension_semantics=("parallel",),
            vmem_limit_bytes=vmem_limit,
        ),
    )(*args)


# ---------------------------------------------------------------------------
# Parameter init + RepVGG re-parameterization (eval-mode BN folding)
# ---------------------------------------------------------------------------

def make_divisible(x, divisor):
    return math.ceil(x / divisor) * divisor


def _init_bn(key, c):
    k1, k2, k3, k4 = jax.random.split(key, 4)
    return dict(
        gamma=jax.random.uniform(k1, (c,), minval=0.5, maxval=1.5),
        beta=jax.random.normal(k2, (c,)) * 0.1,
        mean=jax.random.normal(k3, (c,)) * 0.1,
        var=jax.random.uniform(k4, (c,), minval=0.5, maxval=1.5),
    )


def _fuse_bn(w_oihw, bn, eps=1e-5):
    std = jnp.sqrt(bn["var"] + eps)
    t = bn["gamma"] / std
    return w_oihw * t[:, None, None, None], bn["beta"] - bn["mean"] * t


def init_repvgg(key, cin, cout):
    """Fold a (non-deploy) RepVGG(cin, cout) block into a single 3x3 conv."""
    ks = jax.random.split(key, 5)
    w3 = jax.random.normal(ks[0], (cout, cin, 3, 3)) * 0.1   # rbr_dense.conv
    w1 = jax.random.normal(ks[1], (cout, cin, 1, 1)) * 0.1   # rbr_1x1.conv
    k3, b3 = _fuse_bn(w3, _init_bn(ks[2], cout))
    k1, b1 = _fuse_bn(w1, _init_bn(ks[3], cout))
    k = k3 + jnp.pad(k1, ((0, 0), (0, 0), (1, 1), (1, 1)))
    b = b3 + b1
    if cin == cout:                                          # rbr_identity branch
        idk = jnp.zeros((cout, cin, 3, 3)).at[
            jnp.arange(cout), jnp.arange(cin), 1, 1].set(1.0)
        kid, bid = _fuse_bn(idk, _init_bn(ks[4], cout))
        k = k + kid
        b = b + bid
    # (Cout, Cin, 3, 3) -> (ky, kx, Cin, Cout)
    return dict(w9=jnp.transpose(k, (2, 3, 1, 0)), b=b)


def init_se(key, c, reduction_ratio=8):
    cm = max(c // reduction_ratio, 1)
    k1, k2, k3, k4 = jax.random.split(key, 4)
    return dict(
        w1=jax.random.normal(k1, (c, cm)) * 0.1,
        b1=jax.random.normal(k2, (cm,)) * 0.1,
        w2=jax.random.normal(k3, (cm, c)) * 0.1,
        b2=jax.random.normal(k4, (c,)) * 0.1,
    )


def init_rcsosa(key, c1, c2, n=1, se=True, e=0.5):
    n_ = n // 2
    c_ = make_divisible(int(c1 * e), 8)
    keys = jax.random.split(key, 3 + 2 * max(n_, 1))
    return dict(
        c_=c_,
        conv1=init_repvgg(keys[0], c1, c_),
        conv3=init_repvgg(keys[1], c_ * 3, c2),
        sr1_raw=[init_repvgg(keys[2 + i], c_ // 2, c_ // 2) for i in range(n_)],
        sr2_raw=[init_repvgg(keys[2 + n_ + i], c_ // 2, c_ // 2)
                 for i in range(n_)],
        se=init_se(keys[-1], c2) if se else None,
    )


# ---------------------------------------------------------------------------
# Offline weight packing for the lane-dense banded-matmul kernels
# ---------------------------------------------------------------------------

def _band_weight(w9, W):
    """(3,3,Cin,Cout) conv weight -> (3, W*Cin, W*Cout) width-banded matrices.

    BigW[ky][wp*Cin+ci, w*Cout+co] = w9[ky, wp-w+1, ci, co] for |wp-w| <= 1,
    else 0.  The conv's width zero-padding is implicit in the band structure.
    """
    kx = jnp.arange(3)[:, None, None]
    wp = jnp.arange(W)[None, :, None]
    wo = jnp.arange(W)[None, None, :]
    band = (wp == wo + kx - 1).astype(w9.dtype)              # (3, W, W)
    big = jnp.einsum("kpw,ykio->ypiwo", band, w9)
    cin, cout = w9.shape[2], w9.shape[3]
    return big.reshape(3, W * cin, W * cout)


def _widen(v, W):
    """(C,) per-channel vector -> (1, W*C) lane-dense row (tiled over width)."""
    return jnp.tile(v, (W,)).reshape(1, -1)


def fuse_sr(p, c):
    """Fuse SR (chunk / RepVGG / concat / channel_shuffle) into one c->c conv.

    out channel 2i   = in channel i                (pass-through, no SiLU)
    out channel 2i+1 = SiLU(conv3x3(in[c/2:]))[i]  (conv half)
    """
    ch = c // 2
    w = jnp.zeros((3, 3, c, c), jnp.float32)
    w = w.at[:, :, ch:, 1::2].set(p["w9"])                       # conv path
    w = w.at[1, 1, jnp.arange(ch), 2 * jnp.arange(ch)].set(1.0)  # identity taps
    b = jnp.zeros((c,), jnp.float32).at[1::2].set(p["b"])
    mask = jnp.zeros((c,), jnp.float32).at[1::2].set(1.0)        # SiLU mask
    return dict(w9=w, b=b, mask=mask)


def pack_rcsosa(params, H, W):
    """One-time packing of the reparameterized weights for the Pallas kernels."""
    c_ = params["c_"]
    packed = dict(
        conv1=dict(w=[_band_weight(params["conv1"]["w9"], W)],
                   b=_widen(params["conv1"]["b"], W), mask=None),
        sr1=[], sr2=[],
    )
    for src, dst in (("sr1_raw", "sr1"), ("sr2_raw", "sr2")):
        for p in params[src]:
            f = fuse_sr(p, c_)
            packed[dst].append(dict(w=[_band_weight(f["w9"], W)],
                                    b=_widen(f["b"], W),
                                    mask=_widen(f["mask"], W)))
    w9 = params["conv3"]["w9"]                                   # (3,3,3c_,C2)
    c2 = w9.shape[3]
    packed["conv3"] = dict(
        w=[_band_weight(w9[:, :, j * c_:(j + 1) * c_, :], W) for j in range(3)],
        b=_widen(params["conv3"]["b"], W))
    se = params["se"]
    if se is None:
        packed["conv3"]["se"] = None
    else:
        cm = se["w1"].shape[1]
        cmp_ = max(cm, 8)                 # pad SE hidden dim -> friendlier tiles
        n = W * c2
        lane_c = jnp.arange(n) % c2
        packed["conv3"]["se"] = dict(
            pool=(lane_c[:, None] == jnp.arange(c2)[None, :]
                  ).astype(jnp.float32) / float(H * W),
            tile=(jnp.arange(c2)[:, None] == lane_c[None, :]).astype(jnp.float32),
            w1=jnp.zeros((c2, cmp_)).at[:, :cm].set(se["w1"]),
            b1=jnp.zeros((1, cmp_)).at[0, :cm].set(se["b1"]),
            w2=jnp.zeros((cmp_, c2)).at[:cm, :].set(se["w2"]),
            b2=se["b2"].reshape(1, c2),
        )
    return packed


# ---------------------------------------------------------------------------
# Forward (glue in JAX, hot path in Pallas)
# ---------------------------------------------------------------------------

def rcsosa_forward(x_nchw, packed, compute_dtype=jnp.bfloat16):
    B, C1, H, W = x_nchw.shape
    cdt = compute_dtype
    # NCHW -> lane-dense (B*H, W*C1)
    x = jnp.transpose(x_nchw, (0, 2, 3, 1)).reshape(B * H, W * C1).astype(cdt)

    c1 = packed["conv1"]
    x1 = conv_block_apply([x], c1["w"], c1["b"], B=B, H=H, compute_dtype=cdt)
    x2 = x1
    for p in packed["sr1"]:
        x2 = conv_block_apply([x2], p["w"], p["b"], mask_wide=p["mask"],
                              B=B, H=H, compute_dtype=cdt)
    x3 = x2
    for p in packed["sr2"]:
        x3 = conv_block_apply([x3], p["w"], p["b"], mask_wide=p["mask"],
                              B=B, H=H, compute_dtype=cdt)
    c3 = packed["conv3"]
    y = conv_block_apply([x1, x2, x3], c3["w"], c3["b"], se=c3["se"],
                         B=B, H=H, compute_dtype=cdt)
    C2 = y.shape[1] // W
    y = y.reshape(B, H, W, C2)
    return jnp.transpose(y, (0, 3, 1, 2)).astype(jnp.float32)   # NHWC -> NCHW


# ---------------------------------------------------------------------------
# Pure-JAX reference (un-fused SR: explicit chunk/concat/shuffle) for checks
# ---------------------------------------------------------------------------

def _channel_shuffle_nhwc(x, groups):
    B, H, W, C = x.shape
    x = x.reshape(B, H, W, groups, C // groups)
    x = jnp.transpose(x, (0, 1, 2, 4, 3))
    return x.reshape(B, H, W, C)


def _repvgg_ref(x, w9, b, cdt):
    B, H, W, Cin = x.shape
    w = w9.astype(cdt).astype(jnp.float32)
    xp = jnp.pad(x, ((0, 0), (1, 1), (1, 1), (0, 0)))
    acc = jnp.zeros((B, H, W, w9.shape[3]), jnp.float32)
    for ky in range(3):
        for kx in range(3):
            acc = acc + jnp.einsum("bhwc,co->bhwo",
                                   xp[:, ky:ky + H, kx:kx + W, :], w[ky, kx])
    acc = acc + b
    return acc * jax.nn.sigmoid(acc)


def _sr_ref(x, p, cdt):
    C = x.shape[-1]
    x1, x2 = x[..., :C // 2], x[..., C // 2:]
    y2 = _repvgg_ref(x2, p["w9"], p["b"], cdt)
    return _channel_shuffle_nhwc(jnp.concatenate([x1, y2], axis=-1), 2)


def _se_ref(x, p):
    pooled = jnp.mean(x, axis=(1, 2))
    h = pooled @ p["w1"] + p["b1"]
    h = h * jax.nn.sigmoid(h)
    g = jax.nn.sigmoid(h @ p["w2"] + p["b2"])
    return x * g[:, None, None, :]


def rcsosa_ref(x_nchw, params, cdt):
    rd = lambda a: a.astype(cdt).astype(jnp.float32)   # inter-layer storage dtype
    x = rd(jnp.transpose(x_nchw, (0, 2, 3, 1)))
    x1 = rd(_repvgg_ref(x, params["conv1"]["w9"], params["conv1"]["b"], cdt))
    x2 = x1
    for p in params["sr1_raw"]:
        x2 = rd(_sr_ref(x2, p, cdt))
    x3 = x2
    for p in params["sr2_raw"]:
        x3 = rd(_sr_ref(x3, p, cdt))
    xc = jnp.concatenate([x1, x2, x3], axis=-1)
    y = _repvgg_ref(xc, params["conv3"]["w9"], params["conv3"]["b"], cdt)
    if params["se"] is not None:
        y = _se_ref(y, params["se"])
    return jnp.transpose(rd(y), (0, 3, 1, 2))


# ---------------------------------------------------------------------------

if __name__ == "__main__":
    key = jax.random.PRNGKey(0)
    kx, kp = jax.random.split(key)

    B, C1, H, W = 2, 16, 16, 16
    C2, NUM = 16, 2                    # n=2 -> one SR block in each of sr1 / sr2

    x = jax.random.normal(kx, (B, C1, H, W), jnp.float32)
    params = init_rcsosa(kp, C1, C2, n=NUM, se=True, e=0.5)
    packed = pack_rcsosa(params, H, W)

    fwd = jax.jit(rcsosa_forward, static_argnames=("compute_dtype",))

    # Correctness check in f32 against the un-fused reference.
    out_f32 = jax.block_until_ready(fwd(x, packed, compute_dtype=jnp.float32))
    ref_f32 = rcsosa_ref(x, params, jnp.float32)
    assert out_f32.shape == (B, C2, H, W), out_f32.shape
    err = float(jnp.max(jnp.abs(out_f32 - ref_f32)))
    assert jnp.allclose(out_f32, ref_f32, atol=1e-3, rtol=1e-3), err

    # Performance path: bf16 storage / MXU inputs, f32 accumulation + epilogue.
    out_bf16 = jax.block_until_ready(fwd(x, packed, compute_dtype=jnp.bfloat16))
    ref_bf16 = rcsosa_ref(x, params, jnp.bfloat16)
    assert out_bf16.shape == (B, C2, H, W), out_bf16.shape
    err = float(jnp.max(jnp.abs(out_bf16 - ref_bf16)))
    assert jnp.allclose(out_bf16, ref_bf16, atol=2e-2, rtol=2e-2), err

    print("KERNEL_OK")
</pallas_src>

<mosaic_0001>
module attributes {stable_mosaic.version = 11 : i64} {
  func.func @kernel(%arg0: i32, %arg1: memref<16x256xf32, #tpu.memory_space<vmem>>, %arg2: memref<3x256x128xf32, #tpu.memory_space<vmem>>, %arg3: memref<1x128xf32, #tpu.memory_space<vmem>>, %arg4: memref<1x128xf32, #tpu.memory_space<vmem>>, %arg5: memref<16x128xf32, #tpu.memory_space<vmem>>, %arg6: memref<32x256xf32, #tpu.memory_space<vmem>>) attributes {dimension_semantics = [#tpu.dimension_semantics<parallel>], iteration_bounds = array<i64: 2>, scalar_prefetch = 0 : i64, scratch_operands = 1 : i64, tpu.core_type = #tpu.core_type<tc>, window_params = [{transform_indices = @transform_0, window_bounds = array<i64: 16, 256>}, {pipeline_mode = #tpu.pipeline_mode<synchronous>, transform_indices = @transform_1, window_bounds = array<i64: 3, 256, 128>}, {pipeline_mode = #tpu.pipeline_mode<synchronous>, transform_indices = @transform_2, window_bounds = array<i64: 1, 128>}, {pipeline_mode = #tpu.pipeline_mode<synchronous>, transform_indices = @transform_3, window_bounds = array<i64: 1, 128>}, {transform_indices = @transform_4, window_bounds = array<i64: 16, 128>}]} {
    %cst = arith.constant 0.000000e+00 : f32
    %0 = vector.broadcast %cst : f32 to vector<1x256xf32>
    %c7 = arith.constant 7 : index
    %c0 = arith.constant 0 : index
    %1 = vector.load %arg6[%c7, %c0] : memref<32x256xf32, #tpu.memory_space<vmem>>, vector<1x256xf32>
    tpu.vector_store %arg6[%c7, %c0], %0 {strides = array<i32>} : memref<32x256xf32, #tpu.memory_space<vmem>>, vector<1x256xf32>,
    %c24 = arith.constant 24 : index
    %c0_0 = arith.constant 0 : index
    %2 = vector.load %arg6[%c24, %c0_0] : memref<32x256xf32, #tpu.memory_space<vmem>>, vector<1x256xf32>
    tpu.vector_store %arg6[%c24, %c0_0], %0 {strides = array<i32>} : memref<32x256xf32, #tpu.memory_space<vmem>>, vector<1x256xf32>,
    %c0_1 = arith.constant 0 : index
    %c0_2 = arith.constant 0 : index
    %3 = vector.load %arg1[%c0_1, %c0_2] : memref<16x256xf32, #tpu.memory_space<vmem>>, vector<16x256xf32>
    %c8 = arith.constant 8 : index
    %c0_3 = arith.constant 0 : index
    %4 = vector.load %arg6[%c8, %c0_3] : memref<32x256xf32, #tpu.memory_space<vmem>>, vector<16x256xf32>
    tpu.vector_store %arg6[%c8, %c0_3], %3 {strides = array<i32>} : memref<32x256xf32, #tpu.memory_space<vmem>>, vector<16x256xf32>,
    %c0_4 = arith.constant 0 : index
    %c0_5 = arith.constant 0 : index
    %5 = vector.load %arg4[%c0_4, %c0_5] : memref<1x128xf32, #tpu.memory_space<vmem>>, vector<1x128xf32>
    %c7_6 = arith.constant 7 : index
    %c0_7 = arith.constant 0 : index
    %6 = vector.load %arg6[%c7_6, %c0_7] : memref<32x256xf32, #tpu.memory_space<vmem>>, vector<16x256xf32>
    %c0_8 = arith.constant 0 : index
    %c0_9 = arith.constant 0 : index
    %c0_10 = arith.constant 0 : index
    %7 = vector.load %arg2[%c0_8, %c0_9, %c0_10] : memref<3x256x128xf32, #tpu.memory_space<vmem>>, vector<1x256x128xf32>
    %8 = vector.shape_cast %7 : vector<1x256x128xf32> to vector<256x128xf32>
    %cst_11 = arith.constant dense<0.000000e+00> : vector<16x128xf32>
    %9 = tpu.matmul %6, %8, %cst_11 {dimension_numbers = #tpu.dot_dimension_numbers<[1], [0], [0], [1], [0, 0, 1, 1], [], []>} : vector<16x256xf32>, vector<256x128xf32>, vector<16x128xf32> -> vector<16x128xf32>
    %c8_12 = arith.constant 8 : index
    %c0_13 = arith.constant 0 : index
    %10 = vector.load %arg6[%c8_12, %c0_13] : memref<32x256xf32, #tpu.memory_space<vmem>>, vector<16x256xf32>
    %c1 = arith.constant 1 : index
    %c0_14 = arith.constant 0 : index
    %c0_15 = arith.constant 0 : index
    %11 = vector.load %arg2[%c1, %c0_14, %c0_15] : memref<3x256x128xf32, #tpu.memory_space<vmem>>, vector<1x256x128xf32>
    %12 = vector.shape_cast %11 : vector<1x256x128xf32> to vector<256x128xf32>
    %cst_16 = arith.constant dense<0.000000e+00> : vector<16x128xf32>
    %13 = tpu.matmul %10, %12, %cst_16 {dimension_numbers = #tpu.dot_dimension_numbers<[1], [0], [0], [1], [0, 0, 1, 1], [], []>} : vector<16x256xf32>, vector<256x128xf32>, vector<16x128xf32> -> vector<16x128xf32>
    %14 = arith.addf %9, %13 : vector<16x128xf32>
    %c9 = arith.constant 9 : index
    %c0_17 = arith.constant 0 : index
    %15 = vector.load %arg6[%c9, %c0_17] : memref<32x256xf32, #tpu.memory_space<vmem>>, vector<16x256xf32>
    %c2 = arith.constant 2 : index
    %c0_18 = arith.constant 0 : index
    %c0_19 = arith.constant 0 : index
    %16 = vector.load %arg2[%c2, %c0_18, %c0_19] : memref<3x256x128xf32, #tpu.memory_space<vmem>>, vector<1x256x128xf32>
    %17 = vector.shape_cast %16 : vector<1x256x128xf32> to vector<256x128xf32>
    %cst_20 = arith.constant dense<0.000000e+00> : vector<16x128xf32>
    %18 = tpu.matmul %15, %17, %cst_20 {dimension_numbers = #tpu.dot_dimension_numbers<[1], [0], [0], [1], [0, 0, 1, 1], [], []>} : vector<16x256xf32>, vector<256x128xf32>, vector<16x128xf32> -> vector<16x128xf32>
    %19 = arith.addf %14, %18 : vector<16x128xf32>
    %c0_21 = arith.constant 0 : index
    %c0_22 = arith.constant 0 : index
    %20 = vector.load %arg3[%c0_21, %c0_22] : memref<1x128xf32, #tpu.memory_space<vmem>>, vector<1x128xf32>
    %21 = vector.broadcast %20 : vector<1x128xf32> to vector<16x128xf32>
    %22 = arith.addf %19, %21 : vector<16x128xf32>
    %23 = arith.negf %22 : vector<16x128xf32>
    %24 = math.exp %23 : vector<16x128xf32>
    %cst_23 = arith.constant 1.000000e+00 : f32
    %25 = vector.broadcast %cst_23 : f32 to vector<16x128xf32>
    %26 = arith.addf %25, %24 : vector<16x128xf32>
    %27 = arith.divf %25, %26 : vector<16x128xf32>
    %28 = vector.broadcast %5 : vector<1x128xf32> to vector<16x128xf32>
    %29 = arith.mulf %28, %27 : vector<16x128xf32>
    %cst_24 = arith.constant 1.000000e+00 : f32
    %30 = vector.broadcast %cst_24 : f32 to vector<1x128xf32>
    %31 = arith.subf %30, %5 : vector<1x128xf32>
    %32 = vector.broadcast %31 : vector<1x128xf32> to vector<16x128xf32>
    %33 = arith.addf %29, %32 : vector<16x128xf32>
    %34 = arith.mulf %22, %33 : vector<16x128xf32>
    %c0_25 = arith.constant 0 : index
    %c0_26 = arith.constant 0 : index
    %35 = vector.load %arg5[%c0_25, %c0_26] : memref<16x128xf32, #tpu.memory_space<vmem>>, vector<16x128xf32>
    tpu.vector_store %arg5[%c0_25, %c0_26], %34 {strides = array<i32>} : memref<16x128xf32, #tpu.memory_space<vmem>>, vector<16x128xf32>,
    return
  }
  func.func @transform_0(%arg0: i32) -> (i32, i32) {
    %c0_i32 = arith.constant 0 : i32
    %c0_i32_0 = arith.constant 0 : i32
    return %arg0, %c0_i32 : i32, i32
  }
  func.func @transform_1(%arg0: i32) -> (i32, i32, i32) {
    %c0_i32 = arith.constant 0 : i32
    %c0_i32_0 = arith.constant 0 : i32
    %c0_i32_1 = arith.constant 0 : i32
    %c0_i32_2 = arith.constant 0 : i32
    return %c0_i32, %c0_i32_0, %c0_i32_1 : i32, i32, i32
  }
  func.func @transform_2(%arg0: i32) -> (i32, i32) {
    %c0_i32 = arith.constant 0 : i32
    %c0_i32_0 = arith.constant 0 : i32
    %c0_i32_1 = arith.constant 0 : i32
    return %c0_i32, %c0_i32_0 : i32, i32
  }
  func.func @transform_3(%arg0: i32) -> (i32, i32) {
    %c0_i32 = arith.constant 0 : i32
    %c0_i32_0 = arith.constant 0 : i32
    %c0_i32_1 = arith.constant 0 : i32
    return %c0_i32, %c0_i32_0 : i32, i32
  }
  func.func @transform_4(%arg0: i32) -> (i32, i32) {
    %c0_i32 = arith.constant 0 : i32
    %c0_i32_0 = arith.constant 0 : i32
    return %arg0, %c0_i32 : i32, i32
  }
}

module attributes {stable_mosaic.version = 11 : i64} {
  func.func @kernel(%arg0: i32, %arg1: memref<16x128xf32, #tpu.memory_space<vmem>>, %arg2: memref<3x128x128xf32, #tpu.memory_space<vmem>>, %arg3: memref<1x128xf32, #tpu.memory_space<vmem>>, %arg4: memref<1x128xf32, #tpu.memory_space<vmem>>, %arg5: memref<16x128xf32, #tpu.memory_space<vmem>>, %arg6: memref<32x128xf32, #tpu.memory_space<vmem>>) attributes {dimension_semantics = [#tpu.dimension_semantics<parallel>], iteration_bounds = array<i64: 2>, scalar_prefetch = 0 : i64, scratch_operands = 1 : i64, tpu.core_type = #tpu.core_type<tc>, window_params = [{transform_indices = @transform_0, window_bounds = array<i64: 16, 128>}, {pipeline_mode = #tpu.pipeline_mode<synchronous>, transform_indices = @transform_1, window_bounds = array<i64: 3, 128, 128>}, {pipeline_mode = #tpu.pipeline_mode<synchronous>, transform_indices = @transform_2, window_bounds = array<i64: 1, 128>}, {pipeline_mode = #tpu.pipeline_mode<synchronous>, transform_indices = @transform_3, window_bounds = array<i64: 1, 128>}, {transform_indices = @transform_4, window_bounds = array<i64: 16, 128>}]} {
    %cst = arith.constant 0.000000e+00 : f32
    %0 = vector.broadcast %cst : f32 to vector<1x128xf32>
    %c7 = arith.constant 7 : index
    %c0 = arith.constant 0 : index
    %1 = vector.load %arg6[%c7, %c0] : memref<32x128xf32, #tpu.memory_space<vmem>>, vector<1x128xf32>
    tpu.vector_store %arg6[%c7, %c0], %0 {strides = array<i32>} : memref<32x128xf32, #tpu.memory_space<vmem>>, vector<1x128xf32>,
    %c24 = arith.constant 24 : index
    %c0_0 = arith.constant 0 : index
    %2 = vector.load %arg6[%c24, %c0_0] : memref<32x128xf32, #tpu.memory_space<vmem>>, vector<1x128xf32>
    tpu.vector_store %arg6[%c24, %c0_0], %0 {strides = array<i32>} : memref<32x128xf32, #tpu.memory_space<vmem>>, vector<1x128xf32>,
    %c0_1 = arith.constant 0 : index
    %c0_2 = arith.constant 0 : index
    %3 = vector.load %arg1[%c0_1, %c0_2] : memref<16x128xf32, #tpu.memory_space<vmem>>, vector<16x128xf32>
    %c8 = arith.constant 8 : index
    %c0_3 = arith.constant 0 : index
    %4 = vector.load %arg6[%c8, %c0_3] : memref<32x128xf32, #tpu.memory_space<vmem>>, vector<16x128xf32>
    tpu.vector_store %arg6[%c8, %c0_3], %3 {strides = array<i32>} : memref<32x128xf32, #tpu.memory_space<vmem>>, vector<16x128xf32>,
    %c0_4 = arith.constant 0 : index
    %c0_5 = arith.constant 0 : index
    %5 = vector.load %arg4[%c0_4, %c0_5] : memref<1x128xf32, #tpu.memory_space<vmem>>, vector<1x128xf32>
    %c7_6 = arith.constant 7 : index
    %c0_7 = arith.constant 0 : index
    %6 = vector.load %arg6[%c7_6, %c0_7] : memref<32x128xf32, #tpu.memory_space<vmem>>, vector<16x128xf32>
    %c0_8 = arith.constant 0 : index
    %c0_9 = arith.constant 0 : index
    %c0_10 = arith.constant 0 : index
    %7 = vector.load %arg2[%c0_8, %c0_9, %c0_10] : memref<3x128x128xf32, #tpu.memory_space<vmem>>, vector<1x128x128xf32>
    %8 = vector.shape_cast %7 : vector<1x128x128xf32> to vector<128x128xf32>
    %cst_11 = arith.constant dense<0.000000e+00> : vector<16x128xf32>
    %9 = tpu.matmul %6, %8, %cst_11 {dimension_numbers = #tpu.dot_dimension_numbers<[1], [0], [0], [1], [0, 0, 1, 1], [], []>} : vector<16x128xf32>, vector<128x128xf32>, vector<16x128xf32> -> vector<16x128xf32>
    %c8_12 = arith.constant 8 : index
    %c0_13 = arith.constant 0 : index
    %10 = vector.load %arg6[%c8_12, %c0_13] : memref<32x128xf32, #tpu.memory_space<vmem>>, vector<16x128xf32>
    %c1 = arith.constant 1 : index
    %c0_14 = arith.constant 0 : index
    %c0_15 = arith.constant 0 : index
    %11 = vector.load %arg2[%c1, %c0_14, %c0_15] : memref<3x128x128xf32, #tpu.memory_space<vmem>>, vector<1x128x128xf32>
    %12 = vector.shape_cast %11 : vector<1x128x128xf32> to vector<128x128xf32>
    %cst_16 = arith.constant dense<0.000000e+00> : vector<16x128xf32>
    %13 = tpu.matmul %10, %12, %cst_16 {dimension_numbers = #tpu.dot_dimension_numbers<[1], [0], [0], [1], [0, 0, 1, 1], [], []>} : vector<16x128xf32>, vector<128x128xf32>, vector<16x128xf32> -> vector<16x128xf32>
    %14 = arith.addf %9, %13 : vector<16x128xf32>
    %c9 = arith.constant 9 : index
    %c0_17 = arith.constant 0 : index
    %15 = vector.load %arg6[%c9, %c0_17] : memref<32x128xf32, #tpu.memory_space<vmem>>, vector<16x128xf32>
    %c2 = arith.constant 2 : index
    %c0_18 = arith.constant 0 : index
    %c0_19 = arith.constant 0 : index
    %16 = vector.load %arg2[%c2, %c0_18, %c0_19] : memref<3x128x128xf32, #tpu.memory_space<vmem>>, vector<1x128x128xf32>
    %17 = vector.shape_cast %16 : vector<1x128x128xf32> to vector<128x128xf32>
    %cst_20 = arith.constant dense<0.000000e+00> : vector<16x128xf32>
    %18 = tpu.matmul %15, %17, %cst_20 {dimension_numbers = #tpu.dot_dimension_numbers<[1], [0], [0], [1], [0, 0, 1, 1], [], []>} : vector<16x128xf32>, vector<128x128xf32>, vector<16x128xf32> -> vector<16x128xf32>
    %19 = arith.addf %14, %18 : vector<16x128xf32>
    %c0_21 = arith.constant 0 : index
    %c0_22 = arith.constant 0 : index
    %20 = vector.load %arg3[%c0_21, %c0_22] : memref<1x128xf32, #tpu.memory_space<vmem>>, vector<1x128xf32>
    %21 = vector.broadcast %20 : vector<1x128xf32> to vector<16x128xf32>
    %22 = arith.addf %19, %21 : vector<16x128xf32>
    %23 = arith.negf %22 : vector<16x128xf32>
    %24 = math.exp %23 : vector<16x128xf32>
    %cst_23 = arith.constant 1.000000e+00 : f32
    %25 = vector.broadcast %cst_23 : f32 to vector<16x128xf32>
    %26 = arith.addf %25, %24 : vector<16x128xf32>
    %27 = arith.divf %25, %26 : vector<16x128xf32>
    %28 = vector.broadcast %5 : vector<1x128xf32> to vector<16x128xf32>
    %29 = arith.mulf %28, %27 : vector<16x128xf32>
    %cst_24 = arith.constant 1.000000e+00 : f32
    %30 = vector.broadcast %cst_24 : f32 to vector<1x128xf32>
    %31 = arith.subf %30, %5 : vector<1x128xf32>
    %32 = vector.broadcast %31 : vector<1x128xf32> to vector<16x128xf32>
    %33 = arith.addf %29, %32 : vector<16x128xf32>
    %34 = arith.mulf %22, %33 : vector<16x128xf32>
    %c0_25 = arith.constant 0 : index
    %c0_26 = arith.constant 0 : index
    %35 = vector.load %arg5[%c0_25, %c0_26] : memref<16x128xf32, #tpu.memory_space<vmem>>, vector<16x128xf32>
    tpu.vector_store %arg5[%c0_25, %c0_26], %34 {strides = array<i32>} : memref<16x128xf32, #tpu.memory_space<vmem>>, vector<16x128xf32>,
    return
  }
  func.func @transform_0(%arg0: i32) -> (i32, i32) {
    %c0_i32 = arith.constant 0 : i32
    %c0_i32_0 = arith.constant 0 : i32
    return %arg0, %c0_i32 : i32, i32
  }
  func.func @transform_1(%arg0: i32) -> (i32, i32, i32) {
    %c0_i32 = arith.constant 0 : i32
    %c0_i32_0 = arith.constant 0 : i32
    %c0_i32_1 = arith.constant 0 : i32
    %c0_i32_2 = arith.constant 0 : i32
    return %c0_i32, %c0_i32_0, %c0_i32_1 : i32, i32, i32
  }
  func.func @transform_2(%arg0: i32) -> (i32, i32) {
    %c0_i32 = arith.constant 0 : i32
    %c0_i32_0 = arith.constant 0 : i32
    %c0_i32_1 = arith.constant 0 : i32
    return %c0_i32, %c0_i32_0 : i32, i32
  }
  func.func @transform_3(%arg0: i32) -> (i32, i32) {
    %c0_i32 = arith.constant 0 : i32
    %c0_i32_0 = arith.constant 0 : i32
    %c0_i32_1 = arith.constant 0 : i32
    return %c0_i32, %c0_i32_0 : i32, i32
  }
  func.func @transform_4(%arg0: i32) -> (i32, i32) {
    %c0_i32 = arith.constant 0 : i32
    %c0_i32_0 = arith.constant 0 : i32
    return %arg0, %c0_i32 : i32, i32
  }
}

module attributes {stable_mosaic.version = 11 : i64} {
  func.func @kernel(%arg0: i32, %arg1: memref<16x128xf32, #tpu.memory_space<vmem>>, %arg2: memref<3x128x128xf32, #tpu.memory_space<vmem>>, %arg3: memref<1x128xf32, #tpu.memory_space<vmem>>, %arg4: memref<1x128xf32, #tpu.memory_space<vmem>>, %arg5: memref<16x128xf32, #tpu.memory_space<vmem>>, %arg6: memref<32x128xf32, #tpu.memory_space<vmem>>) attributes {dimension_semantics = [#tpu.dimension_semantics<parallel>], iteration_bounds = array<i64: 2>, scalar_prefetch = 0 : i64, scratch_operands = 1 : i64, tpu.core_type = #tpu.core_type<tc>, window_params = [{transform_indices = @transform_0, window_bounds = array<i64: 16, 128>}, {pipeline_mode = #tpu.pipeline_mode<synchronous>, transform_indices = @transform_1, window_bounds = array<i64: 3, 128, 128>}, {pipeline_mode = #tpu.pipeline_mode<synchronous>, transform_indices = @transform_2, window_bounds = array<i64: 1, 128>}, {pipeline_mode = #tpu.pipeline_mode<synchronous>, transform_indices = @transform_3, window_bounds = array<i64: 1, 128>}, {transform_indices = @transform_4, window_bounds = array<i64: 16, 128>}]} {
    %cst = arith.constant 0.000000e+00 : f32
    %0 = vector.broadcast %cst : f32 to vector<1x128xf32>
    %c7 = arith.constant 7 : index
    %c0 = arith.constant 0 : index
    %1 = vector.load %arg6[%c7, %c0] : memref<32x128xf32, #tpu.memory_space<vmem>>, vector<1x128xf32>
    tpu.vector_store %arg6[%c7, %c0], %0 {strides = array<i32>} : memref<32x128xf32, #tpu.memory_space<vmem>>, vector<1x128xf32>,
    %c24 = arith.constant 24 : index
    %c0_0 = arith.constant 0 : index
    %2 = vector.load %arg6[%c24, %c0_0] : memref<32x128xf32, #tpu.memory_space<vmem>>, vector<1x128xf32>
    tpu.vector_store %arg6[%c24, %c0_0], %0 {strides = array<i32>} : memref<32x128xf32, #tpu.memory_space<vmem>>, vector<1x128xf32>,
    %c0_1 = arith.constant 0 : index
    %c0_2 = arith.constant 0 : index
    %3 = vector.load %arg1[%c0_1, %c0_2] : memref<16x128xf32, #tpu.memory_space<vmem>>, vector<16x128xf32>
    %c8 = arith.constant 8 : index
    %c0_3 = arith.constant 0 : index
    %4 = vector.load %arg6[%c8, %c0_3] : memref<32x128xf32, #tpu.memory_space<vmem>>, vector<16x128xf32>
    tpu.vector_store %arg6[%c8, %c0_3], %3 {strides = array<i32>} : memref<32x128xf32, #tpu.memory_space<vmem>>, vector<16x128xf32>,
    %c0_4 = arith.constant 0 : index
    %c0_5 = arith.constant 0 : index
    %5 = vector.load %arg4[%c0_4, %c0_5] : memref<1x128xf32, #tpu.memory_space<vmem>>, vector<1x128xf32>
    %c7_6 = arith.constant 7 : index
    %c0_7 = arith.constant 0 : index
    %6 = vector.load %arg6[%c7_6, %c0_7] : memref<32x128xf32, #tpu.memory_space<vmem>>, vector<16x128xf32>
    %c0_8 = arith.constant 0 : index
    %c0_9 = arith.constant 0 : index
    %c0_10 = arith.constant 0 : index
    %7 = vector.load %arg2[%c0_8, %c0_9, %c0_10] : memref<3x128x128xf32, #tpu.memory_space<vmem>>, vector<1x128x128xf32>
    %8 = vector.shape_cast %7 : vector<1x128x128xf32> to vector<128x128xf32>
    %cst_11 = arith.constant dense<0.000000e+00> : vector<16x128xf32>
    %9 = tpu.matmul %6, %8, %cst_11 {dimension_numbers = #tpu.dot_dimension_numbers<[1], [0], [0], [1], [0, 0, 1, 1], [], []>} : vector<16x128xf32>, vector<128x128xf32>, vector<16x128xf32> -> vector<16x128xf32>
    %c8_12 = arith.constant 8 : index
    %c0_13 = arith.constant 0 : index
    %10 = vector.load %arg6[%c8_12, %c0_13] : memref<32x128xf32, #tpu.memory_space<vmem>>, vector<16x128xf32>
    %c1 = arith.constant 1 : index
    %c0_14 = arith.constant 0 : index
    %c0_15 = arith.constant 0 : index
    %11 = vector.load %arg2[%c1, %c0_14, %c0_15] : memref<3x128x128xf32, #tpu.memory_space<vmem>>, vector<1x128x128xf32>
    %12 = vector.shape_cast %11 : vector<1x128x128xf32> to vector<128x128xf32>
    %cst_16 = arith.constant dense<0.000000e+00> : vector<16x128xf32>
    %13 = tpu.matmul %10, %12, %cst_16 {dimension_numbers = #tpu.dot_dimension_numbers<[1], [0], [0], [1], [0, 0, 1, 1], [], []>} : vector<16x128xf32>, vector<128x128xf32>, vector<16x128xf32> -> vector<16x128xf32>
    %14 = arith.addf %9, %13 : vector<16x128xf32>
    %c9 = arith.constant 9 : index
    %c0_17 = arith.constant 0 : index
    %15 = vector.load %arg6[%c9, %c0_17] : memref<32x128xf32, #tpu.memory_space<vmem>>, vector<16x128xf32>
    %c2 = arith.constant 2 : index
    %c0_18 = arith.constant 0 : index
    %c0_19 = arith.constant 0 : index
    %16 = vector.load %arg2[%c2, %c0_18, %c0_19] : memref<3x128x128xf32, #tpu.memory_space<vmem>>, vector<1x128x128xf32>
    %17 = vector.shape_cast %16 : vector<1x128x128xf32> to vector<128x128xf32>
    %cst_20 = arith.constant dense<0.000000e+00> : vector<16x128xf32>
    %18 = tpu.matmul %15, %17, %cst_20 {dimension_numbers = #tpu.dot_dimension_numbers<[1], [0], [0], [1], [0, 0, 1, 1], [], []>} : vector<16x128xf32>, vector<128x128xf32>, vector<16x128xf32> -> vector<16x128xf32>
    %19 = arith.addf %14, %18 : vector<16x128xf32>
    %c0_21 = arith.constant 0 : index
    %c0_22 = arith.constant 0 : index
    %20 = vector.load %arg3[%c0_21, %c0_22] : memref<1x128xf32, #tpu.memory_space<vmem>>, vector<1x128xf32>
    %21 = vector.broadcast %20 : vector<1x128xf32> to vector<16x128xf32>
    %22 = arith.addf %19, %21 : vector<16x128xf32>
    %23 = arith.negf %22 : vector<16x128xf32>
    %24 = math.exp %23 : vector<16x128xf32>
    %cst_23 = arith.constant 1.000000e+00 : f32
    %25 = vector.broadcast %cst_23 : f32 to vector<16x128xf32>
    %26 = arith.addf %25, %24 : vector<16x128xf32>
    %27 = arith.divf %25, %26 : vector<16x128xf32>
    %28 = vector.broadcast %5 : vector<1x128xf32> to vector<16x128xf32>
    %29 = arith.mulf %28, %27 : vector<16x128xf32>
    %cst_24 = arith.constant 1.000000e+00 : f32
    %30 = vector.broadcast %cst_24 : f32 to vector<1x128xf32>
    %31 = arith.subf %30, %5 : vector<1x128xf32>
    %32 = vector.broadcast %31 : vector<1x128xf32> to vector<16x128xf32>
    %33 = arith.addf %29, %32 : vector<16x128xf32>
    %34 = arith.mulf %22, %33 : vector<16x128xf32>
    %c0_25 = arith.constant 0 : index
    %c0_26 = arith.constant 0 : index
    %35 = vector.load %arg5[%c0_25, %c0_26] : memref<16x128xf32, #tpu.memory_space<vmem>>, vector<16x128xf32>
    tpu.vector_store %arg5[%c0_25, %c0_26], %34 {strides = array<i32>} : memref<16x128xf32, #tpu.memory_space<vmem>>, vector<16x128xf32>,
    return
  }
  func.func @transform_0(%arg0: i32) -> (i32, i32) {
    %c0_i32 = arith.constant 0 : i32
    %c0_i32_0 = arith.constant 0 : i32
    return %arg0, %c0_i32 : i32, i32
  }
  func.func @transform_1(%arg0: i32) -> (i32, i32, i32) {
    %c0_i32 = arith.constant 0 : i32
    %c0_i32_0 = arith.constant 0 : i32
    %c0_i32_1 = arith.constant 0 : i32
    %c0_i32_2 = arith.constant 0 : i32
    return %c0_i32, %c0_i32_0, %c0_i32_1 : i32, i32, i32
  }
  func.func @transform_2(%arg0: i32) -> (i32, i32) {
    %c0_i32 = arith.constant 0 : i32
    %c0_i32_0 = arith.constant 0 : i32
    %c0_i32_1 = arith.constant 0 : i32
    return %c0_i32, %c0_i32_0 : i32, i32
  }
  func.func @transform_3(%arg0: i32) -> (i32, i32) {
    %c0_i32 = arith.constant 0 : i32
    %c0_i32_0 = arith.constant 0 : i32
    %c0_i32_1 = arith.constant 0 : i32
    return %c0_i32, %c0_i32_0 : i32, i32
  }
  func.func @transform_4(%arg0: i32) -> (i32, i32) {
    %c0_i32 = arith.constant 0 : i32
    %c0_i32_0 = arith.constant 0 : i32
    return %arg0, %c0_i32 : i32, i32
  }
}

module attributes {stable_mosaic.version = 11 : i64} {
  func.func @kernel(%arg0: i32, %arg1: memref<16x128xf32, #tpu.memory_space<vmem>>, %arg2: memref<16x128xf32, #tpu.memory_space<vmem>>, %arg3: memref<16x128xf32, #tpu.memory_space<vmem>>, %arg4: memref<3x128x256xf32, #tpu.memory_space<vmem>>, %arg5: memref<3x128x256xf32, #tpu.memory_space<vmem>>, %arg6: memref<3x128x256xf32, #tpu.memory_space<vmem>>, %arg7: memref<1x256xf32, #tpu.memory_space<vmem>>, %arg8: memref<256x16xf32, #tpu.memory_space<vmem>>, %arg9: memref<16x256xf32, #tpu.memory_space<vmem>>, %arg10: memref<16x8xf32, #tpu.memory_space<vmem>>, %arg11: memref<1x8xf32, #tpu.memory_space<vmem>>, %arg12: memref<8x16xf32, #tpu.memory_space<vmem>>, %arg13: memref<1x16xf32, #tpu.memory_space<vmem>>, %arg14: memref<16x256xf32, #tpu.memory_space<vmem>>, %arg15: memref<32x384xf32, #tpu.memory_space<vmem>>) attributes {dimension_semantics = [#tpu.dimension_semantics<parallel>], iteration_bounds = array<i64: 2>, scalar_prefetch = 0 : i64, scratch_operands = 1 : i64, tpu.core_type = #tpu.core_type<tc>, window_params = [{transform_indices = @transform_0, window_bounds = array<i64: 16, 128>}, {transform_indices = @transform_1, window_bounds = array<i64: 16, 128>}, {transform_indices = @transform_2, window_bounds = array<i64: 16, 128>}, {pipeline_mode = #tpu.pipeline_mode<synchronous>, transform_indices = @transform_3, window_bounds = array<i64: 3, 128, 256>}, {pipeline_mode = #tpu.pipeline_mode<synchronous>, transform_indices = @transform_4, window_bounds = array<i64: 3, 128, 256>}, {pipeline_mode = #tpu.pipeline_mode<synchronous>, transform_indices = @transform_5, window_bounds = array<i64: 3, 128, 256>}, {pipeline_mode = #tpu.pipeline_mode<synchronous>, transform_indices = @transform_6, window_bounds = array<i64: 1, 256>}, {pipeline_mode = #tpu.pipeline_mode<synchronous>, transform_indices = @transform_7, window_bounds = array<i64: 256, 16>}, {pipeline_mode = #tpu.pipeline_mode<synchronous>, transform_indices = @transform_8, window_bounds = array<i64: 16, 256>}, {pipeline_mode = #tpu.pipeline_mode<synchronous>, transform_indices = @transform_9, window_bounds = array<i64: 16, 8>}, {pipeline_mode = #tpu.pipeline_mode<synchronous>, transform_indices = @transform_10, window_bounds = array<i64: 1, 8>}, {pipeline_mode = #tpu.pipeline_mode<synchronous>, transform_indices = @transform_11, window_bounds = array<i64: 8, 16>}, {pipeline_mode = #tpu.pipeline_mode<synchronous>, transform_indices = @transform_12, window_bounds = array<i64: 1, 16>}, {transform_indices = @transform_13, window_bounds = array<i64: 16, 256>}]} {
    %cst = arith.constant 0.000000e+00 : f32
    %0 = vector.broadcast %cst : f32 to vector<1x384xf32>
    %c7 = arith.constant 7 : index
    %c0 = arith.constant 0 : index
    %1 = vector.load %arg15[%c7, %c0] : memref<32x384xf32, #tpu.memory_space<vmem>>, vector<1x384xf32>
    tpu.vector_store %arg15[%c7, %c0], %0 {strides = array<i32>} : memref<32x384xf32, #tpu.memory_space<vmem>>, vector<1x384xf32>,
    %c24 = arith.constant 24 : index
    %c0_0 = arith.constant 0 : index
    %2 = vector.load %arg15[%c24, %c0_0] : memref<32x384xf32, #tpu.memory_space<vmem>>, vector<1x384xf32>
    tpu.vector_store %arg15[%c24, %c0_0], %0 {strides = array<i32>} : memref<32x384xf32, #tpu.memory_space<vmem>>, vector<1x384xf32>,
    %c0_1 = arith.constant 0 : index
    %c0_2 = arith.constant 0 : index
    %3 = vector.load %arg1[%c0_1, %c0_2] : memref<16x128xf32, #tpu.memory_space<vmem>>, vector<16x128xf32>
    %c8 = arith.constant 8 : index
    %c0_3 = arith.constant 0 : index
    %4 = vector.load %arg15[%c8, %c0_3] : memref<32x384xf32, #tpu.memory_space<vmem>>, vector<16x128xf32>
    tpu.vector_store %arg15[%c8, %c0_3], %3 {strides = array<i32>} : memref<32x384xf32, #tpu.memory_space<vmem>>, vector<16x128xf32>,
    %c0_4 = arith.constant 0 : index
    %c0_5 = arith.constant 0 : index
    %5 = vector.load %arg2[%c0_4, %c0_5] : memref<16x128xf32, #tpu.memory_space<vmem>>, vector<16x128xf32>
    %c8_6 = arith.constant 8 : index
    %c128 = arith.constant 128 : index
    %6 = vector.load %arg15[%c8_6, %c128] : memref<32x384xf32, #tpu.memory_space<vmem>>, vector<16x128xf32>
    tpu.vector_store %arg15[%c8_6, %c128], %5 {strides = array<i32>} : memref<32x384xf32, #tpu.memory_space<vmem>>, vector<16x128xf32>,
    %c0_7 = arith.constant 0 : index
    %c0_8 = arith.constant 0 : index
    %7 = vector.load %arg3[%c0_7, %c0_8] : memref<16x128xf32, #tpu.memory_space<vmem>>, vector<16x128xf32>
    %c8_9 = arith.constant 8 : index
    %c256 = arith.constant 256 : index
    %8 = vector.load %arg15[%c8_9, %c256] : memref<32x384xf32, #tpu.memory_space<vmem>>, vector<16x128xf32>
    tpu.vector_store %arg15[%c8_9, %c256], %7 {strides = array<i32>} : memref<32x384xf32, #tpu.memory_space<vmem>>, vector<16x128xf32>,
    %c7_10 = arith.constant 7 : index
    %c0_11 = arith.constant 0 : index
    %9 = vector.load %arg15[%c7_10, %c0_11] : memref<32x384xf32, #tpu.memory_space<vmem>>, vector<16x128xf32>
    %c0_12 = arith.constant 0 : index
    %c0_13 = arith.constant 0 : index
    %c0_14 = arith.constant 0 : index
    %10 = vector.load %arg4[%c0_12, %c0_13, %c0_14] : memref<3x128x256xf32, #tpu.memory_space<vmem>>, vector<1x128x256xf32>
    %11 = vector.shape_cast %10 : vector<1x128x256xf32> to vector<128x256xf32>
    %cst_15 = arith.constant dense<0.000000e+00> : vector<16x256xf32>
    %12 = tpu.matmul %9, %11, %cst_15 {dimension_numbers = #tpu.dot_dimension_numbers<[1], [0], [0], [1], [0, 0, 1, 1], [], []>} : vector<16x128xf32>, vector<128x256xf32>, vector<16x256xf32> -> vector<16x256xf32>
    %c8_16 = arith.constant 8 : index
    %c0_17 = arith.constant 0 : index
    %13 = vector.load %arg15[%c8_16, %c0_17] : memref<32x384xf32, #tpu.memory_space<vmem>>, vector<16x128xf32>
    %c1 = arith.constant 1 : index
    %c0_18 = arith.constant 0 : index
    %c0_19 = arith.constant 0 : index
    %14 = vector.load %arg4[%c1, %c0_18, %c0_19] : memref<3x128x256xf32, #tpu.memory_space<vmem>>, vector<1x128x256xf32>
    %15 = vector.shape_cast %14 : vector<1x128x256xf32> to vector<128x256xf32>
    %cst_20 = arith.constant dense<0.000000e+00> : vector<16x256xf32>
    %16 = tpu.matmul %13, %15, %cst_20 {dimension_numbers = #tpu.dot_dimension_numbers<[1], [0], [0], [1], [0, 0, 1, 1], [], []>} : vector<16x128xf32>, vector<128x256xf32>, vector<16x256xf32> -> vector<16x256xf32>
    %17 = arith.addf %12, %16 : vector<16x256xf32>
    %c9 = arith.constant 9 : index
    %c0_21 = arith.constant 0 : index
    %18 = vector.load %arg15[%c9, %c0_21] : memref<32x384xf32, #tpu.memory_space<vmem>>, vector<16x128xf32>
    %c2 = arith.constant 2 : index
    %c0_22 = arith.constant 0 : index
    %c0_23 = arith.constant 0 : index
    %19 = vector.load %arg4[%c2, %c0_22, %c0_23] : memref<3x128x256xf32, #tpu.memory_space<vmem>>, vector<1x128x256xf32>
    %20 = vector.shape_cast %19 : vector<1x128x256xf32> to vector<128x256xf32>
    %cst_24 = arith.constant dense<0.000000e+00> : vector<16x256xf32>
    %21 = tpu.matmul %18, %20, %cst_24 {dimension_numbers = #tpu.dot_dimension_numbers<[1], [0], [0], [1], [0, 0, 1, 1], [], []>} : vector<16x128xf32>, vector<128x256xf32>, vector<16x256xf32> -> vector<16x256xf32>
    %22 = arith.addf %17, %21 : vector<16x256xf32>
    %c7_25 = arith.constant 7 : index
    %c128_26 = arith.constant 128 : index
    %23 = vector.load %arg15[%c7_25, %c128_26] : memref<32x384xf32, #tpu.memory_space<vmem>>, vector<16x128xf32>
    %c0_27 = arith.constant 0 : index
    %c0_28 = arith.constant 0 : index
    %c0_29 = arith.constant 0 : index
    %24 = vector.load %arg5[%c0_27, %c0_28, %c0_29] : memref<3x128x256xf32, #tpu.memory_space<vmem>>, vector<1x128x256xf32>
    %25 = vector.shape_cast %24 : vector<1x128x256xf32> to vector<128x256xf32>
    %cst_30 = arith.constant dense<0.000000e+00> : vector<16x256xf32>
    %26 = tpu.matmul %23, %25, %cst_30 {dimension_numbers = #tpu.dot_dimension_numbers<[1], [0], [0], [1], [0, 0, 1, 1], [], []>} : vector<16x128xf32>, vector<128x256xf32>, vector<16x256xf32> -> vector<16x256xf32>
    %27 = arith.addf %22, %26 : vector<16x256xf32>
    %c8_31 = arith.constant 8 : index
    %c128_32 = arith.constant 128 : index
    %28 = vector.load %arg15[%c8_31, %c128_32] : memref<32x384xf32, #tpu.memory_space<vmem>>, vector<16x128xf32>
    %c1_33 = arith.constant 1 : index
    %c0_34 = arith.constant 0 : index
    %c0_35 = arith.constant 0 : index
    %29 = vector.load %arg5[%c1_33, %c0_34, %c0_35] : memref<3x128x256xf32, #tpu.memory_space<vmem>>, vector<1x128x256xf32>
    %30 = vector.shape_cast %29 : vector<1x128x256xf32> to vector<128x256xf32>
    %cst_36 = arith.constant dense<0.000000e+00> : vector<16x256xf32>
    %31 = tpu.matmul %28, %30, %cst_36 {dimension_numbers = #tpu.dot_dimension_numbers<[1], [0], [0], [1], [0, 0, 1, 1], [], []>} : vector<16x128xf32>, vector<128x256xf32>, vector<16x256xf32> -> vector<16x256xf32>
    %32 = arith.addf %27, %31 : vector<16x256xf32>
    %c9_37 = arith.constant 9 : index
    %c128_38 = arith.constant 128 : index
    %33 = vector.load %arg15[%c9_37, %c128_38] : memref<32x384xf32, #tpu.memory_space<vmem>>, vector<16x128xf32>
    %c2_39 = arith.constant 2 : index
    %c0_40 = arith.constant 0 : index
    %c0_41 = arith.constant 0 : index
    %34 = vector.load %arg5[%c2_39, %c0_40, %c0_41] : memref<3x128x256xf32, #tpu.memory_space<vmem>>, vector<1x128x256xf32>
    %35 = vector.shape_cast %34 : vector<1x128x256xf32> to vector<128x256xf32>
    %cst_42 = arith.constant dense<0.000000e+00> : vector<16x256xf32>
    %36 = tpu.matmul %33, %35, %cst_42 {dimension_numbers = #tpu.dot_dimension_numbers<[1], [0], [0], [1], [0, 0, 1, 1], [], []>} : vector<16x128xf32>, vector<128x256xf32>, vector<16x256xf32> -> vector<16x256xf32>
    %37 = arith.addf %32, %36 : vector<16x256xf32>
    %c7_43 = arith.constant 7 : index
    %c256_44 = arith.constant 256 : index
    %38 = vector.load %arg15[%c7_43, %c256_44] : memref<32x384xf32, #tpu.memory_space<vmem>>, vector<16x128xf32>
    %c0_45 = arith.constant 0 : index
    %c0_46 = arith.constant 0 : index
    %c0_47 = arith.constant 0 : index
    %39 = vector.load %arg6[%c0_45, %c0_46, %c0_47] : memref<3x128x256xf32, #tpu.memory_space<vmem>>, vector<1x128x256xf32>
    %40 = vector.shape_cast %39 : vector<1x128x256xf32> to vector<128x256xf32>
    %cst_48 = arith.constant dense<0.000000e+00> : vector<16x256xf32>
    %41 = tpu.matmul %38, %40, %cst_48 {dimension_numbers = #tpu.dot_dimension_numbers<[1], [0], [0], [1], [0, 0, 1, 1], [], []>} : vector<16x128xf32>, vector<128x256xf32>, vector<16x256xf32> -> vector<16x256xf32>
    %42 = arith.addf %37, %41 : vector<16x256xf32>
    %c8_49 = arith.constant 8 : index
    %c256_50 = arith.constant 256 : index
    %43 = vector.load %arg15[%c8_49, %c256_50] : memref<32x384xf32, #tpu.memory_space<vmem>>, vector<16x128xf32>
    %c1_51 = arith.constant 1 : index
    %c0_52 = arith.constant 0 : index
    %c0_53 = arith.constant 0 : index
    %44 = vector.load %arg6[%c1_51, %c0_52, %c0_53] : memref<3x128x256xf32, #tpu.memory_space<vmem>>, vector<1x128x256xf32>
    %45 = vector.shape_cast %44 : vector<1x128x256xf32> to vector<128x256xf32>
    %cst_54 = arith.constant dense<0.000000e+00> : vector<16x256xf32>
    %46 = tpu.matmul %43, %45, %cst_54 {dimension_numbers = #tpu.dot_dimension_numbers<[1], [0], [0], [1], [0, 0, 1, 1], [], []>} : vector<16x128xf32>, vector<128x256xf32>, vector<16x256xf32> -> vector<16x256xf32>
    %47 = arith.addf %42, %46 : vector<16x256xf32>
    %c9_55 = arith.constant 9 : index
    %c256_56 = arith.constant 256 : index
    %48 = vector.load %arg15[%c9_55, %c256_56] : memref<32x384xf32, #tpu.memory_space<vmem>>, vector<16x128xf32>
    %c2_57 = arith.constant 2 : index
    %c0_58 = arith.constant 0 : index
    %c0_59 = arith.constant 0 : index
    %49 = vector.load %arg6[%c2_57, %c0_58, %c0_59] : memref<3x128x256xf32, #tpu.memory_space<vmem>>, vector<1x128x256xf32>
    %50 = vector.shape_cast %49 : vector<1x128x256xf32> to vector<128x256xf32>
    %cst_60 = arith.constant dense<0.000000e+00> : vector<16x256xf32>
    %51 = tpu.matmul %48, %50, %cst_60 {dimension_numbers = #tpu.dot_dimension_numbers<[1], [0], [0], [1], [0, 0, 1, 1], [], []>} : vector<16x128xf32>, vector<128x256xf32>, vector<16x256xf32> -> vector<16x256xf32>
    %52 = arith.addf %47, %51 : vector<16x256xf32>
    %c0_61 = arith.constant 0 : index
    %c0_62 = arith.constant 0 : index
    %53 = vector.load %arg7[%c0_61, %c0_62] : memref<1x256xf32, #tpu.memory_space<vmem>>, vector<1x256xf32>
    %54 = vector.broadcast %53 : vector<1x256xf32> to vector<16x256xf32>
    %55 = arith.addf %52, %54 : vector<16x256xf32>
    %56 = arith.negf %55 : vector<16x256xf32>
    %57 = math.exp %56 : vector<16x256xf32>
    %cst_63 = arith.constant 1.000000e+00 : f32
    %58 = vector.broadcast %cst_63 : f32 to vector<16x256xf32>
    %59 = arith.addf %58, %57 : vector<16x256xf32>
    %60 = arith.divf %58, %59 : vector<16x256xf32>
    %61 = arith.mulf %55, %60 : vector<16x256xf32>
    %cst_64 = arith.constant dense<0.000000e+00> : vector<256xf32>
    %62 = vector.multi_reduction <add>, %61, %cst_64 [0] : vector<16x256xf32> to vector<256xf32>
    %63 = vector.shape_cast %62 : vector<256xf32> to vector<1x256xf32>
    %c0_65 = arith.constant 0 : index
    %c0_66 = arith.constant 0 : index
    %64 = vector.load %arg8[%c0_65, %c0_66] : memref<256x16xf32, #tpu.memory_space<vmem>>, vector<256x16xf32>
    %cst_67 = arith.constant dense<0.000000e+00> : vector<1x16xf32>
    %65 = tpu.matmul %63, %64, %cst_67 {dimension_numbers = #tpu.dot_dimension_numbers<[1], [0], [0], [1], [0, 0, 1, 1], [], []>} : vector<1x256xf32>, vector<256x16xf32>, vector<1x16xf32> -> vector<1x16xf32>
    %c0_68 = arith.constant 0 : index
    %c0_69 = arith.constant 0 : index
    %66 = vector.load %arg10[%c0_68, %c0_69] : memref<16x8xf32, #tpu.memory_space<vmem>>, vector<16x8xf32>
    %cst_70 = arith.constant dense<0.000000e+00> : vector<1x8xf32>
    %67 = tpu.matmul %65, %66, %cst_70 {dimension_numbers = #tpu.dot_dimension_numbers<[1], [0], [0], [1], [0, 0, 1, 1], [], []>} : vector<1x16xf32>, vector<16x8xf32>, vector<1x8xf32> -> vector<1x8xf32>
    %c0_71 = arith.constant 0 : index
    %c0_72 = arith.constant 0 : index
    %68 = vector.load %arg11[%c0_71, %c0_72] : memref<1x8xf32, #tpu.memory_space<vmem>>, vector<1x8xf32>
    %69 = arith.addf %67, %68 : vector<1x8xf32>
    %70 = arith.negf %69 : vector<1x8xf32>
    %71 = math.exp %70 : vector<1x8xf32>
    %cst_73 = arith.constant 1.000000e+00 : f32
    %72 = vector.broadcast %cst_73 : f32 to vector<1x8xf32>
    %73 = arith.addf %72, %71 : vector<1x8xf32>
    %74 = arith.divf %72, %73 : vector<1x8xf32>
    %75 = arith.mulf %69, %74 : vector<1x8xf32>
    %c0_74 = arith.constant 0 : index
    %c0_75 = arith.constant 0 : index
    %76 = vector.load %arg12[%c0_74, %c0_75] : memref<8x16xf32, #tpu.memory_space<vmem>>, vector<8x16xf32>
    %cst_76 = arith.constant dense<0.000000e+00> : vector<1x16xf32>
    %77 = tpu.matmul %75, %76, %cst_76 {dimension_numbers = #tpu.dot_dimension_numbers<[1], [0], [0], [1], [0, 0, 1, 1], [], []>} : vector<1x8xf32>, vector<8x16xf32>, vector<1x16xf32> -> vector<1x16xf32>
    %c0_77 = arith.constant 0 : index
    %c0_78 = arith.constant 0 : index
    %78 = vector.load %arg13[%c0_77, %c0_78] : memref<1x16xf32, #tpu.memory_space<vmem>>, vector<1x16xf32>
    %79 = arith.addf %77, %78 : vector<1x16xf32>
    %80 = arith.negf %79 : vector<1x16xf32>
    %81 = math.exp %80 : vector<1x16xf32>
    %cst_79 = arith.constant 1.000000e+00 : f32
    %82 = vector.broadcast %cst_79 : f32 to vector<1x16xf32>
    %83 = arith.addf %82, %81 : vector<1x16xf32>
    %84 = arith.divf %82, %83 : vector<1x16xf32>
    %c0_80 = arith.constant 0 : index
    %c0_81 = arith.constant 0 : index
    %85 = vector.load %arg9[%c0_80, %c0_81] : memref<16x256xf32, #tpu.memory_space<vmem>>, vector<16x256xf32>
    %cst_82 = arith.constant dense<0.000000e+00> : vector<1x256xf32>
    %86 = tpu.matmul %84, %85, %cst_82 {dimension_numbers = #tpu.dot_dimension_numbers<[1], [0], [0], [1], [0, 0, 1, 1], [], []>} : vector<1x16xf32>, vector<16x256xf32>, vector<1x256xf32> -> vector<1x256xf32>
    %87 = vector.broadcast %86 : vector<1x256xf32> to vector<16x256xf32>
    %88 = arith.mulf %61, %87 : vector<16x256xf32>
    %c0_83 = arith.constant 0 : index
    %c0_84 = arith.constant 0 : index
    %89 = vector.load %arg14[%c0_83, %c0_84] : memref<16x256xf32, #tpu.memory_space<vmem>>, vector<16x256xf32>
    tpu.vector_store %arg14[%c0_83, %c0_84], %88 {strides = array<i32>} : memref<16x256xf32, #tpu.memory_space<vmem>>, vector<16x256xf32>,
    return
  }
  func.func @transform_0(%arg0: i32) -> (i32, i32) {
    %c0_i32 = arith.constant 0 : i32
    %c0_i32_0 = arith.constant 0 : i32
    return %arg0, %c0_i32 : i32, i32
  }
  func.func @transform_1(%arg0: i32) -> (i32, i32) {
    %c0_i32 = arith.constant 0 : i32
    %c0_i32_0 = arith.constant 0 : i32
    return %arg0, %c0_i32 : i32, i32
  }
  func.func @transform_2(%arg0: i32) -> (i32, i32) {
    %c0_i32 = arith.constant 0 : i32
    %c0_i32_0 = arith.constant 0 : i32
    return %arg0, %c0_i32 : i32, i32
  }
  func.func @transform_3(%arg0: i32) -> (i32, i32, i32) {
    %c0_i32 = arith.constant 0 : i32
    %c0_i32_0 = arith.constant 0 : i32
    %c0_i32_1 = arith.constant 0 : i32
    %c0_i32_2 = arith.constant 0 : i32
    return %c0_i32, %c0_i32_0, %c0_i32_1 : i32, i32, i32
  }
  func.func @transform_4(%arg0: i32) -> (i32, i32, i32) {
    %c0_i32 = arith.constant 0 : i32
    %c0_i32_0 = arith.constant 0 : i32
    %c0_i32_1 = arith.constant 0 : i32
    %c0_i32_2 = arith.constant 0 : i32
    return %c0_i32, %c0_i32_0, %c0_i32_1 : i32, i32, i32
  }
  func.func @transform_5(%arg0: i32) -> (i32, i32, i32) {
    %c0_i32 = arith.constant 0 : i32
    %c0_i32_0 = arith.constant 0 : i32
    %c0_i32_1 = arith.constant 0 : i32
    %c0_i32_2 = arith.constant 0 : i32
    return %c0_i32, %c0_i32_0, %c0_i32_1 : i32, i32, i32
  }
  func.func @transform_6(%arg0: i32) -> (i32, i32) {
    %c0_i32 = arith.constant 0 : i32
    %c0_i32_0 = arith.constant 0 : i32
    %c0_i32_1 = arith.constant 0 : i32
    return %c0_i32, %c0_i32_0 : i32, i32
  }
  func.func @transform_7(%arg0: i32) -> (i32, i32) {
    %c0_i32 = arith.constant 0 : i32
    %c0_i32_0 = arith.constant 0 : i32
    %c0_i32_1 = arith.constant 0 : i32
    return %c0_i32, %c0_i32_0 : i32, i32
  }
  func.func @transform_8(%arg0: i32) -> (i32, i32) {
    %c0_i32 = arith.constant 0 : i32
    %c0_i32_0 = arith.constant 0 : i32
    %c0_i32_1 = arith.constant 0 : i32
    return %c0_i32, %c0_i32_0 : i32, i32
  }
  func.func @transform_9(%arg0: i32) -> (i32, i32) {
    %c0_i32 = arith.constant 0 : i32
    %c0_i32_0 = arith.constant 0 : i32
    %c0_i32_1 = arith.constant 0 : i32
    return %c0_i32, %c0_i32_0 : i32, i32
  }
  func.func @transform_10(%arg0: i32) -> (i32, i32) {
    %c0_i32 = arith.constant 0 : i32
    %c0_i32_0 = arith.constant 0 : i32
    %c0_i32_1 = arith.constant 0 : i32
    return %c0_i32, %c0_i32_0 : i32, i32
  }
  func.func @transform_11(%arg0: i32) -> (i32, i32) {
    %c0_i32 = arith.constant 0 : i32
    %c0_i32_0 = arith.constant 0 : i32
    %c0_i32_1 = arith.constant 0 : i32
    return %c0_i32, %c0_i32_0 : i32, i32
  }
  func.func @transform_12(%arg0: i32) -> (i32, i32) {
    %c0_i32 = arith.constant 0 : i32
    %c0_i32_0 = arith.constant 0 : i32
    %c0_i32_1 = arith.constant 0 : i32
    return %c0_i32, %c0_i32_0 : i32, i32
  }
  func.func @transform_13(%arg0: i32) -> (i32, i32) {
    %c0_i32 = arith.constant 0 : i32
    %c0_i32_0 = arith.constant 0 : i32
    return %arg0, %c0_i32 : i32, i32
  }
}

</mosaic_0001>

<llo_original>
// kernel: rcsosa_forward.5
$region0: #{rcsosa_forward.5}
  #allocation0 [shape = 'u32[]', space=smem, size = 0x4, offset = 0x4, fixed_abs, tag = 'smem constant byte address 0x4 - core index']
  #allocation1 [shape = 'u32[144,128]{1,0:T(1,128)}', space=vmem, size = 0x12000, scoped, tag = 'internal scratch']
  #allocation2 [shape = 'f32[32,128]{1,0:T(8,128)}', space=vmem, size = 0x4000, scoped, tag = 'scratch operand']
  %s0 = inlined_call_operand.vmem [shape: f32[32,128], index: 0, kind: input, shape index: {}]
  %s1 = inlined_call_operand.vmem [shape: f32[3,128,128], index: 1, kind: input, shape index: {}]
  %s2 = inlined_call_operand.vmem [shape: f32[1,128], index: 2, kind: input, shape index: {}]
  %s3 = inlined_call_operand.vmem [shape: f32[1,128], index: 3, kind: input, shape index: {}]
  %s4 = inlined_call_operand.vmem [shape: f32[32,128], index: 4, kind: output, shape index: {}]
  %s5 = sld [smem:[#allocation0]]
  $region49: #{rcsosa_forward.5} parent=0
    _
  %s7 = ssub.s32 1, %s5
  %s8 = scalar_select 0, %s7, %s5
  loop: start=0, step=1, limit=4
  $region2: #{rcsosa_forward.5} parent=0 // loop_pre_header
    _
  $region3: #{rcsosa_forward.5} parent=0 // loop_header
    %s10 = sphi 0, %s14
    %p11 = scmp.ge.s32.totalorder %s10, 4
    %s20 = sphi 0, %s22
    %s23 = sphi 0, %s20
    %s24 = sphi 0, %s23
    %s40 = sphi 0, %s24
    %s44 = sphi 0, %s44
    %s46 = sphi 0, %s44
    %s47 = sphi 0, %s46
    %s61 = sphi 0, %s47
    %s65 = sphi 0, %s65
    %s67 = sphi 0, %s65
    %s68 = sphi 0, %s67
    %s82 = sphi 0, %s68
    %s86 = sphi 0, %s86
    %s88 = sphi 0, %s86
    %s89 = sphi 0, %s88
    %s103 = sphi 0, %s89
    %s109 = sphi 0, %s111
    %s112 = sphi 0, %s109
    %s113 = sphi 0, %s112
    %s129 = sphi 0, %s113
  $region4: #{rcsosa_forward.5} parent=0 // loop_header_branch
    %13 = sbr.rel (%p11) target = $region8
  $region5: #{rcsosa_forward.5} parent=0 // loop_body
    %s15 = ssub.s32 %s10, 1
    %s16 = ssub.s32 %s10, 2
    %s17 = sadd.s32 %s10, 1
    %s18 = ssub.s32 %s10, %s17
    %p19 = scmp.eq.s32.totalorder %s18, 0
    %s21 = sadd.s32 %s20, 1
    %s22 = scalar_select %p19, %s20, %s21
    %p25 = pneg %p19
    %p26 = scmp.eq.s32.totalorder %s10, 1
    %p27 = por %p25, %p26
    %p28 = scmp.ne.s32.totalorder %s20, %s23
    %p29 = scmp.eq.s32.totalorder %s10, 0
    %p30 = por %p28, %p29
    %p31 = scmp.ne.s32.totalorder %s20, %s23
    %p32 = scmp.eq.s32.totalorder %s15, 1
    %p33 = por %p31, %p32
    %p34 = scmp.ne.s32.totalorder %s23, %s24
    %p35 = scmp.eq.s32.totalorder %s15, 0
    %p36 = por %p34, %p35
    %p37 = scmp.ne.s32.totalorder %s23, %s24
    %p38 = scmp.eq.s32.totalorder %s16, 1
    %p39 = por %p37, %p38
    %p41 = scmp.ne.s32.totalorder %s24, %s40
    %p42 = scmp.eq.s32.totalorder %s16, 0
    %p43 = por %p41, %p42
    %s45 = sadd.s32 %s44, 1
    %p48 = scmp.eq.s32.totalorder %s10, 1
    %p49 = scmp.ne.s32.totalorder %s44, %s46
    %p50 = scmp.eq.s32.totalorder %s10, 0
    %p51 = por %p49, %p50
    %p52 = scmp.ne.s32.totalorder %s44, %s46
    %p53 = scmp.eq.s32.totalorder %s15, 1
    %p54 = por %p52, %p53
    %p55 = scmp.ne.s32.totalorder %s46, %s47
    %p56 = scmp.eq.s32.totalorder %s15, 0
    %p57 = por %p55, %p56
    %p58 = scmp.ne.s32.totalorder %s46, %s47
    %p59 = scmp.eq.s32.totalorder %s16, 1
    %p60 = por %p58, %p59
    %p62 = scmp.ne.s32.totalorder %s47, %s61
    %p63 = scmp.eq.s32.totalorder %s16, 0
    %p64 = por %p62, %p63
    %s66 = sadd.s32 %s65, 1
    %p69 = scmp.eq.s32.totalorder %s10, 1
    %p70 = scmp.ne.s32.totalorder %s65, %s67
    %p71 = scmp.eq.s32.totalorder %s10, 0
    %p72 = por %p70, %p71
    %p73 = scmp.ne.s32.totalorder %s65, %s67
    %p74 = scmp.eq.s32.totalorder %s15, 1
    %p75 = por %p73, %p74
    %p76 = scmp.ne.s32.totalorder %s67, %s68
    %p77 = scmp.eq.s32.totalorder %s15, 0
    %p78 = por %p76, %p77
    %p79 = scmp.ne.s32.totalorder %s67, %s68
    %p80 = scmp.eq.s32.totalorder %s16, 1
    %p81 = por %p79, %p80
    %p83 = scmp.ne.s32.totalorder %s68, %s82
    %p84 = scmp.eq.s32.totalorder %s16, 0
    %p85 = por %p83, %p84
    %s87 = sadd.s32 %s86, 1
    %p90 = scmp.eq.s32.totalorder %s10, 1
    %p91 = scmp.ne.s32.totalorder %s86, %s88
    %p92 = scmp.eq.s32.totalorder %s10, 0
    %p93 = por %p91, %p92
    %p94 = scmp.ne.s32.totalorder %s86, %s88
    %p95 = scmp.eq.s32.totalorder %s15, 1
    %p96 = por %p94, %p95
    %p97 = scmp.ne.s32.totalorder %s88, %s89
    %p98 = scmp.eq.s32.totalorder %s15, 0
    %p99 = por %p97, %p98
    %p100 = scmp.ne.s32.totalorder %s88, %s89
    %p101 = scmp.eq.s32.totalorder %s16, 1
    %p102 = por %p100, %p101
    %p104 = scmp.ne.s32.totalorder %s89, %s103
    %p105 = scmp.eq.s32.totalorder %s16, 0
    %p106 = por %p104, %p105
    %s107 = ssub.s32 %s10, %s17
    %p108 = scmp.eq.s32.totalorder %s107, 0
    %s110 = sadd.s32 %s109, 1
    %s111 = scalar_select %p108, %s109, %s110
    %p114 = pneg %p108
    %p115 = scmp.eq.s32.totalorder %s10, 1
    %p116 = por %p114, %p115
    %p117 = scmp.ne.s32.totalorder %s109, %s112
    %p118 = scmp.eq.s32.totalorder %s10, 0
    %p119 = por %p117, %p118
    %p120 = scmp.ne.s32.totalorder %s109, %s112
    %p121 = scmp.eq.s32.totalorder %s15, 1
    %p122 = por %p120, %p121
    %p123 = scmp.ne.s32.totalorder %s112, %s113
    %p124 = scmp.eq.s32.totalorder %s15, 0
    %p125 = por %p123, %p124
    %p126 = scmp.ne.s32.totalorder %s112, %s113
    %p127 = scmp.eq.s32.totalorder %s16, 1
    %p128 = por %p126, %p127
    %p130 = scmp.ne.s32.totalorder %s113, %s129
    %p131 = scmp.eq.s32.totalorder %s16, 0
    %p132 = por %p130, %p131
    %p133 = scmp.le.s32.totalorder 1, %s10
    %p134 = scmp.lt.s32.totalorder %s10, 3
    %p135 = pnand %p133, %p134
    %p136 = pneg %p135
    // Predicated region
    $region9: #{rcsosa_forward.5} parent=5 // pred_check
      _
    $region10: #{rcsosa_forward.5} parent=5 // pred_check_branch
      %138 = sbr.rel (%p135) target = $region12
    $region11: #{rcsosa_forward.5} parent=5 // pred_region
      %s139 = ssub.s32 %s10, 1
      // Predicated region
      $region13: #{rcsosa_forward.5} parent=11 // pred_check
        %p140 = pneg %p57
      $region14: #{rcsosa_forward.5} parent=11 // pred_check_branch
        %142 = sbr.rel (%p140) target = $region16
      $region15: #{rcsosa_forward.5} parent=11 // pred_region
        _
      $region16: #{rcsosa_forward.5} parent=11 // pred_fallthru
        _
      // Predicated region
      $region17: #{rcsosa_forward.5} parent=11 // pred_check
        %p143 = pneg %p78
      $region18: #{rcsosa_forward.5} parent=11 // pred_check_branch
        %145 = sbr.rel (%p143) target = $region20
      $region19: #{rcsosa_forward.5} parent=11 // pred_region
        _
      $region20: #{rcsosa_forward.5} parent=11 // pred_fallthru
        _
      // Predicated region
      $region21: #{rcsosa_forward.5} parent=11 // pred_check
        %p146 = pneg %p99
      $region22: #{rcsosa_forward.5} parent=11 // pred_check_branch
        %148 = sbr.rel (%p146) target = $region24
      $region23: #{rcsosa_forward.5} parent=11 // pred_region
        _
      $region24: #{rcsosa_forward.5} parent=11 // pred_fallthru
        _
    $region12: #{rcsosa_forward.5} parent=5 // pred_fallthru
      _
    %p149 = scmp.lt.s32.totalorder %s10, 2
    // Predicated region
    $region25: #{rcsosa_forward.5} parent=5 // pred_check
      %p150 = pneg %p149
    $region26: #{rcsosa_forward.5} parent=5 // pred_check_branch
      %152 = sbr.rel (%p150) target = $region28
    $region27: #{rcsosa_forward.5} parent=5 // pred_region
      // Predicated region
      $region29: #{rcsosa_forward.5} parent=27 // pred_check
        %p153 = pneg %p30
      $region30: #{rcsosa_forward.5} parent=27 // pred_check_branch
        %155 = sbr.rel (%p153) target = $region32
      $region31: #{rcsosa_forward.5} parent=27 // pred_region
        %s156 = smul.u32 2, %s10
        %p157 = scmp.lt.s32.totalorder %s156, 3
        %s158 = scalar_select %p157, %s156, 3
        %s159 = smul.addr %s158, 8
        %s160 = scalar_lea.vmem %s0, %s159
        %s161 = smul.u32 2, %s10
      $region32: #{rcsosa_forward.5} parent=27 // pred_fallthru
        _
    $region28: #{rcsosa_forward.5} parent=5 // pred_fallthru
      _
    %p162 = scmp.le.s32.totalorder 1, %s10
    %p163 = scmp.lt.s32.totalorder %s10, 3
    %p164 = pnand %p162, %p163
    %p165 = pneg %p164
    // Predicated region
    $region33: #{rcsosa_forward.5} parent=5 // pred_check
      _
    $region34: #{rcsosa_forward.5} parent=5 // pred_check_branch
      %167 = sbr.rel (%p164) target = $region36
    $region35: #{rcsosa_forward.5} parent=5 // pred_region
      %s168 = ssub.s32 %s10, 1
      %s169 = smul.u32 2, %s15
      %p170 = scmp.lt.s32.totalorder %s169, 3
      %s171 = scalar_select %p170, %s169, 3
      %s172 = smul.addr %s171, 8
      %s173 = scalar_lea.vmem %s0, %s172
      %p174 = pneg %p36
      %p175 = pneg %p33
      %p176 = pneg %p57
      %p177 = pneg %p54
      %p178 = pneg %p78
      %p179 = pneg %p75
      %p180 = pneg %p99
      %p181 = pneg %p96
      %p182 = pneg %p125
      %p183 = pneg %p122
      %s184 = smul.u32 2, %s15
      %p185 = scmp.lt.s32.totalorder %s184, 3
      %s186 = scalar_select %p185, %s184, 3
      %s187 = smul.addr %s186, 8
      %s188 = scalar_lea.vmem %s4, %s187
      %s189 = smul.u32 2, %s15
      %p190 = scmp.lt.s32.totalorder %s189, 3
      %s191 = scalar_select %p190, %s189, 3
      %s192 = smul.addr %s191, 8
      %s193 = scalar_lea.vmem %s0, %s192
      %s194 = smul.u32 2, %s15
      %s195 = smul.u32 2, %s15
      %p196 = scmp.lt.s32.totalorder %s195, 3
      %s197 = scalar_select %p196, %s195, 3
      %s198 = smul.addr %s197, 8
      %s199 = scalar_lea.vmem %s4, %s198
      %s200 = smul.u32 2, %s15
      %201 = vst [vmem:[#allocation2 + $0x7] sm:$0x1] 0.0
      %202 = vst [vmem:[#allocation2 + $0x18] sm:$0x1] 0.0
      %v203 = vld [vmem:[%s193] sm:$0xff]
      %v204 = vld [vmem:[%s193 + $0x8] sm:$0xff]
      %205 = vst [vmem:[#allocation2 + $0x8] sm:$0xff] %v203
      %206 = vst [vmem:[#allocation2 + $0x10] sm:$0xff] %v204
      %v207 = vld [vmem:[%s3] sm:$0x1]
      %v208 = vld [vmem:[#allocation2 + $0x7] sm:$0xff]
      %v209 = vld [vmem:[#allocation2 + $0xf] sm:$0xff]
      %v210 = vld [vmem:[%s1] sm:$0xff]
      %v211 = vld [vmem:[%s1 + $0x8] sm:$0xff]
      %v212 = vld [vmem:[%s1 + $0x10] sm:$0xff]
      %v213 = vld [vmem:[%s1 + $0x18] sm:$0xff]
      %v214 = vld [vmem:[%s1 + $0x20] sm:$0xff]
      %v215 = vld [vmem:[%s1 + $0x28] sm:$0xff]
      %v216 = vld [vmem:[%s1 + $0x30] sm:$0xff]
      %v217 = vld [vmem:[%s1 + $0x38] sm:$0xff]
      %v218 = vld [vmem:[%s1 + $0x40] sm:$0xff]
      %v219 = vld [vmem:[%s1 + $0x48] sm:$0xff]
      %v220 = vld [vmem:[%s1 + $0x50] sm:$0xff]
      %v221 = vld [vmem:[%s1 + $0x58] sm:$0xff]
      %v222 = vld [vmem:[%s1 + $0x60] sm:$0xff]
      %v223 = vld [vmem:[%s1 + $0x68] sm:$0xff]
      %v224 = vld [vmem:[%s1 + $0x70] sm:$0xff]
      %v225 = vld [vmem:[%s1 + $0x78] sm:$0xff]
      %v226 = vld [vmem:[#allocation2 + $0x8] sm:$0xff]
      %v227 = vld [vmem:[#allocation2 + $0x10] sm:$0xff]
      %s228 = scalar_lea.vmem %s1, 128
      %v229 = vld [vmem:[%s228] sm:$0xff]
      %v230 = vld [vmem:[%s228 + $0x8] sm:$0xff]
      %v231 = vld [vmem:[%s228 + $0x10] sm:$0xff]
      %v232 = vld [vmem:[%s228 + $0x18] sm:$0xff]
      %v233 = vld [vmem:[%s228 + $0x20] sm:$0xff]
      %v234 = vld [vmem:[%s228 + $0x28] sm:$0xff]
      %v235 = vld [vmem:[%s228 + $0x30] sm:$0xff]
      %v236 = vld [vmem:[%s228 + $0x38] sm:$0xff]
      %v237 = vld [vmem:[%s228 + $0x40] sm:$0xff]
      %v238 = vld [vmem:[%s228 + $0x48] sm:$0xff]
      %v239 = vld [vmem:[%s228 + $0x50] sm:$0xff]
      %v240 = vld [vmem:[%s228 + $0x58] sm:$0xff]
      %v241 = vld [vmem:[%s228 + $0x60] sm:$0xff]
      %v242 = vld [vmem:[%s228 + $0x68] sm:$0xff]
      %v243 = vld [vmem:[%s228 + $0x70] sm:$0xff]
      %v244 = vld [vmem:[%s228 + $0x78] sm:$0xff]
      %245 = vmatprep.subr.mxu0 0.0
      %246 = vmatpush1.msra.mxu0 %v229
      %247 = vmatprep.subr.mxu0 0.0
      %248 = vmatpush1.msra.mxu0 %v230
      %249 = vmatprep.subr.mxu0 0.0
      %250 = vmatpush1.msra.mxu0 %v231
      %251 = vmatprep.subr.mxu0 0.0
      %252 = vmatpush1.msra.mxu0 %v232
      %253 = vmatprep.subr.mxu0 0.0
      %254 = vmatpush1.msra.mxu0 %v233
      %255 = vmatprep.subr.mxu0 0.0
      %256 = vmatpush1.msra.mxu0 %v234
      %257 = vmatprep.subr.mxu0 0.0
      %258 = vmatpush1.msra.mxu0 %v235
      %259 = vmatprep.subr.mxu0 0.0
      %260 = vmatpush1.msra.mxu0 %v236
      %261 = vmatprep.subr.mxu0 0.0
      %262 = vmatpush1.msra.mxu0 %v237
      %263 = vmatprep.subr.mxu0 0.0
      %264 = vmatpush1.msra.mxu0 %v238
      %265 = vmatprep.subr.mxu0 0.0
      %266 = vmatpush1.msra.mxu0 %v239
      %267 = vmatprep.subr.mxu0 0.0
      %268 = vmatpush1.msra.mxu0 %v240
      %269 = vmatprep.subr.mxu0 0.0
      %270 = vmatpush1.msra.mxu0 %v241
      %271 = vmatprep.subr.mxu0 0.0
      %272 = vmatpush1.msra.mxu0 %v242
      %273 = vmatprep.subr.mxu0 0.0
      %274 = vmatpush1.msra.mxu0 %v243
      %275 = vmatprep.subr.mxu0 0.0
      %276 = vmatpush1.msra.mxu0 %v244
      %277 = vmatprep.subr.mxu0 0.0
      %278 = vmatpush1.msra.mxu0 0.0
      %279 = vmatprep.subr.mxu0 0.0
      %280 = vmatpush1.msra.mxu0 0.0
      %281 = vmatprep.subr.mxu0 0.0
      %282 = vmatpush1.msra.mxu0 0.0
      %283 = vmatprep.subr.mxu0 0.0
      %284 = vmatpush1.msra.mxu0 0.0
      %285 = vmatprep.subr.mxu0 0.0
      %286 = vmatpush1.msra.mxu0 0.0
      %287 = vmatprep.subr.mxu0 0.0
      %288 = vmatpush1.msra.mxu0 0.0
      %289 = vmatprep.subr.mxu0 0.0
      %290 = vmatpush1.msra.mxu0 0.0
      %291 = vmatprep.subr.mxu0 0.0
      %292 = vmatpush1.msra.mxu0 0.0
      %293 = vmatprep.subr.mxu0 0.0
      %294 = vmatpush1.msra.mxu0 0.0
      %295 = vmatprep.subr.mxu0 0.0
      %296 = vmatpush1.msra.mxu0 0.0
      %297 = vmatprep.subr.mxu0 0.0
      %298 = vmatpush1.msra.mxu0 0.0
      %299 = vmatprep.subr.mxu0 0.0
      %300 = vmatpush1.msra.mxu0 0.0
      %301 = vmatprep.subr.mxu0 0.0
      %302 = vmatpush1.msra.mxu0 0.0
      %303 = vmatprep.subr.mxu0 0.0
      %304 = vmatpush1.msra.mxu0 0.0
      %305 = vmatprep.subr.mxu0 0.0
      %306 = vmatpush1.msra.mxu0 0.0
      %307 = vmatprep.subr.mxu0 0.0
      %308 = vmatpush1.msra.mxu0 0.0
      %309 = vmatprep.mubr.f32.mxu0 0.0
      %310 = vmatmul.mubr.f32.gmra.mrb[0].mxu0 %v226
      %v311 = vpop.f32.mrb[0].mxu0
      %v312 = vadd.f32 0.0, %v311
      %v313 = vpop.f32.mrb[0].mxu0
      %314 = vmatprep.mubr.f32.mxu0 0.0
      %315 = vmatmul.mubr.f32.gmra.mrb[0].mxu0 %v227
      %v316 = vpop.f32.mrb[0].mxu0
      %v317 = vadd.f32 0.0, %v316
      %v318 = vpop.f32.mrb[0].mxu0
      %319 = vdwg.mxu0
      %320 = vmatprep.subr.mxu0 0.0
      %321 = vmatpush1.msra.mxu0 %v210
      %322 = vmatprep.subr.mxu0 0.0
      %323 = vmatpush1.msra.mxu0 %v211
      %324 = vmatprep.subr.mxu0 0.0
      %325 = vmatpush1.msra.mxu0 %v212
      %326 = vmatprep.subr.mxu0 0.0
      %327 = vmatpush1.msra.mxu0 %v213
      %328 = vmatprep.subr.mxu0 0.0
      %329 = vmatpush1.msra.mxu0 %v214
      %330 = vmatprep.subr.mxu0 0.0
      %331 = vmatpush1.msra.mxu0 %v215
      %332 = vmatprep.subr.mxu0 0.0
      %333 = vmatpush1.msra.mxu0 %v216
      %334 = vmatprep.subr.mxu0 0.0
      %335 = vmatpush1.msra.mxu0 %v217
      %336 = vmatprep.subr.mxu0 0.0
      %337 = vmatpush1.msra.mxu0 %v218
      %338 = vmatprep.subr.mxu0 0.0
      %339 = vmatpush1.msra.mxu0 %v219
      %340 = vmatprep.subr.mxu0 0.0
      %341 = vmatpush1.msra.mxu0 %v220
      %342 = vmatprep.subr.mxu0 0.0
      %343 = vmatpush1.msra.mxu0 %v221
      %344 = vmatprep.subr.mxu0 0.0
      %345 = vmatpush1.msra.mxu0 %v222
      %346 = vmatprep.subr.mxu0 0.0
      %347 = vmatpush1.msra.mxu0 %v223
      %348 = vmatprep.subr.mxu0 0.0
      %349 = vmatpush1.msra.mxu0 %v224
      %350 = vmatprep.subr.mxu0 0.0
      %351 = vmatpush1.msra.mxu0 %v225
      %352 = vmatprep.subr.mxu0 0.0
      %353 = vmatpush1.msra.mxu0 0.0
      %354 = vmatprep.subr.mxu0 0.0
      %355 = vmatpush1.msra.mxu0 0.0
      %356 = vmatprep.subr.mxu0 0.0
      %357 = vmatpush1.msra.mxu0 0.0
      %358 = vmatprep.subr.mxu0 0.0
      %359 = vmatpush1.msra.mxu0 0.0
      %360 = vmatprep.subr.mxu0 0.0
      %361 = vmatpush1.msra.mxu0 0.0
      %362 = vmatprep.subr.mxu0 0.0
      %363 = vmatpush1.msra.mxu0 0.0
      %364 = vmatprep.subr.mxu0 0.0
      %365 = vmatpush1.msra.mxu0 0.0
      %366 = vmatprep.subr.mxu0 0.0
      %367 = vmatpush1.msra.mxu0 0.0
      %368 = vmatprep.subr.mxu0 0.0
      %369 = vmatpush1.msra.mxu0 0.0
      %370 = vmatprep.subr.mxu0 0.0
      %371 = vmatpush1.msra.mxu0 0.0
      %372 = vmatprep.subr.mxu0 0.0
      %373 = vmatpush1.msra.mxu0 0.0
      %374 = vmatprep.subr.mxu0 0.0
      %375 = vmatpush1.msra.mxu0 0.0
      %376 = vmatprep.subr.mxu0 0.0
      %377 = vmatpush1.msra.mxu0 0.0
      %378 = vmatprep.subr.mxu0 0.0
      %379 = vmatpush1.msra.mxu0 0.0
      %380 = vmatprep.subr.mxu0 0.0
      %381 = vmatpush1.msra.mxu0 0.0
      %382 = vmatprep.subr.mxu0 0.0
      %383 = vmatpush1.msra.mxu0 0.0
      %384 = vmatprep.mubr.f32.mxu0 0.0
      %385 = vmatmul.mubr.f32.gmra.mrb[0].mxu0 %v208
      %v386 = vpop.f32.mrb[0].mxu0
      %v387 = vadd.f32 %v312, %v386
      %v388 = vpop.f32.mrb[0].mxu0
      %389 = vmatprep.mubr.f32.mxu0 0.0
      %390 = vmatmul.mubr.f32.gmra.mrb[0].mxu0 %v209
      %v391 = vpop.f32.mrb[0].mxu0
      %v392 = vadd.f32 %v317, %v391
      %v393 = vpop.f32.mrb[0].mxu0
      %394 = vdwg.mxu0
      %v395 = vld [vmem:[#allocation2 + $0x9] sm:$0xff]
      %v396 = vld [vmem:[#allocation2 + $0x11] sm:$0xff]
      %s397 = scalar_lea.vmem %s1, 256
      %v398 = vld [vmem:[%s397] sm:$0xff]
      %v399 = vld [vmem:[%s397 + $0x8] sm:$0xff]
      %v400 = vld [vmem:[%s397 + $0x10] sm:$0xff]
      %v401 = vld [vmem:[%s397 + $0x18] sm:$0xff]
      %v402 = vld [vmem:[%s397 + $0x20] sm:$0xff]
      %v403 = vld [vmem:[%s397 + $0x28] sm:$0xff]
      %v404 = vld [vmem:[%s397 + $0x30] sm:$0xff]
      %v405 = vld [vmem:[%s397 + $0x38] sm:$0xff]
      %v406 = vld [vmem:[%s397 + $0x40] sm:$0xff]
      %v407 = vld [vmem:[%s397 + $0x48] sm:$0xff]
      %v408 = vld [vmem:[%s397 + $0x50] sm:$0xff]
      %v409 = vld [vmem:[%s397 + $0x58] sm:$0xff]
      %v410 = vld [vmem:[%s397 + $0x60] sm:$0xff]
      %v411 = vld [vmem:[%s397 + $0x68] sm:$0xff]
      %v412 = vld [vmem:[%s397 + $0x70] sm:$0xff]
      %v413 = vld [vmem:[%s397 + $0x78] sm:$0xff]
      %414 = vmatprep.subr.mxu0 0.0
      %415 = vmatpush1.msra.mxu0 %v398
      %416 = vmatprep.subr.mxu0 0.0
      %417 = vmatpush1.msra.mxu0 %v399
      %418 = vmatprep.subr.mxu0 0.0
      %419 = vmatpush1.msra.mxu0 %v400
      %420 = vmatprep.subr.mxu0 0.0
      %421 = vmatpush1.msra.mxu0 %v401
      %422 = vmatprep.subr.mxu0 0.0
      %423 = vmatpush1.msra.mxu0 %v402
      %424 = vmatprep.subr.mxu0 0.0
      %425 = vmatpush1.msra.mxu0 %v403
      %426 = vmatprep.subr.mxu0 0.0
      %427 = vmatpush1.msra.mxu0 %v404
      %428 = vmatprep.subr.mxu0 0.0
      %429 = vmatpush1.msra.mxu0 %v405
      %430 = vmatprep.subr.mxu0 0.0
      %431 = vmatpush1.msra.mxu0 %v406
      %432 = vmatprep.subr.mxu0 0.0
      %433 = vmatpush1.msra.mxu0 %v407
      %434 = vmatprep.subr.mxu0 0.0
      %435 = vmatpush1.msra.mxu0 %v408
      %436 = vmatprep.subr.mxu0 0.0
      %437 = vmatpush1.msra.mxu0 %v409
      %438 = vmatprep.subr.mxu0 0.0
      %439 = vmatpush1.msra.mxu0 %v410
      %440 = vmatprep.subr.mxu0 0.0
      %441 = vmatpush1.msra.mxu0 %v411
      %442 = vmatprep.subr.mxu0 0.0
      %443 = vmatpush1.msra.mxu0 %v412
      %444 = vmatprep.subr.mxu0 0.0
      %445 = vmatpush1.msra.mxu0 %v413
      %446 = vmatprep.subr.mxu0 0.0
      %447 = vmatpush1.msra.mxu0 0.0
      %448 = vmatprep.subr.mxu0 0.0
      %449 = vmatpush1.msra.mxu0 0.0
      %450 = vmatprep.subr.mxu0 0.0
      %451 = vmatpush1.msra.mxu0 0.0
      %452 = vmatprep.subr.mxu0 0.0
      %453 = vmatpush1.msra.mxu0 0.0
      %454 = vmatprep.subr.mxu0 0.0
      %455 = vmatpush1.msra.mxu0 0.0
      %456 = vmatprep.subr.mxu0 0.0
      %457 = vmatpush1.msra.mxu0 0.0
      %458 = vmatprep.subr.mxu0 0.0
      %459 = vmatpush1.msra.mxu0 0.0
      %460 = vmatprep.subr.mxu0 0.0
      %461 = vmatpush1.msra.mxu0 0.0
      %462 = vmatprep.subr.mxu0 0.0
      %463 = vmatpush1.msra.mxu0 0.0
      %464 = vmatprep.subr.mxu0 0.0
      %465 = vmatpush1.msra.mxu0 0.0
      %466 = vmatprep.subr.mxu0 0.0
      %467 = vmatpush1.msra.mxu0 0.0
      %468 = vmatprep.subr.mxu0 0.0
      %469 = vmatpush1.msra.mxu0 0.0
      %470 = vmatprep.subr.mxu0 0.0
      %471 = vmatpush1.msra.mxu0 0.0
      %472 = vmatprep.subr.mxu0 0.0
      %473 = vmatpush1.msra.mxu0 0.0
      %474 = vmatprep.subr.mxu0 0.0
      %475 = vmatpush1.msra.mxu0 0.0
      %476 = vmatprep.subr.mxu0 0.0
      %477 = vmatpush1.msra.mxu0 0.0
      %478 = vmatprep.mubr.f32.mxu0 0.0
      %479 = vmatmul.mubr.f32.gmra.mrb[0].mxu0 %v395
      %v480 = vpop.f32.mrb[0].mxu0
      %v481 = vadd.f32 0.0, %v480
      %v482 = vpop.f32.mrb[0].mxu0
      %483 = vmatprep.mubr.f32.mxu0 0.0
      %484 = vmatmul.mubr.f32.gmra.mrb[0].mxu0 %v396
      %v485 = vpop.f32.mrb[0].mxu0
      %v486 = vadd.f32 0.0, %v485
      %v487 = vpop.f32.mrb[0].mxu0
      %488 = vdwg.mxu0
      %v489 = vadd.f32 %v387, %v481
      %v490 = vadd.f32 %v392, %v486
      %v491 = vld [vmem:[%s2] sm:$0x1]
      %v493 = vlaneseq
      %v494 = vshrl.u32 %v493, 7
      %v495 = vsub.s32 0, %v494
      %v496 = vrot.slane %v491, %v495
      %v498 = vadd.f32 %v489, %v496
      %v499 = vadd.f32 %v490, %v496
      %v500 = vxor.u32 %v498, 2147483648
      %v501 = vxor.u32 %v499, 2147483648
      %v502 = vmul.f32 %v500, 1.442695
      %v503 = vpow.pop %v502
      %v504 = vmul.f32 %v501, 1.442695
      %v505 = vpow.pop %v504
      %v506 = vadd.f32 %v503, 1.0
      %v507 = vadd.f32 %v505, 1.0
      %v508 = vrcp.pop %v506
      %v509 = vmul.f32 1.0, %v508
      %v510 = vrcp.pop %v507
      %v511 = vmul.f32 1.0, %v510
      %v513 = vlaneseq
      %v514 = vshrl.u32 %v513, 7
      %v515 = vsub.s32 0, %v514
      %v516 = vrot.slane %v207, %v515
      %v518 = vmul.f32 %v516, %v509
      %v519 = vmul.f32 %v516, %v511
      %v520 = vsub.f32 1.0, %v207
      %v522 = vlaneseq
      %v523 = vshrl.u32 %v522, 7
      %v524 = vsub.s32 0, %v523
      %v525 = vrot.slane %v520, %v524
      %v527 = vadd.f32 %v518, %v525
      %v528 = vadd.f32 %v519, %v525
      %v529 = vmul.f32 %v498, %v527
      %v530 = vmul.f32 %v499, %v528
      %531 = vst [vmem:[%s199] sm:$0xff] %v529
      %532 = vst [vmem:[%s199 + $0x8] sm:$0xff] %v530
      %s533 = smul.u32 2, %s15
      %p534 = scmp.lt.s32.totalorder %s533, 3
      %s535 = scalar_select %p534, %s533, 3
      %s536 = smul.addr %s535, 8
      %s537 = scalar_lea.vmem %s4, %s536
      // Predicated region
      $region37: #{rcsosa_forward.5} parent=35 // pred_check
        %p538 = pneg %p122
      $region38: #{rcsosa_forward.5} parent=35 // pred_check_branch
        %540 = sbr.rel (%p538) target = $region40
      $region39: #{rcsosa_forward.5} parent=35 // pred_region
        %s541 = smul.u32 2, %s15
      $region40: #{rcsosa_forward.5} parent=35 // pred_fallthru
        _
    $region36: #{rcsosa_forward.5} parent=5 // pred_fallthru
      _
    %p542 = scmp.le.s32.totalorder 2, %s10
    // Predicated region
    $region41: #{rcsosa_forward.5} parent=5 // pred_check
      %p543 = pneg %p542
    $region42: #{rcsosa_forward.5} parent=5 // pred_check_branch
      %545 = sbr.rel (%p543) target = $region44
    $region43: #{rcsosa_forward.5} parent=5 // pred_region
      %s546 = ssub.s32 %s10, 2
      // Predicated region
      $region45: #{rcsosa_forward.5} parent=43 // pred_check
        %p547 = pneg %p128
      $region46: #{rcsosa_forward.5} parent=43 // pred_check_branch
        %549 = sbr.rel (%p547) target = $region48
      $region47: #{rcsosa_forward.5} parent=43 // pred_region
        %s550 = smul.u32 2, %s16
        %p551 = scmp.lt.s32.totalorder %s550, 3
        %s552 = scalar_select %p551, %s550, 3
        %s553 = smul.addr %s552, 8
        %s554 = scalar_lea.vmem %s4, %s553
      $region48: #{rcsosa_forward.5} parent=43 // pred_fallthru
        _
    $region44: #{rcsosa_forward.5} parent=5 // pred_fallthru
      _
  $region6: #{rcsosa_forward.5} parent=0 // loop_footer
    %s14 = sadd.s32 1, %s10
  $region7: #{rcsosa_forward.5} parent=0 // loop_footer_branch
    %9 = sbr.rel target = $region3
  $region8: #{rcsosa_forward.5} parent=0 // loop_exit
    _

// kernel: rcsosa_forward.6
$region0: #{rcsosa_forward.6}
  #allocation0 [shape = 'u32[]', space=smem, size = 0x4, offset = 0x4, fixed_abs, tag = 'smem constant byte address 0x4 - core index']
  #allocation1 [shape = 'u32[144,128]{1,0:T(1,128)}', space=vmem, size = 0x12000, scoped, tag = 'internal scratch']
  #allocation2 [shape = 'f32[32,128]{1,0:T(8,128)}', space=vmem, size = 0x4000, scoped, tag = 'scratch operand']
  %s0 = inlined_call_operand.vmem [shape: f32[32,128], index: 0, kind: input, shape index: {}]
  %s1 = inlined_call_operand.hbm [shape: f32[3,128,128], index: 1, kind: input, shape index: {}]
  %s2 = inlined_call_operand.vmem [shape: f32[1,128], index: 2, kind: input, shape index: {}]
  %s3 = inlined_call_operand.vmem [shape: f32[1,128], index: 3, kind: input, shape index: {}]
  %s4 = inlined_call_operand.vmem [shape: f32[32,128], index: 4, kind: output, shape index: {}]
  %s5 = sld [smem:[#allocation0]]
  $region53: #{rcsosa_forward.6} parent=0
    _
  %s7 = ssub.s32 1, %s5
  %s8 = scalar_select 0, %s7, %s5
  $region1: #{rcsosa_forward.6} parent=0
    #allocation3 [shape = 'u8[196608]{0}', space=vmem, size = 0x30000, scoped, tag = 'input window, operand 1, single buffered']
    #allocation4 [shape = 's32[2]{0}', space=sflag, size = 0x8, scoped, tag = 'scoped memory for rcsosa_forward.6']
    %9 = vsyncpa [#allocation4], 0
    loop: start=0, step=1, limit=4
    $region2: #{rcsosa_forward.6} parent=1 // loop_pre_header
      _
    $region3: #{rcsosa_forward.6} parent=1 // loop_header
      %s11 = sphi 0, %s15
      %p12 = scmp.ge.s32.totalorder %s11, 4
      %s21 = sphi 0, %s23
      %s24 = sphi 0, %s21
      %s25 = sphi 0, %s24
      %s41 = sphi 0, %s25
      %s45 = sphi 0, %s45
      %s47 = sphi 0, %s45
      %s48 = sphi 0, %s47
      %s62 = sphi 0, %s48
      %s66 = sphi 0, %s66
      %s68 = sphi 0, %s66
      %s69 = sphi 0, %s68
      %s83 = sphi 0, %s69
      %s87 = sphi 0, %s87
      %s89 = sphi 0, %s87
      %s90 = sphi 0, %s89
      %s104 = sphi 0, %s90
      %s110 = sphi 0, %s112
      %s113 = sphi 0, %s110
      %s114 = sphi 0, %s113
      %s130 = sphi 0, %s114
    $region4: #{rcsosa_forward.6} parent=1 // loop_header_branch
      %14 = sbr.rel (%p12) target = $region8
    $region5: #{rcsosa_forward.6} parent=1 // loop_body
      %s16 = ssub.s32 %s11, 1
      %s17 = ssub.s32 %s11, 2
      %s18 = sadd.s32 %s11, 1
      %s19 = ssub.s32 %s11, %s18
      %p20 = scmp.eq.s32.totalorder %s19, 0
      %s22 = sadd.s32 %s21, 1
      %s23 = scalar_select %p20, %s21, %s22
      %p26 = pneg %p20
      %p27 = scmp.eq.s32.totalorder %s11, 1
      %p28 = por %p26, %p27
      %p29 = scmp.ne.s32.totalorder %s21, %s24
      %p30 = scmp.eq.s32.totalorder %s11, 0
      %p31 = por %p29, %p30
      %p32 = scmp.ne.s32.totalorder %s21, %s24
      %p33 = scmp.eq.s32.totalorder %s16, 1
      %p34 = por %p32, %p33
      %p35 = scmp.ne.s32.totalorder %s24, %s25
      %p36 = scmp.eq.s32.totalorder %s16, 0
      %p37 = por %p35, %p36
      %p38 = scmp.ne.s32.totalorder %s24, %s25
      %p39 = scmp.eq.s32.totalorder %s17, 1
      %p40 = por %p38, %p39
      %p42 = scmp.ne.s32.totalorder %s25, %s41
      %p43 = scmp.eq.s32.totalorder %s17, 0
      %p44 = por %p42, %p43
      %s46 = sadd.s32 %s45, 1
      %p49 = scmp.eq.s32.totalorder %s11, 1
      %p50 = scmp.ne.s32.totalorder %s45, %s47
      %p51 = scmp.eq.s32.totalorder %s11, 0
      %p52 = por %p50, %p51
      %p53 = scmp.ne.s32.totalorder %s45, %s47
      %p54 = scmp.eq.s32.totalorder %s16, 1
      %p55 = por %p53, %p54
      %p56 = scmp.ne.s32.totalorder %s47, %s48
      %p57 = scmp.eq.s32.totalorder %s16, 0
      %p58 = por %p56, %p57
      %p59 = scmp.ne.s32.totalorder %s47, %s48
      %p60 = scmp.eq.s32.totalorder %s17, 1
      %p61 = por %p59, %p60
      %p63 = scmp.ne.s32.totalorder %s48, %s62
      %p64 = scmp.eq.s32.totalorder %s17, 0
      %p65 = por %p63, %p64
      %s67 = sadd.s32 %s66, 1
      %p70 = scmp.eq.s32.totalorder %s11, 1
      %p71 = scmp.ne.s32.totalorder %s66, %s68
      %p72 = scmp.eq.s32.totalorder %s11, 0
      %p73 = por %p71, %p72
      %p74 = scmp.ne.s32.totalorder %s66, %s68
      %p75 = scmp.eq.s32.totalorder %s16, 1
      %p76 = por %p74, %p75
      %p77 = scmp.ne.s32.totalorder %s68, %s69
      %p78 = scmp.eq.s32.totalorder %s16, 0
      %p79 = por %p77, %p78
      %p80 = scmp.ne.s32.totalorder %s68, %s69
      %p81 = scmp.eq.s32.totalorder %s17, 1
      %p82 = por %p80, %p81
      %p84 = scmp.ne.s32.totalorder %s69, %s83
      %p85 = scmp.eq.s32.totalorder %s17, 0
      %p86 = por %p84, %p85
      %s88 = sadd.s32 %s87, 1
      %p91 = scmp.eq.s32.totalorder %s11, 1
      %p92 = scmp.ne.s32.totalorder %s87, %s89
      %p93 = scmp.eq.s32.totalorder %s11, 0
      %p94 = por %p92, %p93
      %p95 = scmp.ne.s32.totalorder %s87, %s89
      %p96 = scmp.eq.s32.totalorder %s16, 1
      %p97 = por %p95, %p96
      %p98 = scmp.ne.s32.totalorder %s89, %s90
      %p99 = scmp.eq.s32.totalorder %s16, 0
      %p100 = por %p98, %p99
      %p101 = scmp.ne.s32.totalorder %s89, %s90
      %p102 = scmp.eq.s32.totalorder %s17, 1
      %p103 = por %p101, %p102
      %p105 = scmp.ne.s32.totalorder %s90, %s104
      %p106 = scmp.eq.s32.totalorder %s17, 0
      %p107 = por %p105, %p106
      %s108 = ssub.s32 %s11, %s18
      %p109 = scmp.eq.s32.totalorder %s108, 0
      %s111 = sadd.s32 %s110, 1
      %s112 = scalar_select %p109, %s110, %s111
      %p115 = pneg %p109
      %p116 = scmp.eq.s32.totalorder %s11, 1
      %p117 = por %p115, %p116
      %p118 = scmp.ne.s32.totalorder %s110, %s113
      %p119 = scmp.eq.s32.totalorder %s11, 0
      %p120 = por %p118, %p119
      %p121 = scmp.ne.s32.totalorder %s110, %s113
      %p122 = scmp.eq.s32.totalorder %s16, 1
      %p123 = por %p121, %p122
      %p124 = scmp.ne.s32.totalorder %s113, %s114
      %p125 = scmp.eq.s32.totalorder %s16, 0
      %p126 = por %p124, %p125
      %p127 = scmp.ne.s32.totalorder %s113, %s114
      %p128 = scmp.eq.s32.totalorder %s17, 1
      %p129 = por %p127, %p128
      %p131 = scmp.ne.s32.totalorder %s114, %s130
      %p132 = scmp.eq.s32.totalorder %s17, 0
      %p133 = por %p131, %p132
      %p134 = scmp.le.s32.totalorder 1, %s11
      %p135 = scmp.lt.s32.totalorder %s11, 3
      %p136 = pnand %p134, %p135
      %p137 = pneg %p136
      // Predicated region
      $region9: #{rcsosa_forward.6} parent=5 // pred_check
        _
      $region10: #{rcsosa_forward.6} parent=5 // pred_check_branch
        %139 = sbr.rel (%p136) target = $region12
      $region11: #{rcsosa_forward.6} parent=5 // pred_region
        %s140 = ssub.s32 %s11, 1
        // Predicated region
        $region13: #{rcsosa_forward.6} parent=11 // pred_check
          %p141 = pneg %p58
        $region14: #{rcsosa_forward.6} parent=11 // pred_check_branch
          %143 = sbr.rel (%p141) target = $region16
        $region15: #{rcsosa_forward.6} parent=11 // pred_region
          %s145 = ssub.s32 6144, 6144
          %146 = vsyncadd [#allocation4], %s145
          %s147 = sshll.u32 [#allocation3], 4
          %s148 = int_to_ptr.vmem [resolvable:$true] %s147
          %153 = dma.hbm_to_vmem [thread:$0]  %s1, 6144, %s148, [#allocation4], 128, 128, 8
        $region16: #{rcsosa_forward.6} parent=11 // pred_fallthru
          _
        // Predicated region
        $region17: #{rcsosa_forward.6} parent=11 // pred_check
          %p154 = pneg %p79
        $region18: #{rcsosa_forward.6} parent=11 // pred_check_branch
          %156 = sbr.rel (%p154) target = $region20
        $region19: #{rcsosa_forward.6} parent=11 // pred_region
          _
        $region20: #{rcsosa_forward.6} parent=11 // pred_fallthru
          _
        // Predicated region
        $region21: #{rcsosa_forward.6} parent=11 // pred_check
          %p157 = pneg %p100
        $region22: #{rcsosa_forward.6} parent=11 // pred_check_branch
          %159 = sbr.rel (%p157) target = $region24
        $region23: #{rcsosa_forward.6} parent=11 // pred_region
          _
        $region24: #{rcsosa_forward.6} parent=11 // pred_fallthru
          _
      $region12: #{rcsosa_forward.6} parent=5 // pred_fallthru
        _
      %p160 = scmp.lt.s32.totalorder %s11, 2
      // Predicated region
      $region25: #{rcsosa_forward.6} parent=5 // pred_check
        %p161 = pneg %p160
      $region26: #{rcsosa_forward.6} parent=5 // pred_check_branch
        %163 = sbr.rel (%p161) target = $region28
      $region27: #{rcsosa_forward.6} parent=5 // pred_region
        // Predicated region
        $region29: #{rcsosa_forward.6} parent=27 // pred_check
          %p164 = pneg %p31
        $region30: #{rcsosa_forward.6} parent=27 // pred_check_branch
          %166 = sbr.rel (%p164) target = $region32
        $region31: #{rcsosa_forward.6} parent=27 // pred_region
          %s167 = smul.u32 2, %s11
          %p168 = scmp.lt.s32.totalorder %s167, 3
          %s169 = scalar_select %p168, %s167, 3
          %s170 = smul.addr %s169, 8
          %s171 = scalar_lea.vmem %s0, %s170
          %s172 = smul.u32 2, %s11
        $region32: #{rcsosa_forward.6} parent=27 // pred_fallthru
          _
      $region28: #{rcsosa_forward.6} parent=5 // pred_fallthru
        _
      %p173 = scmp.le.s32.totalorder 1, %s11
      %p174 = scmp.lt.s32.totalorder %s11, 3
      %p175 = pnand %p173, %p174
      %p176 = pneg %p175
      // Predicated region
      $region33: #{rcsosa_forward.6} parent=5 // pred_check
        _
      $region34: #{rcsosa_forward.6} parent=5 // pred_check_branch
        %178 = sbr.rel (%p175) target = $region36
      $region35: #{rcsosa_forward.6} parent=5 // pred_region
        %s179 = ssub.s32 %s11, 1
        // Predicated region
        $region37: #{rcsosa_forward.6} parent=35 // pred_check
          %p180 = pneg %p58
        $region38: #{rcsosa_forward.6} parent=35 // pred_check_branch
          %182 = sbr.rel (%p180) target = $region40
        $region39: #{rcsosa_forward.6} parent=35 // pred_region
          %183 = dma.done [#allocation4], 6144
        $region40: #{rcsosa_forward.6} parent=35 // pred_fallthru
          _
        %s184 = smul.u32 2, %s16
        %p185 = scmp.lt.s32.totalorder %s184, 3
        %s186 = scalar_select %p185, %s184, 3
        %s187 = smul.addr %s186, 8
        %s188 = scalar_lea.vmem %s0, %s187
        %p189 = pneg %p37
        %p190 = pneg %p34
        %p191 = pneg %p58
        %p192 = pneg %p55
        %p193 = pneg %p79
        %p194 = pneg %p76
        %p195 = pneg %p100
        %p196 = pneg %p97
        %p197 = pneg %p126
        %p198 = pneg %p123
        %s199 = smul.u32 2, %s16
        %p200 = scmp.lt.s32.totalorder %s199, 3
        %s201 = scalar_select %p200, %s199, 3
        %s202 = smul.addr %s201, 8
        %s203 = scalar_lea.vmem %s4, %s202
        %s204 = smul.u32 2, %s16
        %p205 = scmp.lt.s32.totalorder %s204, 3
        %s206 = scalar_select %p205, %s204, 3
        %s207 = smul.addr %s206, 8
        %s208 = scalar_lea.vmem %s0, %s207
        %s209 = smul.u32 2, %s16
        %s210 = smul.u32 2, %s16
        %p211 = scmp.lt.s32.totalorder %s210, 3
        %s212 = scalar_select %p211, %s210, 3
        %s213 = smul.addr %s212, 8
        %s214 = scalar_lea.vmem %s4, %s213
        %s215 = smul.u32 2, %s16
        %216 = vst [vmem:[#allocation2 + $0x7] sm:$0x1] 0.0
        %217 = vst [vmem:[#allocation2 + $0x18] sm:$0x1] 0.0
        %v218 = vld [vmem:[%s208] sm:$0xff]
        %v219 = vld [vmem:[%s208 + $0x8] sm:$0xff]
        %220 = vst [vmem:[#allocation2 + $0x8] sm:$0xff] %v218
        %221 = vst [vmem:[#allocation2 + $0x10] sm:$0xff] %v219
        %v222 = vld [vmem:[%s3] sm:$0x1]
        %v223 = vld [vmem:[#allocation2 + $0x7] sm:$0xff]
        %v224 = vld [vmem:[#allocation2 + $0xf] sm:$0xff]
        %v225 = vld [vmem:[#allocation3] sm:$0xff]
        %v226 = vld [vmem:[#allocation3 + $0x8] sm:$0xff]
        %v227 = vld [vmem:[#allocation3 + $0x10] sm:$0xff]
        %v228 = vld [vmem:[#allocation3 + $0x18] sm:$0xff]
        %v229 = vld [vmem:[#allocation3 + $0x20] sm:$0xff]
        %v230 = vld [vmem:[#allocation3 + $0x28] sm:$0xff]
        %v231 = vld [vmem:[#allocation3 + $0x30] sm:$0xff]
        %v232 = vld [vmem:[#allocation3 + $0x38] sm:$0xff]
        %v233 = vld [vmem:[#allocation3 + $0x40] sm:$0xff]
        %v234 = vld [vmem:[#allocation3 + $0x48] sm:$0xff]
        %v235 = vld [vmem:[#allocation3 + $0x50] sm:$0xff]
        %v236 = vld [vmem:[#allocation3 + $0x58] sm:$0xff]
        %v237 = vld [vmem:[#allocation3 + $0x60] sm:$0xff]
        %v238 = vld [vmem:[#allocation3 + $0x68] sm:$0xff]
        %v239 = vld [vmem:[#allocation3 + $0x70] sm:$0xff]
        %v240 = vld [vmem:[#allocation3 + $0x78] sm:$0xff]
        %v241 = vld [vmem:[#allocation2 + $0x8] sm:$0xff]
        %v242 = vld [vmem:[#allocation2 + $0x10] sm:$0xff]
        %s243 = scalar_lea.vmem [#allocation3], 128
        %v244 = vld [vmem:[%s243] sm:$0xff]
        %v245 = vld [vmem:[%s243 + $0x8] sm:$0xff]
        %v246 = vld [vmem:[%s243 + $0x10] sm:$0xff]
        %v247 = vld [vmem:[%s243 + $0x18] sm:$0xff]
        %v248 = vld [vmem:[%s243 + $0x20] sm:$0xff]
        %v249 = vld [vmem:[%s243 + $0x28] sm:$0xff]
        %v250 = vld [vmem:[%s243 + $0x30] sm:$0xff]
        %v251 = vld [vmem:[%s243 + $0x38] sm:$0xff]
        %v252 = vld [vmem:[%s243 + $0x40] sm:$0xff]
        %v253 = vld [vmem:[%s243 + $0x48] sm:$0xff]
        %v254 = vld [vmem:[%s243 + $0x50] sm:$0xff]
        %v255 = vld [vmem:[%s243 + $0x58] sm:$0xff]
        %v256 = vld [vmem:[%s243 + $0x60] sm:$0xff]
        %v257 = vld [vmem:[%s243 + $0x68] sm:$0xff]
        %v258 = vld [vmem:[%s243 + $0x70] sm:$0xff]
        %v259 = vld [vmem:[%s243 + $0x78] sm:$0xff]
        %260 = vmatprep.subr.mxu0 0.0
        %261 = vmatpush1.msra.mxu0 %v244
        %262 = vmatprep.subr.mxu0 0.0
        %263 = vmatpush1.msra.mxu0 %v245
        %264 = vmatprep.subr.mxu0 0.0
        %265 = vmatpush1.msra.mxu0 %v246
        %266 = vmatprep.subr.mxu0 0.0
        %267 = vmatpush1.msra.mxu0 %v247
        %268 = vmatprep.subr.mxu0 0.0
        %269 = vmatpush1.msra.mxu0 %v248
        %270 = vmatprep.subr.mxu0 0.0
        %271 = vmatpush1.msra.mxu0 %v249
        %272 = vmatprep.subr.mxu0 0.0
        %273 = vmatpush1.msra.mxu0 %v250
        %274 = vmatprep.subr.mxu0 0.0
        %275 = vmatpush1.msra.mxu0 %v251
        %276 = vmatprep.subr.mxu0 0.0
        %277 = vmatpush1.msra.mxu0 %v252
        %278 = vmatprep.subr.mxu0 0.0
        %279 = vmatpush1.msra.mxu0 %v253
        %280 = vmatprep.subr.mxu0 0.0
        %281 = vmatpush1.msra.mxu0 %v254
        %282 = vmatprep.subr.mxu0 0.0
        %283 = vmatpush1.msra.mxu0 %v255
        %284 = vmatprep.subr.mxu0 0.0
        %285 = vmatpush1.msra.mxu0 %v256
        %286 = vmatprep.subr.mxu0 0.0
        %287 = vmatpush1.msra.mxu0 %v257
        %288 = vmatprep.subr.mxu0 0.0
        %289 = vmatpush1.msra.mxu0 %v258
        %290 = vmatprep.subr.mxu0 0.0
        %291 = vmatpush1.msra.mxu0 %v259
        %292 = vmatprep.subr.mxu0 0.0
        %293 = vmatpush1.msra.mxu0 0.0
        %294 = vmatprep.subr.mxu0 0.0
        %295 = vmatpush1.msra.mxu0 0.0
        %296 = vmatprep.subr.mxu0 0.0
        %297 = vmatpush1.msra.mxu0 0.0
        %298 = vmatprep.subr.mxu0 0.0
        %299 = vmatpush1.msra.mxu0 0.0
        %300 = vmatprep.subr.mxu0 0.0
        %301 = vmatpush1.msra.mxu0 0.0
        %302 = vmatprep.subr.mxu0 0.0
        %303 = vmatpush1.msra.mxu0 0.0
        %304 = vmatprep.subr.mxu0 0.0
        %305 = vmatpush1.msra.mxu0 0.0
        %306 = vmatprep.subr.mxu0 0.0
        %307 = vmatpush1.msra.mxu0 0.0
        %308 = vmatprep.subr.mxu0 0.0
        %309 = vmatpush1.msra.mxu0 0.0
        %310 = vmatprep.subr.mxu0 0.0
        %311 = vmatpush1.msra.mxu0 0.0
        %312 = vmatprep.subr.mxu0 0.0
        %313 = vmatpush1.msra.mxu0 0.0
        %314 = vmatprep.subr.mxu0 0.0
        %315 = vmatpush1.msra.mxu0 0.0
        %316 = vmatprep.subr.mxu0 0.0
        %317 = vmatpush1.msra.mxu0 0.0
        %318 = vmatprep.subr.mxu0 0.0
        %319 = vmatpush1.msra.mxu0 0.0
        %320 = vmatprep.subr.mxu0 0.0
        %321 = vmatpush1.msra.mxu0 0.0
        %322 = vmatprep.subr.mxu0 0.0
        %323 = vmatpush1.msra.mxu0 0.0
        %324 = vmatprep.mubr.f32.mxu0 0.0
        %325 = vmatmul.mubr.f32.gmra.mrb[0].mxu0 %v241
        %v326 = vpop.f32.mrb[0].mxu0
        %v327 = vadd.f32 0.0, %v326
        %v328 = vpop.f32.mrb[0].mxu0
        %329 = vmatprep.mubr.f32.mxu0 0.0
        %330 = vmatmul.mubr.f32.gmra.mrb[0].mxu0 %v242
        %v331 = vpop.f32.mrb[0].mxu0
        %v332 = vadd.f32 0.0, %v331
        %v333 = vpop.f32.mrb[0].mxu0
        %334 = vdwg.mxu0
        %335 = vmatprep.subr.mxu0 0.0
        %336 = vmatpush1.msra.mxu0 %v225
        %337 = vmatprep.subr.mxu0 0.0
        %338 = vmatpush1.msra.mxu0 %v226
        %339 = vmatprep.subr.mxu0 0.0
        %340 = vmatpush1.msra.mxu0 %v227
        %341 = vmatprep.subr.mxu0 0.0
        %342 = vmatpush1.msra.mxu0 %v228
        %343 = vmatprep.subr.mxu0 0.0
        %344 = vmatpush1.msra.mxu0 %v229
        %345 = vmatprep.subr.mxu0 0.0
        %346 = vmatpush1.msra.mxu0 %v230
        %347 = vmatprep.subr.mxu0 0.0
        %348 = vmatpush1.msra.mxu0 %v231
        %349 = vmatprep.subr.mxu0 0.0
        %350 = vmatpush1.msra.mxu0 %v232
        %351 = vmatprep.subr.mxu0 0.0
        %352 = vmatpush1.msra.mxu0 %v233
        %353 = vmatprep.subr.mxu0 0.0
        %354 = vmatpush1.msra.mxu0 %v234
        %355 = vmatprep.subr.mxu0 0.0
        %356 = vmatpush1.msra.mxu0 %v235
        %357 = vmatprep.subr.mxu0 0.0
        %358 = vmatpush1.msra.mxu0 %v236
        %359 = vmatprep.subr.mxu0 0.0
        %360 = vmatpush1.msra.mxu0 %v237
        %361 = vmatprep.subr.mxu0 0.0
        %362 = vmatpush1.msra.mxu0 %v238
        %363 = vmatprep.subr.mxu0 0.0
        %364 = vmatpush1.msra.mxu0 %v239
        %365 = vmatprep.subr.mxu0 0.0
        %366 = vmatpush1.msra.mxu0 %v240
        %367 = vmatprep.subr.mxu0 0.0
        %368 = vmatpush1.msra.mxu0 0.0
        %369 = vmatprep.subr.mxu0 0.0
        %370 = vmatpush1.msra.mxu0 0.0
        %371 = vmatprep.subr.mxu0 0.0
        %372 = vmatpush1.msra.mxu0 0.0
        %373 = vmatprep.subr.mxu0 0.0
        %374 = vmatpush1.msra.mxu0 0.0
        %375 = vmatprep.subr.mxu0 0.0
        %376 = vmatpush1.msra.mxu0 0.0
        %377 = vmatprep.subr.mxu0 0.0
        %378 = vmatpush1.msra.mxu0 0.0
        %379 = vmatprep.subr.mxu0 0.0
        %380 = vmatpush1.msra.mxu0 0.0
        %381 = vmatprep.subr.mxu0 0.0
        %382 = vmatpush1.msra.mxu0 0.0
        %383 = vmatprep.subr.mxu0 0.0
        %384 = vmatpush1.msra.mxu0 0.0
        %385 = vmatprep.subr.mxu0 0.0
        %386 = vmatpush1.msra.mxu0 0.0
        %387 = vmatprep.subr.mxu0 0.0
        %388 = vmatpush1.msra.mxu0 0.0
        %389 = vmatprep.subr.mxu0 0.0
        %390 = vmatpush1.msra.mxu0 0.0
        %391 = vmatprep.subr.mxu0 0.0
        %392 = vmatpush1.msra.mxu0 0.0
        %393 = vmatprep.subr.mxu0 0.0
        %394 = vmatpush1.msra.mxu0 0.0
        %395 = vmatprep.subr.mxu0 0.0
        %396 = vmatpush1.msra.mxu0 0.0
        %397 = vmatprep.subr.mxu0 0.0
        %398 = vmatpush1.msra.mxu0 0.0
        %399 = vmatprep.mubr.f32.mxu0 0.0
        %400 = vmatmul.mubr.f32.gmra.mrb[0].mxu0 %v223
        %v401 = vpop.f32.mrb[0].mxu0
        %v402 = vadd.f32 %v327, %v401
        %v403 = vpop.f32.mrb[0].mxu0
        %404 = vmatprep.mubr.f32.mxu0 0.0
        %405 = vmatmul.mubr.f32.gmra.mrb[0].mxu0 %v224
        %v406 = vpop.f32.mrb[0].mxu0
        %v407 = vadd.f32 %v332, %v406
        %v408 = vpop.f32.mrb[0].mxu0
        %409 = vdwg.mxu0
        %v410 = vld [vmem:[#allocation2 + $0x9] sm:$0xff]
        %v411 = vld [vmem:[#allocation2 + $0x11] sm:$0xff]
        %s412 = scalar_lea.vmem [#allocation3], 256
        %v413 = vld [vmem:[%s412] sm:$0xff]
        %v414 = vld [vmem:[%s412 + $0x8] sm:$0xff]
        %v415 = vld [vmem:[%s412 + $0x10] sm:$0xff]
        %v416 = vld [vmem:[%s412 + $0x18] sm:$0xff]
        %v417 = vld [vmem:[%s412 + $0x20] sm:$0xff]
        %v418 = vld [vmem:[%s412 + $0x28] sm:$0xff]
        %v419 = vld [vmem:[%s412 + $0x30] sm:$0xff]
        %v420 = vld [vmem:[%s412 + $0x38] sm:$0xff]
        %v421 = vld [vmem:[%s412 + $0x40] sm:$0xff]
        %v422 = vld [vmem:[%s412 + $0x48] sm:$0xff]
        %v423 = vld [vmem:[%s412 + $0x50] sm:$0xff]
        %v424 = vld [vmem:[%s412 + $0x58] sm:$0xff]
        %v425 = vld [vmem:[%s412 + $0x60] sm:$0xff]
        %v426 = vld [vmem:[%s412 + $0x68] sm:$0xff]
        %v427 = vld [vmem:[%s412 + $0x70] sm:$0xff]
        %v428 = vld [vmem:[%s412 + $0x78] sm:$0xff]
        %429 = vmatprep.subr.mxu0 0.0
        %430 = vmatpush1.msra.mxu0 %v413
        %431 = vmatprep.subr.mxu0 0.0
        %432 = vmatpush1.msra.mxu0 %v414
        %433 = vmatprep.subr.mxu0 0.0
        %434 = vmatpush1.msra.mxu0 %v415
        %435 = vmatprep.subr.mxu0 0.0
        %436 = vmatpush1.msra.mxu0 %v416
        %437 = vmatprep.subr.mxu0 0.0
        %438 = vmatpush1.msra.mxu0 %v417
        %439 = vmatprep.subr.mxu0 0.0
        %440 = vmatpush1.msra.mxu0 %v418
        %441 = vmatprep.subr.mxu0 0.0
        %442 = vmatpush1.msra.mxu0 %v419
        %443 = vmatprep.subr.mxu0 0.0
        %444 = vmatpush1.msra.mxu0 %v420
        %445 = vmatprep.subr.mxu0 0.0
        %446 = vmatpush1.msra.mxu0 %v421
        %447 = vmatprep.subr.mxu0 0.0
        %448 = vmatpush1.msra.mxu0 %v422
        %449 = vmatprep.subr.mxu0 0.0
        %450 = vmatpush1.msra.mxu0 %v423
        %451 = vmatprep.subr.mxu0 0.0
        %452 = vmatpush1.msra.mxu0 %v424
        %453 = vmatprep.subr.mxu0 0.0
        %454 = vmatpush1.msra.mxu0 %v425
        %455 = vmatprep.subr.mxu0 0.0
        %456 = vmatpush1.msra.mxu0 %v426
        %457 = vmatprep.subr.mxu0 0.0
        %458 = vmatpush1.msra.mxu0 %v427
        %459 = vmatprep.subr.mxu0 0.0
        %460 = vmatpush1.msra.mxu0 %v428
        %461 = vmatprep.subr.mxu0 0.0
        %462 = vmatpush1.msra.mxu0 0.0
        %463 = vmatprep.subr.mxu0 0.0
        %464 = vmatpush1.msra.mxu0 0.0
        %465 = vmatprep.subr.mxu0 0.0
        %466 = vmatpush1.msra.mxu0 0.0
        %467 = vmatprep.subr.mxu0 0.0
        %468 = vmatpush1.msra.mxu0 0.0
        %469 = vmatprep.subr.mxu0 0.0
        %470 = vmatpush1.msra.mxu0 0.0
        %471 = vmatprep.subr.mxu0 0.0
        %472 = vmatpush1.msra.mxu0 0.0
        %473 = vmatprep.subr.mxu0 0.0
        %474 = vmatpush1.msra.mxu0 0.0
        %475 = vmatprep.subr.mxu0 0.0
        %476 = vmatpush1.msra.mxu0 0.0
        %477 = vmatprep.subr.mxu0 0.0
        %478 = vmatpush1.msra.mxu0 0.0
        %479 = vmatprep.subr.mxu0 0.0
        %480 = vmatpush1.msra.mxu0 0.0
        %481 = vmatprep.subr.mxu0 0.0
        %482 = vmatpush1.msra.mxu0 0.0
        %483 = vmatprep.subr.mxu0 0.0
        %484 = vmatpush1.msra.mxu0 0.0
        %485 = vmatprep.subr.mxu0 0.0
        %486 = vmatpush1.msra.mxu0 0.0
        %487 = vmatprep.subr.mxu0 0.0
        %488 = vmatpush1.msra.mxu0 0.0
        %489 = vmatprep.subr.mxu0 0.0
        %490 = vmatpush1.msra.mxu0 0.0
        %491 = vmatprep.subr.mxu0 0.0
        %492 = vmatpush1.msra.mxu0 0.0
        %493 = vmatprep.mubr.f32.mxu0 0.0
        %494 = vmatmul.mubr.f32.gmra.mrb[0].mxu0 %v410
        %v495 = vpop.f32.mrb[0].mxu0
        %v496 = vadd.f32 0.0, %v495
        %v497 = vpop.f32.mrb[0].mxu0
        %498 = vmatprep.mubr.f32.mxu0 0.0
        %499 = vmatmul.mubr.f32.gmra.mrb[0].mxu0 %v411
        %v500 = vpop.f32.mrb[0].mxu0
        %v501 = vadd.f32 0.0, %v500
        %v502 = vpop.f32.mrb[0].mxu0
        %503 = vdwg.mxu0
        %v504 = vadd.f32 %v402, %v496
        %v505 = vadd.f32 %v407, %v501
        %v506 = vld [vmem:[%s2] sm:$0x1]
        %v508 = vlaneseq
        %v509 = vshrl.u32 %v508, 7
        %v510 = vsub.s32 0, %v509
        %v511 = vrot.slane %v506, %v510
        %v513 = vadd.f32 %v504, %v511
        %v514 = vadd.f32 %v505, %v511
        %v515 = vxor.u32 %v513, 2147483648
        %v516 = vxor.u32 %v514, 2147483648
        %v517 = vmul.f32 %v515, 1.442695
        %v518 = vpow.pop %v517
        %v519 = vmul.f32 %v516, 1.442695
        %v520 = vpow.pop %v519
        %v521 = vadd.f32 %v518, 1.0
        %v522 = vadd.f32 %v520, 1.0
        %v523 = vrcp.pop %v521
        %v524 = vmul.f32 1.0, %v523
        %v525 = vrcp.pop %v522
        %v526 = vmul.f32 1.0, %v525
        %v528 = vlaneseq
        %v529 = vshrl.u32 %v528, 7
        %v530 = vsub.s32 0, %v529
        %v531 = vrot.slane %v222, %v530
        %v533 = vmul.f32 %v531, %v524
        %v534 = vmul.f32 %v531, %v526
        %v535 = vsub.f32 1.0, %v222
        %v537 = vlaneseq
        %v538 = vshrl.u32 %v537, 7
        %v539 = vsub.s32 0, %v538
        %v540 = vrot.slane %v535, %v539
        %v542 = vadd.f32 %v533, %v540
        %v543 = vadd.f32 %v534, %v540
        %v544 = vmul.f32 %v513, %v542
        %v545 = vmul.f32 %v514, %v543
        %546 = vst [vmem:[%s214] sm:$0xff] %v544
        %547 = vst [vmem:[%s214 + $0x8] sm:$0xff] %v545
        %s548 = smul.u32 2, %s16
        %p549 = scmp.lt.s32.totalorder %s548, 3
        %s550 = scalar_select %p549, %s548, 3
        %s551 = smul.addr %s550, 8
        %s552 = scalar_lea.vmem %s4, %s551
        // Predicated region
        $region41: #{rcsosa_forward.6} parent=35 // pred_check
          %p553 = pneg %p123
        $region42: #{rcsosa_forward.6} parent=35 // pred_check_branch
          %555 = sbr.rel (%p553) target = $region44
        $region43: #{rcsosa_forward.6} parent=35 // pred_region
          %s556 = smul.u32 2, %s16
        $region44: #{rcsosa_forward.6} parent=35 // pred_fallthru
          _
      $region36: #{rcsosa_forward.6} parent=5 // pred_fallthru
        _
      %p557 = scmp.le.s32.totalorder 2, %s11
      // Predicated region
      $region45: #{rcsosa_forward.6} parent=5 // pred_check
        %p558 = pneg %p557
      $region46: #{rcsosa_forward.6} parent=5 // pred_check_branch
        %560 = sbr.rel (%p558) target = $region48
      $region47: #{rcsosa_forward.6} parent=5 // pred_region
        %s561 = ssub.s32 %s11, 2
        // Predicated region
        $region49: #{rcsosa_forward.6} parent=47 // pred_check
          %p562 = pneg %p129
        $region50: #{rcsosa_forward.6} parent=47 // pred_check_branch
          %564 = sbr.rel (%p562) target = $region52
        $region51: #{rcsosa_forward.6} parent=47 // pred_region
          %s565 = smul.u32 2, %s17
          %p566 = scmp.lt.s32.totalorder %s565, 3
          %s567 = scalar_select %p566, %s565, 3
          %s568 = smul.addr %s567, 8
          %s569 = scalar_lea.vmem %s4, %s568
        $region52: #{rcsosa_forward.6} parent=47 // pred_fallthru
          _
      $region48: #{rcsosa_forward.6} parent=5 // pred_fallthru
        _
    $region6: #{rcsosa_forward.6} parent=1 // loop_footer
      %s15 = sadd.s32 1, %s11
    $region7: #{rcsosa_forward.6} parent=1 // loop_footer_branch
      %10 = sbr.rel target = $region3
    $region8: #{rcsosa_forward.6} parent=1 // loop_exit
      _
    %570 = vsyncpa [#allocation4], 1
    %s571 = scalar_lea.sflag [#allocation4], 1
    %572 = vsyncpa %s571, 1

// kernel: rcsosa_forward.4
$region0: #{rcsosa_forward.4}
  #allocation0 [shape = 'u32[]', space=smem, size = 0x4, offset = 0x4, fixed_abs, tag = 'smem constant byte address 0x4 - core index']
  #allocation1 [shape = 'u32[144,128]{1,0:T(1,128)}', space=vmem, size = 0x12000, scoped, tag = 'internal scratch']
  #allocation2 [shape = 'f32[32,256]{1,0:T(8,128)}', space=vmem, size = 0x8000, scoped, tag = 'scratch operand']
  %s0 = inlined_call_operand.vmem [shape: f32[32,256], index: 0, kind: input, shape index: {}]
  %s1 = inlined_call_operand.vmem [shape: f32[3,256,128], index: 1, kind: input, shape index: {}]
  %s2 = inlined_call_operand.vmem [shape: f32[1,128], index: 2, kind: input, shape index: {}]
  %s3 = inlined_call_operand.vmem [shape: f32[1,128], index: 3, kind: input, shape index: {}]
  %s4 = inlined_call_operand.vmem [shape: f32[32,128], index: 4, kind: output, shape index: {}]
  %s5 = sld [smem:[#allocation0]]
  $region49: #{rcsosa_forward.4} parent=0
    _
  %s7 = ssub.s32 1, %s5
  %s8 = scalar_select 0, %s7, %s5
  loop: start=0, step=1, limit=4
  $region2: #{rcsosa_forward.4} parent=0 // loop_pre_header
    _
  $region3: #{rcsosa_forward.4} parent=0 // loop_header
    %s10 = sphi 0, %s14
    %p11 = scmp.ge.s32.totalorder %s10, 4
    %s20 = sphi 0, %s22
    %s23 = sphi 0, %s20
    %s24 = sphi 0, %s23
    %s40 = sphi 0, %s24
    %s44 = sphi 0, %s44
    %s46 = sphi 0, %s44
    %s47 = sphi 0, %s46
    %s61 = sphi 0, %s47
    %s65 = sphi 0, %s65
    %s67 = sphi 0, %s65
    %s68 = sphi 0, %s67
    %s82 = sphi 0, %s68
    %s86 = sphi 0, %s86
    %s88 = sphi 0, %s86
    %s89 = sphi 0, %s88
    %s103 = sphi 0, %s89
    %s109 = sphi 0, %s111
    %s112 = sphi 0, %s109
    %s113 = sphi 0, %s112
    %s129 = sphi 0, %s113
  $region4: #{rcsosa_forward.4} parent=0 // loop_header_branch
    %13 = sbr.rel (%p11) target = $region8
  $region5: #{rcsosa_forward.4} parent=0 // loop_body
    %s15 = ssub.s32 %s10, 1
    %s16 = ssub.s32 %s10, 2
    %s17 = sadd.s32 %s10, 1
    %s18 = ssub.s32 %s10, %s17
    %p19 = scmp.eq.s32.totalorder %s18, 0
    %s21 = sadd.s32 %s20, 1
    %s22 = scalar_select %p19, %s20, %s21
    %p25 = pneg %p19
    %p26 = scmp.eq.s32.totalorder %s10, 1
    %p27 = por %p25, %p26
    %p28 = scmp.ne.s32.totalorder %s20, %s23
    %p29 = scmp.eq.s32.totalorder %s10, 0
    %p30 = por %p28, %p29
    %p31 = scmp.ne.s32.totalorder %s20, %s23
    %p32 = scmp.eq.s32.totalorder %s15, 1
    %p33 = por %p31, %p32
    %p34 = scmp.ne.s32.totalorder %s23, %s24
    %p35 = scmp.eq.s32.totalorder %s15, 0
    %p36 = por %p34, %p35
    %p37 = scmp.ne.s32.totalorder %s23, %s24
    %p38 = scmp.eq.s32.totalorder %s16, 1
    %p39 = por %p37, %p38
    %p41 = scmp.ne.s32.totalorder %s24, %s40
    %p42 = scmp.eq.s32.totalorder %s16, 0
    %p43 = por %p41, %p42
    %s45 = sadd.s32 %s44, 1
    %p48 = scmp.eq.s32.totalorder %s10, 1
    %p49 = scmp.ne.s32.totalorder %s44, %s46
    %p50 = scmp.eq.s32.totalorder %s10, 0
    %p51 = por %p49, %p50
    %p52 = scmp.ne.s32.totalorder %s44, %s46
    %p53 = scmp.eq.s32.totalorder %s15, 1
    %p54 = por %p52, %p53
    %p55 = scmp.ne.s32.totalorder %s46, %s47
    %p56 = scmp.eq.s32.totalorder %s15, 0
    %p57 = por %p55, %p56
    %p58 = scmp.ne.s32.totalorder %s46, %s47
    %p59 = scmp.eq.s32.totalorder %s16, 1
    %p60 = por %p58, %p59
    %p62 = scmp.ne.s32.totalorder %s47, %s61
    %p63 = scmp.eq.s32.totalorder %s16, 0
    %p64 = por %p62, %p63
    %s66 = sadd.s32 %s65, 1
    %p69 = scmp.eq.s32.totalorder %s10, 1
    %p70 = scmp.ne.s32.totalorder %s65, %s67
    %p71 = scmp.eq.s32.totalorder %s10, 0
    %p72 = por %p70, %p71
    %p73 = scmp.ne.s32.totalorder %s65, %s67
    %p74 = scmp.eq.s32.totalorder %s15, 1
    %p75 = por %p73, %p74
    %p76 = scmp.ne.s32.totalorder %s67, %s68
    %p77 = scmp.eq.s32.totalorder %s15, 0
    %p78 = por %p76, %p77
    %p79 = scmp.ne.s32.totalorder %s67, %s68
    %p80 = scmp.eq.s32.totalorder %s16, 1
    %p81 = por %p79, %p80
    %p83 = scmp.ne.s32.totalorder %s68, %s82
    %p84 = scmp.eq.s32.totalorder %s16, 0
    %p85 = por %p83, %p84
    %s87 = sadd.s32 %s86, 1
    %p90 = scmp.eq.s32.totalorder %s10, 1
    %p91 = scmp.ne.s32.totalorder %s86, %s88
    %p92 = scmp.eq.s32.totalorder %s10, 0
    %p93 = por %p91, %p92
    %p94 = scmp.ne.s32.totalorder %s86, %s88
    %p95 = scmp.eq.s32.totalorder %s15, 1
    %p96 = por %p94, %p95
    %p97 = scmp.ne.s32.totalorder %s88, %s89
    %p98 = scmp.eq.s32.totalorder %s15, 0
    %p99 = por %p97, %p98
    %p100 = scmp.ne.s32.totalorder %s88, %s89
    %p101 = scmp.eq.s32.totalorder %s16, 1
    %p102 = por %p100, %p101
    %p104 = scmp.ne.s32.totalorder %s89, %s103
    %p105 = scmp.eq.s32.totalorder %s16, 0
    %p106 = por %p104, %p105
    %s107 = ssub.s32 %s10, %s17
    %p108 = scmp.eq.s32.totalorder %s107, 0
    %s110 = sadd.s32 %s109, 1
    %s111 = scalar_select %p108, %s109, %s110
    %p114 = pneg %p108
    %p115 = scmp.eq.s32.totalorder %s10, 1
    %p116 = por %p114, %p115
    %p117 = scmp.ne.s32.totalorder %s109, %s112
    %p118 = scmp.eq.s32.totalorder %s10, 0
    %p119 = por %p117, %p118
    %p120 = scmp.ne.s32.totalorder %s109, %s112
    %p121 = scmp.eq.s32.totalorder %s15, 1
    %p122 = por %p120, %p121
    %p123 = scmp.ne.s32.totalorder %s112, %s113
    %p124 = scmp.eq.s32.totalorder %s15, 0
    %p125 = por %p123, %p124
    %p126 = scmp.ne.s32.totalorder %s112, %s113
    %p127 = scmp.eq.s32.totalorder %s16, 1
    %p128 = por %p126, %p127
    %p130 = scmp.ne.s32.totalorder %s113, %s129
    %p131 = scmp.eq.s32.totalorder %s16, 0
    %p132 = por %p130, %p131
    %p133 = scmp.le.s32.totalorder 1, %s10
    %p134 = scmp.lt.s32.totalorder %s10, 3
    %p135 = pnand %p133, %p134
    %p136 = pneg %p135
    // Predicated region
    $region9: #{rcsosa_forward.4} parent=5 // pred_check
      _
    $region10: #{rcsosa_forward.4} parent=5 // pred_check_branch
      %138 = sbr.rel (%p135) target = $region12
    $region11: #{rcsosa_forward.4} parent=5 // pred_region
      %s139 = ssub.s32 %s10, 1
      // Predicated region
      $region13: #{rcsosa_forward.4} parent=11 // pred_check
        %p140 = pneg %p57
      $region14: #{rcsosa_forward.4} parent=11 // pred_check_branch
        %142 = sbr.rel (%p140) target = $region16
      $region15: #{rcsosa_forward.4} parent=11 // pred_region
        _
      $region16: #{rcsosa_forward.4} parent=11 // pred_fallthru
        _
      // Predicated region
      $region17: #{rcsosa_forward.4} parent=11 // pred_check
        %p143 = pneg %p78
      $region18: #{rcsosa_forward.4} parent=11 // pred_check_branch
        %145 = sbr.rel (%p143) target = $region20
      $region19: #{rcsosa_forward.4} parent=11 // pred_region
        _
      $region20: #{rcsosa_forward.4} parent=11 // pred_fallthru
        _
      // Predicated region
      $region21: #{rcsosa_forward.4} parent=11 // pred_check
        %p146 = pneg %p99
      $region22: #{rcsosa_forward.4} parent=11 // pred_check_branch
        %148 = sbr.rel (%p146) target = $region24
      $region23: #{rcsosa_forward.4} parent=11 // pred_region
        _
      $region24: #{rcsosa_forward.4} parent=11 // pred_fallthru
        _
    $region12: #{rcsosa_forward.4} parent=5 // pred_fallthru
      _
    %p149 = scmp.lt.s32.totalorder %s10, 2
    // Predicated region
    $region25: #{rcsosa_forward.4} parent=5 // pred_check
      %p150 = pneg %p149
    $region26: #{rcsosa_forward.4} parent=5 // pred_check_branch
      %152 = sbr.rel (%p150) target = $region28
    $region27: #{rcsosa_forward.4} parent=5 // pred_region
      // Predicated region
      $region29: #{rcsosa_forward.4} parent=27 // pred_check
        %p153 = pneg %p30
      $region30: #{rcsosa_forward.4} parent=27 // pred_check_branch
        %155 = sbr.rel (%p153) target = $region32
      $region31: #{rcsosa_forward.4} parent=27 // pred_region
        %s156 = smul.u32 2, %s10
        %p157 = scmp.lt.s32.totalorder %s156, 3
        %s158 = scalar_select %p157, %s156, 3
        %s159 = smul.addr %s158, 2
        %s160 = smul.addr %s159, 8
        %s161 = scalar_lea.vmem %s0, %s160
        %s162 = smul.u32 2, %s10
      $region32: #{rcsosa_forward.4} parent=27 // pred_fallthru
        _
    $region28: #{rcsosa_forward.4} parent=5 // pred_fallthru
      _
    %p163 = scmp.le.s32.totalorder 1, %s10
    %p164 = scmp.lt.s32.totalorder %s10, 3
    %p165 = pnand %p163, %p164
    %p166 = pneg %p165
    // Predicated region
    $region33: #{rcsosa_forward.4} parent=5 // pred_check
      _
    $region34: #{rcsosa_forward.4} parent=5 // pred_check_branch
      %168 = sbr.rel (%p165) target = $region36
    $region35: #{rcsosa_forward.4} parent=5 // pred_region
      %s169 = ssub.s32 %s10, 1
      %s170 = smul.u32 2, %s15
      %p171 = scmp.lt.s32.totalorder %s170, 3
      %s172 = scalar_select %p171, %s170, 3
      %s173 = smul.addr %s172, 2
      %s174 = smul.addr %s173, 8
      %s175 = scalar_lea.vmem %s0, %s174
      %p176 = pneg %p36
      %p177 = pneg %p33
      %p178 = pneg %p57
      %p179 = pneg %p54
      %p180 = pneg %p78
      %p181 = pneg %p75
      %p182 = pneg %p99
      %p183 = pneg %p96
      %p184 = pneg %p125
      %p185 = pneg %p122
      %s186 = smul.u32 2, %s15
      %p187 = scmp.lt.s32.totalorder %s186, 3
      %s188 = scalar_select %p187, %s186, 3
      %s189 = smul.addr %s188, 8
      %s190 = scalar_lea.vmem %s4, %s189
      %s191 = smul.u32 2, %s15
      %p192 = scmp.lt.s32.totalorder %s191, 3
      %s193 = scalar_select %p192, %s191, 3
      %s194 = smul.addr %s193, 2
      %s195 = smul.addr %s194, 8
      %s196 = scalar_lea.vmem %s0, %s195
      %s197 = smul.u32 2, %s15
      %s198 = smul.u32 2, %s15
      %p199 = scmp.lt.s32.totalorder %s198, 3
      %s200 = scalar_select %p199, %s198, 3
      %s201 = smul.addr %s200, 8
      %s202 = scalar_lea.vmem %s4, %s201
      %s203 = smul.u32 2, %s15
      %v204 = vlaneseq
      %vm205 = vcmp.ge.s32.totalorder %v204, 0
      %vm206 = vcmp.lt.s32.totalorder %v204, 256
      %vm207 = vmand %vm205, %vm206
      %s208 = scalar_lea.vmem [#allocation2], 7
      %209 = vst.msk [vmem:[%s208] ss:$8 sm:$0x3] %vm207, 0.0
      %210 = vst.msk [vmem:[%s208] ss:$8 sm:$0x0] %vm207, 0.0
      %s211 = scalar_lea.vmem [#allocation2], 48
      %212 = vst.msk [vmem:[%s211] ss:$8 sm:$0x3] %vm207, 0.0
      %213 = vst.msk [vmem:[%s211] ss:$8 sm:$0x0] %vm207, 0.0
      %v214 = vld [vmem:[%s196] sm:$0xff]
      %v215 = vld [vmem:[%s196 + $0x8] sm:$0xff]
      %v216 = vld [vmem:[%s196 + $0x10] sm:$0xff]
      %v217 = vld [vmem:[%s196 + $0x18] sm:$0xff]
      %218 = vst [vmem:[#allocation2 + $0x10] sm:$0xff] %v214
      %219 = vst [vmem:[#allocation2 + $0x18] sm:$0xff] %v215
      %220 = vst [vmem:[#allocation2 + $0x20] sm:$0xff] %v216
      %221 = vst [vmem:[#allocation2 + $0x28] sm:$0xff] %v217
      %v222 = vld [vmem:[%s3] sm:$0x1]
      %v223 = vld [vmem:[#allocation2] sm:$0x80]
      %v224 = vld [vmem:[#allocation2 + $0x8] sm:$0x80]
      %v225 = vld [vmem:[#allocation2 + $0x10] sm:$0xff]
      %v226 = vld [vmem:[#allocation2 + $0x18] sm:$0xff]
      %v227 = vld [vmem:[#allocation2 + $0x20] sm:$0x7f]
      %v228 = vld [vmem:[#allocation2 + $0x28] sm:$0x7f]
      %v229 = vld [vmem:[%s1] sm:$0xff]
      %v230 = vld [vmem:[%s1 + $0x8] sm:$0xff]
      %v231 = vld [vmem:[%s1 + $0x10] sm:$0xff]
      %v232 = vld [vmem:[%s1 + $0x18] sm:$0xff]
      %v233 = vld [vmem:[%s1 + $0x20] sm:$0xff]
      %v234 = vld [vmem:[%s1 + $0x28] sm:$0xff]
      %v235 = vld [vmem:[%s1 + $0x30] sm:$0xff]
      %v236 = vld [vmem:[%s1 + $0x38] sm:$0xff]
      %v237 = vld [vmem:[%s1 + $0x40] sm:$0xff]
      %v238 = vld [vmem:[%s1 + $0x48] sm:$0xff]
      %v239 = vld [vmem:[%s1 + $0x50] sm:$0xff]
      %v240 = vld [vmem:[%s1 + $0x58] sm:$0xff]
      %v241 = vld [vmem:[%s1 + $0x60] sm:$0xff]
      %v242 = vld [vmem:[%s1 + $0x68] sm:$0xff]
      %v243 = vld [vmem:[%s1 + $0x70] sm:$0xff]
      %v244 = vld [vmem:[%s1 + $0x78] sm:$0xff]
      %v245 = vld [vmem:[%s1 + $0x80] sm:$0xff]
      %v246 = vld [vmem:[%s1 + $0x88] sm:$0xff]
      %v247 = vld [vmem:[%s1 + $0x90] sm:$0xff]
      %v248 = vld [vmem:[%s1 + $0x98] sm:$0xff]
      %v249 = vld [vmem:[%s1 + $0xa0] sm:$0xff]
      %v250 = vld [vmem:[%s1 + $0xa8] sm:$0xff]
      %v251 = vld [vmem:[%s1 + $0xb0] sm:$0xff]
      %v252 = vld [vmem:[%s1 + $0xb8] sm:$0xff]
      %v253 = vld [vmem:[%s1 + $0xc0] sm:$0xff]
      %v254 = vld [vmem:[%s1 + $0xc8] sm:$0xff]
      %v255 = vld [vmem:[%s1 + $0xd0] sm:$0xff]
      %v256 = vld [vmem:[%s1 + $0xd8] sm:$0xff]
      %v257 = vld [vmem:[%s1 + $0xe0] sm:$0xff]
      %v258 = vld [vmem:[%s1 + $0xe8] sm:$0xff]
      %v259 = vld [vmem:[%s1 + $0xf0] sm:$0xff]
      %v260 = vld [vmem:[%s1 + $0xf8] sm:$0xff]
      %v261 = vld [vmem:[#allocation2 + $0x20] sm:$0xff]
      %v262 = vld [vmem:[#allocation2 + $0x28] sm:$0xff]
      %s263 = scalar_lea.vmem %s1, 256
      %v264 = vld [vmem:[%s263] sm:$0xff]
      %v265 = vld [vmem:[%s263 + $0x8] sm:$0xff]
      %v266 = vld [vmem:[%s263 + $0x10] sm:$0xff]
      %v267 = vld [vmem:[%s263 + $0x18] sm:$0xff]
      %v268 = vld [vmem:[%s263 + $0x20] sm:$0xff]
      %v269 = vld [vmem:[%s263 + $0x28] sm:$0xff]
      %v270 = vld [vmem:[%s263 + $0x30] sm:$0xff]
      %v271 = vld [vmem:[%s263 + $0x38] sm:$0xff]
      %v272 = vld [vmem:[%s263 + $0x40] sm:$0xff]
      %v273 = vld [vmem:[%s263 + $0x48] sm:$0xff]
      %v274 = vld [vmem:[%s263 + $0x50] sm:$0xff]
      %v275 = vld [vmem:[%s263 + $0x58] sm:$0xff]
      %v276 = vld [vmem:[%s263 + $0x60] sm:$0xff]
      %v277 = vld [vmem:[%s263 + $0x68] sm:$0xff]
      %v278 = vld [vmem:[%s263 + $0x70] sm:$0xff]
      %v279 = vld [vmem:[%s263 + $0x78] sm:$0xff]
      %v280 = vld [vmem:[%s263 + $0x80] sm:$0xff]
      %v281 = vld [vmem:[%s263 + $0x88] sm:$0xff]
      %v282 = vld [vmem:[%s263 + $0x90] sm:$0xff]
      %v283 = vld [vmem:[%s263 + $0x98] sm:$0xff]
      %v284 = vld [vmem:[%s263 + $0xa0] sm:$0xff]
      %v285 = vld [vmem:[%s263 + $0xa8] sm:$0xff]
      %v286 = vld [vmem:[%s263 + $0xb0] sm:$0xff]
      %v287 = vld [vmem:[%s263 + $0xb8] sm:$0xff]
      %v288 = vld [vmem:[%s263 + $0xc0] sm:$0xff]
      %v289 = vld [vmem:[%s263 + $0xc8] sm:$0xff]
      %v290 = vld [vmem:[%s263 + $0xd0] sm:$0xff]
      %v291 = vld [vmem:[%s263 + $0xd8] sm:$0xff]
      %v292 = vld [vmem:[%s263 + $0xe0] sm:$0xff]
      %v293 = vld [vmem:[%s263 + $0xe8] sm:$0xff]
      %v294 = vld [vmem:[%s263 + $0xf0] sm:$0xff]
      %v295 = vld [vmem:[%s263 + $0xf8] sm:$0xff]
      %296 = vmatprep.subr.mxu0 0.0
      %297 = vmatpush1.msra.mxu0 %v264
      %298 = vmatprep.subr.mxu0 0.0
      %299 = vmatpush1.msra.mxu0 %v265
      %300 = vmatprep.subr.mxu0 0.0
      %301 = vmatpush1.msra.mxu0 %v266
      %302 = vmatprep.subr.mxu0 0.0
      %303 = vmatpush1.msra.mxu0 %v267
      %304 = vmatprep.subr.mxu0 0.0
      %305 = vmatpush1.msra.mxu0 %v268
      %306 = vmatprep.subr.mxu0 0.0
      %307 = vmatpush1.msra.mxu0 %v269
      %308 = vmatprep.subr.mxu0 0.0
      %309 = vmatpush1.msra.mxu0 %v270
      %310 = vmatprep.subr.mxu0 0.0
      %311 = vmatpush1.msra.mxu0 %v271
      %312 = vmatprep.subr.mxu0 0.0
      %313 = vmatpush1.msra.mxu0 %v272
      %314 = vmatprep.subr.mxu0 0.0
      %315 = vmatpush1.msra.mxu0 %v273
      %316 = vmatprep.subr.mxu0 0.0
      %317 = vmatpush1.msra.mxu0 %v274
      %318 = vmatprep.subr.mxu0 0.0
      %319 = vmatpush1.msra.mxu0 %v275
      %320 = vmatprep.subr.mxu0 0.0
      %321 = vmatpush1.msra.mxu0 %v276
      %322 = vmatprep.subr.mxu0 0.0
      %323 = vmatpush1.msra.mxu0 %v277
      %324 = vmatprep.subr.mxu0 0.0
      %325 = vmatpush1.msra.mxu0 %v278
      %326 = vmatprep.subr.mxu0 0.0
      %327 = vmatpush1.msra.mxu0 %v279
      %328 = vmatprep.subr.mxu0 0.0
      %329 = vmatpush1.msra.mxu0 %v280
      %330 = vmatprep.subr.mxu0 0.0
      %331 = vmatpush1.msra.mxu0 %v281
      %332 = vmatprep.subr.mxu0 0.0
      %333 = vmatpush1.msra.mxu0 %v282
      %334 = vmatprep.subr.mxu0 0.0
      %335 = vmatpush1.msra.mxu0 %v283
      %336 = vmatprep.subr.mxu0 0.0
      %337 = vmatpush1.msra.mxu0 %v284
      %338 = vmatprep.subr.mxu0 0.0
      %339 = vmatpush1.msra.mxu0 %v285
      %340 = vmatprep.subr.mxu0 0.0
      %341 = vmatpush1.msra.mxu0 %v286
      %342 = vmatprep.subr.mxu0 0.0
      %343 = vmatpush1.msra.mxu0 %v287
      %344 = vmatprep.subr.mxu0 0.0
      %345 = vmatpush1.msra.mxu0 %v288
      %346 = vmatprep.subr.mxu0 0.0
      %347 = vmatpush1.msra.mxu0 %v289
      %348 = vmatprep.subr.mxu0 0.0
      %349 = vmatpush1.msra.mxu0 %v290
      %350 = vmatprep.subr.mxu0 0.0
      %351 = vmatpush1.msra.mxu0 %v291
      %352 = vmatprep.subr.mxu0 0.0
      %353 = vmatpush1.msra.mxu0 %v292
      %354 = vmatprep.subr.mxu0 0.0
      %355 = vmatpush1.msra.mxu0 %v293
      %356 = vmatprep.subr.mxu0 0.0
      %357 = vmatpush1.msra.mxu0 %v294
      %358 = vmatprep.subr.mxu0 0.0
      %359 = vmatpush1.msra.mxu0 %v295
      %360 = vmatprep.mubr.f32.mxu0 %v226
      %361 = vmatmul.mubr.f32.gmra.mrb[0].mxu0 %v225
      %v362 = vpop.f32.mrb[0].mxu0
      %v363 = vadd.f32 0.0, %v362
      %v364 = vpop.f32.mrb[0].mxu0
      %365 = vmatprep.mubr.f32.mxu0 %v262
      %366 = vmatmul.mubr.f32.gmra.mrb[0].mxu0 %v261
      %v367 = vpop.f32.mrb[0].mxu0
      %v368 = vadd.f32 0.0, %v367
      %v369 = vpop.f32.mrb[0].mxu0
      %370 = vdwg.mxu0
      %vm377 = vcmask 1040384
      %v378 = vrot.slane %v223, 7
      %v379 = vrot.slane %v225, 7
      %v380 = vsel %vm377, %v378, %v379
      %v381 = vrot.slane %v224, 7
      %v382 = vrot.slane %v226, 7
      %v383 = vsel %vm377, %v381, %v382
      %v384 = vrot.slane %v227, 7
      %v385 = vsel %vm377, %v379, %v384
      %v386 = vrot.slane %v228, 7
      %v387 = vsel %vm377, %v382, %v386
      %392 = vmatprep.subr.mxu0 0.0
      %393 = vmatpush1.msra.mxu0 %v229
      %394 = vmatprep.subr.mxu0 0.0
      %395 = vmatpush1.msra.mxu0 %v230
      %396 = vmatprep.subr.mxu0 0.0
      %397 = vmatpush1.msra.mxu0 %v231
      %398 = vmatprep.subr.mxu0 0.0
      %399 = vmatpush1.msra.mxu0 %v232
      %400 = vmatprep.subr.mxu0 0.0
      %401 = vmatpush1.msra.mxu0 %v233
      %402 = vmatprep.subr.mxu0 0.0
      %403 = vmatpush1.msra.mxu0 %v234
      %404 = vmatprep.subr.mxu0 0.0
      %405 = vmatpush1.msra.mxu0 %v235
      %406 = vmatprep.subr.mxu0 0.0
      %407 = vmatpush1.msra.mxu0 %v236
      %408 = vmatprep.subr.mxu0 0.0
      %409 = vmatpush1.msra.mxu0 %v237
      %410 = vmatprep.subr.mxu0 0.0
      %411 = vmatpush1.msra.mxu0 %v238
      %412 = vmatprep.subr.mxu0 0.0
      %413 = vmatpush1.msra.mxu0 %v239
      %414 = vmatprep.subr.mxu0 0.0
      %415 = vmatpush1.msra.mxu0 %v240
      %416 = vmatprep.subr.mxu0 0.0
      %417 = vmatpush1.msra.mxu0 %v241
      %418 = vmatprep.subr.mxu0 0.0
      %419 = vmatpush1.msra.mxu0 %v242
      %420 = vmatprep.subr.mxu0 0.0
      %421 = vmatpush1.msra.mxu0 %v243
      %422 = vmatprep.subr.mxu0 0.0
      %423 = vmatpush1.msra.mxu0 %v244
      %424 = vmatprep.subr.mxu0 0.0
      %425 = vmatpush1.msra.mxu0 %v245
      %426 = vmatprep.subr.mxu0 0.0
      %427 = vmatpush1.msra.mxu0 %v246
      %428 = vmatprep.subr.mxu0 0.0
      %429 = vmatpush1.msra.mxu0 %v247
      %430 = vmatprep.subr.mxu0 0.0
      %431 = vmatpush1.msra.mxu0 %v248
      %432 = vmatprep.subr.mxu0 0.0
      %433 = vmatpush1.msra.mxu0 %v249
      %434 = vmatprep.subr.mxu0 0.0
      %435 = vmatpush1.msra.mxu0 %v250
      %436 = vmatprep.subr.mxu0 0.0
      %437 = vmatpush1.msra.mxu0 %v251
      %438 = vmatprep.subr.mxu0 0.0
      %439 = vmatpush1.msra.mxu0 %v252
      %440 = vmatprep.subr.mxu0 0.0
      %441 = vmatpush1.msra.mxu0 %v253
      %442 = vmatprep.subr.mxu0 0.0
      %443 = vmatpush1.msra.mxu0 %v254
      %444 = vmatprep.subr.mxu0 0.0
      %445 = vmatpush1.msra.mxu0 %v255
      %446 = vmatprep.subr.mxu0 0.0
      %447 = vmatpush1.msra.mxu0 %v256
      %448 = vmatprep.subr.mxu0 0.0
      %449 = vmatpush1.msra.mxu0 %v257
      %450 = vmatprep.subr.mxu0 0.0
      %451 = vmatpush1.msra.mxu0 %v258
      %452 = vmatprep.subr.mxu0 0.0
      %453 = vmatpush1.msra.mxu0 %v259
      %454 = vmatprep.subr.mxu0 0.0
      %455 = vmatpush1.msra.mxu0 %v260
      %456 = vmatprep.mubr.f32.mxu0 %v383
      %457 = vmatmul.mubr.f32.gmra.mrb[0].mxu0 %v380
      %v458 = vpop.f32.mrb[0].mxu0
      %v459 = vadd.f32 %v363, %v458
      %v460 = vpop.f32.mrb[0].mxu0
      %461 = vmatprep.mubr.f32.mxu0 %v387
      %462 = vmatmul.mubr.f32.gmra.mrb[0].mxu0 %v385
      %v463 = vpop.f32.mrb[0].mxu0
      %v464 = vadd.f32 %v368, %v463
      %v465 = vpop.f32.mrb[0].mxu0
      %466 = vdwg.mxu0
      %v467 = vld [vmem:[#allocation2 + $0x10] sm:$0xfe]
      %v468 = vld [vmem:[#allocation2 + $0x18] sm:$0xfe]
      %v469 = vld [vmem:[#allocation2 + $0x20] sm:$0xff]
      %v470 = vld [vmem:[#allocation2 + $0x28] sm:$0xff]
      %v471 = vld [vmem:[#allocation2 + $0x30] sm:$0x1]
      %v472 = vld [vmem:[#allocation2 + $0x38] sm:$0x1]
      %s473 = scalar_lea.vmem %s1, 512
      %v474 = vld [vmem:[%s473] sm:$0xff]
      %v475 = vld [vmem:[%s473 + $0x8] sm:$0xff]
      %v476 = vld [vmem:[%s473 + $0x10] sm:$0xff]
      %v477 = vld [vmem:[%s473 + $0x18] sm:$0xff]
      %v478 = vld [vmem:[%s473 + $0x20] sm:$0xff]
      %v479 = vld [vmem:[%s473 + $0x28] sm:$0xff]
      %v480 = vld [vmem:[%s473 + $0x30] sm:$0xff]
      %v481 = vld [vmem:[%s473 + $0x38] sm:$0xff]
      %v482 = vld [vmem:[%s473 + $0x40] sm:$0xff]
      %v483 = vld [vmem:[%s473 + $0x48] sm:$0xff]
      %v484 = vld [vmem:[%s473 + $0x50] sm:$0xff]
      %v485 = vld [vmem:[%s473 + $0x58] sm:$0xff]
      %v486 = vld [vmem:[%s473 + $0x60] sm:$0xff]
      %v487 = vld [vmem:[%s473 + $0x68] sm:$0xff]
      %v488 = vld [vmem:[%s473 + $0x70] sm:$0xff]
      %v489 = vld [vmem:[%s473 + $0x78] sm:$0xff]
      %v490 = vld [vmem:[%s473 + $0x80] sm:$0xff]
      %v491 = vld [vmem:[%s473 + $0x88] sm:$0xff]
      %v492 = vld [vmem:[%s473 + $0x90] sm:$0xff]
      %v493 = vld [vmem:[%s473 + $0x98] sm:$0xff]
      %v494 = vld [vmem:[%s473 + $0xa0] sm:$0xff]
      %v495 = vld [vmem:[%s473 + $0xa8] sm:$0xff]
      %v496 = vld [vmem:[%s473 + $0xb0] sm:$0xff]
      %v497 = vld [vmem:[%s473 + $0xb8] sm:$0xff]
      %v498 = vld [vmem:[%s473 + $0xc0] sm:$0xff]
      %v499 = vld [vmem:[%s473 + $0xc8] sm:$0xff]
      %v500 = vld [vmem:[%s473 + $0xd0] sm:$0xff]
      %v501 = vld [vmem:[%s473 + $0xd8] sm:$0xff]
      %v502 = vld [vmem:[%s473 + $0xe0] sm:$0xff]
      %v503 = vld [vmem:[%s473 + $0xe8] sm:$0xff]
      %v504 = vld [vmem:[%s473 + $0xf0] sm:$0xff]
      %v505 = vld [vmem:[%s473 + $0xf8] sm:$0xff]
      %vm512 = vcmask 1046528
      %v513 = vrot.slane %v467, 1
      %v514 = vrot.slane %v469, 1
      %v515 = vsel %vm512, %v513, %v514
      %v516 = vrot.slane %v468, 1
      %v517 = vrot.slane %v470, 1
      %v518 = vsel %vm512, %v516, %v517
      %v519 = vrot.slane %v471, 1
      %v520 = vsel %vm512, %v514, %v519
      %v521 = vrot.slane %v472, 1
      %v522 = vsel %vm512, %v517, %v521
      %527 = vmatprep.subr.mxu0 0.0
      %528 = vmatpush1.msra.mxu0 %v474
      %529 = vmatprep.subr.mxu0 0.0
      %530 = vmatpush1.msra.mxu0 %v475
      %531 = vmatprep.subr.mxu0 0.0
      %532 = vmatpush1.msra.mxu0 %v476
      %533 = vmatprep.subr.mxu0 0.0
      %534 = vmatpush1.msra.mxu0 %v477
      %535 = vmatprep.subr.mxu0 0.0
      %536 = vmatpush1.msra.mxu0 %v478
      %537 = vmatprep.subr.mxu0 0.0
      %538 = vmatpush1.msra.mxu0 %v479
      %539 = vmatprep.subr.mxu0 0.0
      %540 = vmatpush1.msra.mxu0 %v480
      %541 = vmatprep.subr.mxu0 0.0
      %542 = vmatpush1.msra.mxu0 %v481
      %543 = vmatprep.subr.mxu0 0.0
      %544 = vmatpush1.msra.mxu0 %v482
      %545 = vmatprep.subr.mxu0 0.0
      %546 = vmatpush1.msra.mxu0 %v483
      %547 = vmatprep.subr.mxu0 0.0
      %548 = vmatpush1.msra.mxu0 %v484
      %549 = vmatprep.subr.mxu0 0.0
      %550 = vmatpush1.msra.mxu0 %v485
      %551 = vmatprep.subr.mxu0 0.0
      %552 = vmatpush1.msra.mxu0 %v486
      %553 = vmatprep.subr.mxu0 0.0
      %554 = vmatpush1.msra.mxu0 %v487
      %555 = vmatprep.subr.mxu0 0.0
      %556 = vmatpush1.msra.mxu0 %v488
      %557 = vmatprep.subr.mxu0 0.0
      %558 = vmatpush1.msra.mxu0 %v489
      %559 = vmatprep.subr.mxu0 0.0
      %560 = vmatpush1.msra.mxu0 %v490
      %561 = vmatprep.subr.mxu0 0.0
      %562 = vmatpush1.msra.mxu0 %v491
      %563 = vmatprep.subr.mxu0 0.0
      %564 = vmatpush1.msra.mxu0 %v492
      %565 = vmatprep.subr.mxu0 0.0
      %566 = vmatpush1.msra.mxu0 %v493
      %567 = vmatprep.subr.mxu0 0.0
      %568 = vmatpush1.msra.mxu0 %v494
      %569 = vmatprep.subr.mxu0 0.0
      %570 = vmatpush1.msra.mxu0 %v495
      %571 = vmatprep.subr.mxu0 0.0
      %572 = vmatpush1.msra.mxu0 %v496
      %573 = vmatprep.subr.mxu0 0.0
      %574 = vmatpush1.msra.mxu0 %v497
      %575 = vmatprep.subr.mxu0 0.0
      %576 = vmatpush1.msra.mxu0 %v498
      %577 = vmatprep.subr.mxu0 0.0
      %578 = vmatpush1.msra.mxu0 %v499
      %579 = vmatprep.subr.mxu0 0.0
      %580 = vmatpush1.msra.mxu0 %v500
      %581 = vmatprep.subr.mxu0 0.0
      %582 = vmatpush1.msra.mxu0 %v501
      %583 = vmatprep.subr.mxu0 0.0
      %584 = vmatpush1.msra.mxu0 %v502
      %585 = vmatprep.subr.mxu0 0.0
      %586 = vmatpush1.msra.mxu0 %v503
      %587 = vmatprep.subr.mxu0 0.0
      %588 = vmatpush1.msra.mxu0 %v504
      %589 = vmatprep.subr.mxu0 0.0
      %590 = vmatpush1.msra.mxu0 %v505
      %591 = vmatprep.mubr.f32.mxu0 %v518
      %592 = vmatmul.mubr.f32.gmra.mrb[0].mxu0 %v515
      %v593 = vpop.f32.mrb[0].mxu0
      %v594 = vadd.f32 0.0, %v593
      %v595 = vpop.f32.mrb[0].mxu0
      %596 = vmatprep.mubr.f32.mxu0 %v522
      %597 = vmatmul.mubr.f32.gmra.mrb[0].mxu0 %v520
      %v598 = vpop.f32.mrb[0].mxu0
      %v599 = vadd.f32 0.0, %v598
      %v600 = vpop.f32.mrb[0].mxu0
      %601 = vdwg.mxu0
      %v602 = vadd.f32 %v459, %v594
      %v603 = vadd.f32 %v464, %v599
      %v604 = vld [vmem:[%s2] sm:$0x1]
      %v606 = vlaneseq
      %v607 = vshrl.u32 %v606, 7
      %v608 = vsub.s32 0, %v607
      %v609 = vrot.slane %v604, %v608
      %v611 = vadd.f32 %v602, %v609
      %v612 = vadd.f32 %v603, %v609
      %v613 = vxor.u32 %v611, 2147483648
      %v614 = vxor.u32 %v612, 2147483648
      %v615 = vmul.f32 %v613, 1.442695
      %v616 = vpow.pop %v615
      %v617 = vmul.f32 %v614, 1.442695
      %v618 = vpow.pop %v617
      %v619 = vadd.f32 %v616, 1.0
      %v620 = vadd.f32 %v618, 1.0
      %v621 = vrcp.pop %v619
      %v622 = vmul.f32 1.0, %v621
      %v623 = vrcp.pop %v620
      %v624 = vmul.f32 1.0, %v623
      %v626 = vlaneseq
      %v627 = vshrl.u32 %v626, 7
      %v628 = vsub.s32 0, %v627
      %v629 = vrot.slane %v222, %v628
      %v631 = vmul.f32 %v629, %v622
      %v632 = vmul.f32 %v629, %v624
      %v633 = vsub.f32 1.0, %v222
      %v635 = vlaneseq
      %v636 = vshrl.u32 %v635, 7
      %v637 = vsub.s32 0, %v636
      %v638 = vrot.slane %v633, %v637
      %v640 = vadd.f32 %v631, %v638
      %v641 = vadd.f32 %v632, %v638
      %v642 = vmul.f32 %v611, %v640
      %v643 = vmul.f32 %v612, %v641
      %644 = vst [vmem:[%s202] sm:$0xff] %v642
      %645 = vst [vmem:[%s202 + $0x8] sm:$0xff] %v643
      %s646 = smul.u32 2, %s15
      %p647 = scmp.lt.s32.totalorder %s646, 3
      %s648 = scalar_select %p647, %s646, 3
      %s649 = smul.addr %s648, 8
      %s650 = scalar_lea.vmem %s4, %s649
      // Predicated region
      $region37: #{rcsosa_forward.4} parent=35 // pred_check
        %p651 = pneg %p122
      $region38: #{rcsosa_forward.4} parent=35 // pred_check_branch
        %653 = sbr.rel (%p651) target = $region40
      $region39: #{rcsosa_forward.4} parent=35 // pred_region
        %s654 = smul.u32 2, %s15
      $region40: #{rcsosa_forward.4} parent=35 // pred_fallthru
        _
    $region36: #{rcsosa_forward.4} parent=5 // pred_fallthru
      _
    %p655 = scmp.le.s32.totalorder 2, %s10
    // Predicated region
    $region41: #{rcsosa_forward.4} parent=5 // pred_check
      %p656 = pneg %p655
    $region42: #{rcsosa_forward.4} parent=5 // pred_check_branch
      %658 = sbr.rel (%p656) target = $region44
    $region43: #{rcsosa_forward.4} parent=5 // pred_region
      %s659 = ssub.s32 %s10, 2
      // Predicated region
      $region45: #{rcsosa_forward.4} parent=43 // pred_check
        %p660 = pneg %p128
      $region46: #{rcsosa_forward.4} parent=43 // pred_check_branch
        %662 = sbr.rel (%p660) target = $region48
      $region47: #{rcsosa_forward.4} parent=43 // pred_region
        %s663 = smul.u32 2, %s16
        %p664 = scmp.lt.s32.totalorder %s663, 3
        %s665 = scalar_select %p664, %s663, 3
        %s666 = smul.addr %s665, 8
        %s667 = scalar_lea.vmem %s4, %s666
      $region48: #{rcsosa_forward.4} parent=43 // pred_fallthru
        _
    $region44: #{rcsosa_forward.4} parent=5 // pred_fallthru
      _
  $region6: #{rcsosa_forward.4} parent=0 // loop_footer
    %s14 = sadd.s32 1, %s10
  $region7: #{rcsosa_forward.4} parent=0 // loop_footer_branch
    %9 = sbr.rel target = $region3
  $region8: #{rcsosa_forward.4} parent=0 // loop_exit
    _

// kernel: rcsosa_forward.7
$region0: #{rcsosa_forward.7}
  #allocation0 [shape = 'u32[]', space=smem, size = 0x4, offset = 0x4, fixed_abs, tag = 'smem constant byte address 0x4 - core index']
  #allocation1 [shape = 'u32[144,128]{1,0:T(1,128)}', space=vmem, size = 0x12000, scoped, tag = 'internal scratch']
  #allocation2 [shape = 'f32[32,384]{1,0:T(8,128)}', space=vmem, size = 0xc000, scoped, tag = 'scratch operand']
  %s0 = inlined_call_operand.vmem [shape: f32[32,128], index: 0, kind: input, shape index: {}]
  %s1 = inlined_call_operand.vmem [shape: f32[32,128], index: 1, kind: input, shape index: {}]
  %s2 = inlined_call_operand.vmem [shape: f32[32,128], index: 2, kind: input, shape index: {}]
  %s3 = inlined_call_operand.vmem [shape: f32[3,128,256], index: 3, kind: input, shape index: {}]
  %s4 = inlined_call_operand.vmem [shape: f32[3,128,256], index: 4, kind: input, shape index: {}]
  %s5 = inlined_call_operand.vmem [shape: f32[3,128,256], index: 5, kind: input, shape index: {}]
  %s6 = inlined_call_operand.vmem [shape: f32[1,256], index: 6, kind: input, shape index: {}]
  %s7 = inlined_call_operand.vmem [shape: f32[256,16], index: 7, kind: input, shape index: {}]
  %s8 = inlined_call_operand.vmem [shape: f32[16,256], index: 8, kind: input, shape index: {}]
  %s9 = inlined_call_operand.vmem [shape: f32[16,8], index: 9, kind: input, shape index: {}]
  %s10 = inlined_call_operand.vmem [shape: f32[1,8], index: 10, kind: input, shape index: {}]
  %s11 = inlined_call_operand.vmem [shape: f32[8,16], index: 11, kind: input, shape index: {}]
  %s12 = inlined_call_operand.vmem [shape: f32[1,16], index: 12, kind: input, shape index: {}]
  %s13 = inlined_call_operand.vmem [shape: f32[32,256], index: 13, kind: output, shape index: {}]
  %s14 = sld [smem:[#allocation0]]
  $region85: #{rcsosa_forward.7} parent=0
    _
  %s16 = ssub.s32 1, %s14
  %s17 = scalar_select 0, %s16, %s14
  loop: start=0, step=1, limit=4
  $region2: #{rcsosa_forward.7} parent=0 // loop_pre_header
    _
  $region3: #{rcsosa_forward.7} parent=0 // loop_header
    %s19 = sphi 0, %s23
    %p20 = scmp.ge.s32.totalorder %s19, 4
    %s29 = sphi 0, %s31
    %s32 = sphi 0, %s29
    %s33 = sphi 0, %s32
    %s49 = sphi 0, %s33
    %s55 = sphi 0, %s57
    %s58 = sphi 0, %s55
    %s59 = sphi 0, %s58
    %s75 = sphi 0, %s59
    %s81 = sphi 0, %s83
    %s84 = sphi 0, %s81
    %s85 = sphi 0, %s84
    %s101 = sphi 0, %s85
    %s105 = sphi 0, %s105
    %s107 = sphi 0, %s105
    %s108 = sphi 0, %s107
    %s122 = sphi 0, %s108
    %s126 = sphi 0, %s126
    %s128 = sphi 0, %s126
    %s129 = sphi 0, %s128
    %s143 = sphi 0, %s129
    %s147 = sphi 0, %s147
    %s149 = sphi 0, %s147
    %s150 = sphi 0, %s149
    %s164 = sphi 0, %s150
    %s168 = sphi 0, %s168
    %s170 = sphi 0, %s168
    %s171 = sphi 0, %s170
    %s185 = sphi 0, %s171
    %s189 = sphi 0, %s189
    %s191 = sphi 0, %s189
    %s192 = sphi 0, %s191
    %s206 = sphi 0, %s192
    %s210 = sphi 0, %s210
    %s212 = sphi 0, %s210
    %s213 = sphi 0, %s212
    %s227 = sphi 0, %s213
    %s231 = sphi 0, %s231
    %s233 = sphi 0, %s231
    %s234 = sphi 0, %s233
    %s248 = sphi 0, %s234
    %s252 = sphi 0, %s252
    %s254 = sphi 0, %s252
    %s255 = sphi 0, %s254
    %s269 = sphi 0, %s255
    %s273 = sphi 0, %s273
    %s275 = sphi 0, %s273
    %s276 = sphi 0, %s275
    %s290 = sphi 0, %s276
    %s294 = sphi 0, %s294
    %s296 = sphi 0, %s294
    %s297 = sphi 0, %s296
    %s311 = sphi 0, %s297
    %s317 = sphi 0, %s319
    %s320 = sphi 0, %s317
    %s321 = sphi 0, %s320
    %s337 = sphi 0, %s321
  $region4: #{rcsosa_forward.7} parent=0 // loop_header_branch
    %22 = sbr.rel (%p20) target = $region8
  $region5: #{rcsosa_forward.7} parent=0 // loop_body
    %s24 = ssub.s32 %s19, 1
    %s25 = ssub.s32 %s19, 2
    %s26 = sadd.s32 %s19, 1
    %s27 = ssub.s32 %s19, %s26
    %p28 = scmp.eq.s32.totalorder %s27, 0
    %s30 = sadd.s32 %s29, 1
    %s31 = scalar_select %p28, %s29, %s30
    %p34 = pneg %p28
    %p35 = scmp.eq.s32.totalorder %s19, 1
    %p36 = por %p34, %p35
    %p37 = scmp.ne.s32.totalorder %s29, %s32
    %p38 = scmp.eq.s32.totalorder %s19, 0
    %p39 = por %p37, %p38
    %p40 = scmp.ne.s32.totalorder %s29, %s32
    %p41 = scmp.eq.s32.totalorder %s24, 1
    %p42 = por %p40, %p41
    %p43 = scmp.ne.s32.totalorder %s32, %s33
    %p44 = scmp.eq.s32.totalorder %s24, 0
    %p45 = por %p43, %p44
    %p46 = scmp.ne.s32.totalorder %s32, %s33
    %p47 = scmp.eq.s32.totalorder %s25, 1
    %p48 = por %p46, %p47
    %p50 = scmp.ne.s32.totalorder %s33, %s49
    %p51 = scmp.eq.s32.totalorder %s25, 0
    %p52 = por %p50, %p51
    %s53 = ssub.s32 %s19, %s26
    %p54 = scmp.eq.s32.totalorder %s53, 0
    %s56 = sadd.s32 %s55, 1
    %s57 = scalar_select %p54, %s55, %s56
    %p60 = pneg %p54
    %p61 = scmp.eq.s32.totalorder %s19, 1
    %p62 = por %p60, %p61
    %p63 = scmp.ne.s32.totalorder %s55, %s58
    %p64 = scmp.eq.s32.totalorder %s19, 0
    %p65 = por %p63, %p64
    %p66 = scmp.ne.s32.totalorder %s55, %s58
    %p67 = scmp.eq.s32.totalorder %s24, 1
    %p68 = por %p66, %p67
    %p69 = scmp.ne.s32.totalorder %s58, %s59
    %p70 = scmp.eq.s32.totalorder %s24, 0
    %p71 = por %p69, %p70
    %p72 = scmp.ne.s32.totalorder %s58, %s59
    %p73 = scmp.eq.s32.totalorder %s25, 1
    %p74 = por %p72, %p73
    %p76 = scmp.ne.s32.totalorder %s59, %s75
    %p77 = scmp.eq.s32.totalorder %s25, 0
    %p78 = por %p76, %p77
    %s79 = ssub.s32 %s19, %s26
    %p80 = scmp.eq.s32.totalorder %s79, 0
    %s82 = sadd.s32 %s81, 1
    %s83 = scalar_select %p80, %s81, %s82
    %p86 = pneg %p80
    %p87 = scmp.eq.s32.totalorder %s19, 1
    %p88 = por %p86, %p87
    %p89 = scmp.ne.s32.totalorder %s81, %s84
    %p90 = scmp.eq.s32.totalorder %s19, 0
    %p91 = por %p89, %p90
    %p92 = scmp.ne.s32.totalorder %s81, %s84
    %p93 = scmp.eq.s32.totalorder %s24, 1
    %p94 = por %p92, %p93
    %p95 = scmp.ne.s32.totalorder %s84, %s85
    %p96 = scmp.eq.s32.totalorder %s24, 0
    %p97 = por %p95, %p96
    %p98 = scmp.ne.s32.totalorder %s84, %s85
    %p99 = scmp.eq.s32.totalorder %s25, 1
    %p100 = por %p98, %p99
    %p102 = scmp.ne.s32.totalorder %s85, %s101
    %p103 = scmp.eq.s32.totalorder %s25, 0
    %p104 = por %p102, %p103
    %s106 = sadd.s32 %s105, 1
    %p109 = scmp.eq.s32.totalorder %s19, 1
    %p110 = scmp.ne.s32.totalorder %s105, %s107
    %p111 = scmp.eq.s32.totalorder %s19, 0
    %p112 = por %p110, %p111
    %p113 = scmp.ne.s32.totalorder %s105, %s107
    %p114 = scmp.eq.s32.totalorder %s24, 1
    %p115 = por %p113, %p114
    %p116 = scmp.ne.s32.totalorder %s107, %s108
    %p117 = scmp.eq.s32.totalorder %s24, 0
    %p118 = por %p116, %p117
    %p119 = scmp.ne.s32.totalorder %s107, %s108
    %p120 = scmp.eq.s32.totalorder %s25, 1
    %p121 = por %p119, %p120
    %p123 = scmp.ne.s32.totalorder %s108, %s122
    %p124 = scmp.eq.s32.totalorder %s25, 0
    %p125 = por %p123, %p124
    %s127 = sadd.s32 %s126, 1
    %p130 = scmp.eq.s32.totalorder %s19, 1
    %p131 = scmp.ne.s32.totalorder %s126, %s128
    %p132 = scmp.eq.s32.totalorder %s19, 0
    %p133 = por %p131, %p132
    %p134 = scmp.ne.s32.totalorder %s126, %s128
    %p135 = scmp.eq.s32.totalorder %s24, 1
    %p136 = por %p134, %p135
    %p137 = scmp.ne.s32.totalorder %s128, %s129
    %p138 = scmp.eq.s32.totalorder %s24, 0
    %p139 = por %p137, %p138
    %p140 = scmp.ne.s32.totalorder %s128, %s129
    %p141 = scmp.eq.s32.totalorder %s25, 1
    %p142 = por %p140, %p141
    %p144 = scmp.ne.s32.totalorder %s129, %s143
    %p145 = scmp.eq.s32.totalorder %s25, 0
    %p146 = por %p144, %p145
    %s148 = sadd.s32 %s147, 1
    %p151 = scmp.eq.s32.totalorder %s19, 1
    %p152 = scmp.ne.s32.totalorder %s147, %s149
    %p153 = scmp.eq.s32.totalorder %s19, 0
    %p154 = por %p152, %p153
    %p155 = scmp.ne.s32.totalorder %s147, %s149
    %p156 = scmp.eq.s32.totalorder %s24, 1
    %p157 = por %p155, %p156
    %p158 = scmp.ne.s32.totalorder %s149, %s150
    %p159 = scmp.eq.s32.totalorder %s24, 0
    %p160 = por %p158, %p159
    %p161 = scmp.ne.s32.totalorder %s149, %s150
    %p162 = scmp.eq.s32.totalorder %s25, 1
    %p163 = por %p161, %p162
    %p165 = scmp.ne.s32.totalorder %s150, %s164
    %p166 = scmp.eq.s32.totalorder %s25, 0
    %p167 = por %p165, %p166
    %s169 = sadd.s32 %s168, 1
    %p172 = scmp.eq.s32.totalorder %s19, 1
    %p173 = scmp.ne.s32.totalorder %s168, %s170
    %p174 = scmp.eq.s32.totalorder %s19, 0
    %p175 = por %p173, %p174
    %p176 = scmp.ne.s32.totalorder %s168, %s170
    %p177 = scmp.eq.s32.totalorder %s24, 1
    %p178 = por %p176, %p177
    %p179 = scmp.ne.s32.totalorder %s170, %s171
    %p180 = scmp.eq.s32.totalorder %s24, 0
    %p181 = por %p179, %p180
    %p182 = scmp.ne.s32.totalorder %s170, %s171
    %p183 = scmp.eq.s32.totalorder %s25, 1
    %p184 = por %p182, %p183
    %p186 = scmp.ne.s32.totalorder %s171, %s185
    %p187 = scmp.eq.s32.totalorder %s25, 0
    %p188 = por %p186, %p187
    %s190 = sadd.s32 %s189, 1
    %p193 = scmp.eq.s32.totalorder %s19, 1
    %p194 = scmp.ne.s32.totalorder %s189, %s191
    %p195 = scmp.eq.s32.totalorder %s19, 0
    %p196 = por %p194, %p195
    %p197 = scmp.ne.s32.totalorder %s189, %s191
    %p198 = scmp.eq.s32.totalorder %s24, 1
    %p199 = por %p197, %p198
    %p200 = scmp.ne.s32.totalorder %s191, %s192
    %p201 = scmp.eq.s32.totalorder %s24, 0
    %p202 = por %p200, %p201
    %p203 = scmp.ne.s32.totalorder %s191, %s192
    %p204 = scmp.eq.s32.totalorder %s25, 1
    %p205 = por %p203, %p204
    %p207 = scmp.ne.s32.totalorder %s192, %s206
    %p208 = scmp.eq.s32.totalorder %s25, 0
    %p209 = por %p207, %p208
    %s211 = sadd.s32 %s210, 1
    %p214 = scmp.eq.s32.totalorder %s19, 1
    %p215 = scmp.ne.s32.totalorder %s210, %s212
    %p216 = scmp.eq.s32.totalorder %s19, 0
    %p217 = por %p215, %p216
    %p218 = scmp.ne.s32.totalorder %s210, %s212
    %p219 = scmp.eq.s32.totalorder %s24, 1
    %p220 = por %p218, %p219
    %p221 = scmp.ne.s32.totalorder %s212, %s213
    %p222 = scmp.eq.s32.totalorder %s24, 0
    %p223 = por %p221, %p222
    %p224 = scmp.ne.s32.totalorder %s212, %s213
    %p225 = scmp.eq.s32.totalorder %s25, 1
    %p226 = por %p224, %p225
    %p228 = scmp.ne.s32.totalorder %s213, %s227
    %p229 = scmp.eq.s32.totalorder %s25, 0
    %p230 = por %p228, %p229
    %s232 = sadd.s32 %s231, 1
    %p235 = scmp.eq.s32.totalorder %s19, 1
    %p236 = scmp.ne.s32.totalorder %s231, %s233
    %p237 = scmp.eq.s32.totalorder %s19, 0
    %p238 = por %p236, %p237
    %p239 = scmp.ne.s32.totalorder %s231, %s233
    %p240 = scmp.eq.s32.totalorder %s24, 1
    %p241 = por %p239, %p240
    %p242 = scmp.ne.s32.totalorder %s233, %s234
    %p243 = scmp.eq.s32.totalorder %s24, 0
    %p244 = por %p242, %p243
    %p245 = scmp.ne.s32.totalorder %s233, %s234
    %p246 = scmp.eq.s32.totalorder %s25, 1
    %p247 = por %p245, %p246
    %p249 = scmp.ne.s32.totalorder %s234, %s248
    %p250 = scmp.eq.s32.totalorder %s25, 0
    %p251 = por %p249, %p250
    %s253 = sadd.s32 %s252, 1
    %p256 = scmp.eq.s32.totalorder %s19, 1
    %p257 = scmp.ne.s32.totalorder %s252, %s254
    %p258 = scmp.eq.s32.totalorder %s19, 0
    %p259 = por %p257, %p258
    %p260 = scmp.ne.s32.totalorder %s252, %s254
    %p261 = scmp.eq.s32.totalorder %s24, 1
    %p262 = por %p260, %p261
    %p263 = scmp.ne.s32.totalorder %s254, %s255
    %p264 = scmp.eq.s32.totalorder %s24, 0
    %p265 = por %p263, %p264
    %p266 = scmp.ne.s32.totalorder %s254, %s255
    %p267 = scmp.eq.s32.totalorder %s25, 1
    %p268 = por %p266, %p267
    %p270 = scmp.ne.s32.totalorder %s255, %s269
    %p271 = scmp.eq.s32.totalorder %s25, 0
    %p272 = por %p270, %p271
    %s274 = sadd.s32 %s273, 1
    %p277 = scmp.eq.s32.totalorder %s19, 1
    %p278 = scmp.ne.s32.totalorder %s273, %s275
    %p279 = scmp.eq.s32.totalorder %s19, 0
    %p280 = por %p278, %p279
    %p281 = scmp.ne.s32.totalorder %s273, %s275
    %p282 = scmp.eq.s32.totalorder %s24, 1
    %p283 = por %p281, %p282
    %p284 = scmp.ne.s32.totalorder %s275, %s276
    %p285 = scmp.eq.s32.totalorder %s24, 0
    %p286 = por %p284, %p285
    %p287 = scmp.ne.s32.totalorder %s275, %s276
    %p288 = scmp.eq.s32.totalorder %s25, 1
    %p289 = por %p287, %p288
    %p291 = scmp.ne.s32.totalorder %s276, %s290
    %p292 = scmp.eq.s32.totalorder %s25, 0
    %p293 = por %p291, %p292
    %s295 = sadd.s32 %s294, 1
    %p298 = scmp.eq.s32.totalorder %s19, 1
    %p299 = scmp.ne.s32.totalorder %s294, %s296
    %p300 = scmp.eq.s32.totalorder %s19, 0
    %p301 = por %p299, %p300
    %p302 = scmp.ne.s32.totalorder %s294, %s296
    %p303 = scmp.eq.s32.totalorder %s24, 1
    %p304 = por %p302, %p303
    %p305 = scmp.ne.s32.totalorder %s296, %s297
    %p306 = scmp.eq.s32.totalorder %s24, 0
    %p307 = por %p305, %p306
    %p308 = scmp.ne.s32.totalorder %s296, %s297
    %p309 = scmp.eq.s32.totalorder %s25, 1
    %p310 = por %p308, %p309
    %p312 = scmp.ne.s32.totalorder %s297, %s311
    %p313 = scmp.eq.s32.totalorder %s25, 0
    %p314 = por %p312, %p313
    %s315 = ssub.s32 %s19, %s26
    %p316 = scmp.eq.s32.totalorder %s315, 0
    %s318 = sadd.s32 %s317, 1
    %s319 = scalar_select %p316, %s317, %s318
    %p322 = pneg %p316
    %p323 = scmp.eq.s32.totalorder %s19, 1
    %p324 = por %p322, %p323
    %p325 = scmp.ne.s32.totalorder %s317, %s320
    %p326 = scmp.eq.s32.totalorder %s19, 0
    %p327 = por %p325, %p326
    %p328 = scmp.ne.s32.totalorder %s317, %s320
    %p329 = scmp.eq.s32.totalorder %s24, 1
    %p330 = por %p328, %p329
    %p331 = scmp.ne.s32.totalorder %s320, %s321
    %p332 = scmp.eq.s32.totalorder %s24, 0
    %p333 = por %p331, %p332
    %p334 = scmp.ne.s32.totalorder %s320, %s321
    %p335 = scmp.eq.s32.totalorder %s25, 1
    %p336 = por %p334, %p335
    %p338 = scmp.ne.s32.totalorder %s321, %s337
    %p339 = scmp.eq.s32.totalorder %s25, 0
    %p340 = por %p338, %p339
    %p341 = scmp.le.s32.totalorder 1, %s19
    %p342 = scmp.lt.s32.totalorder %s19, 3
    %p343 = pnand %p341, %p342
    %p344 = pneg %p343
    // Predicated region
    $region9: #{rcsosa_forward.7} parent=5 // pred_check
      _
    $region10: #{rcsosa_forward.7} parent=5 // pred_check_branch
      %346 = sbr.rel (%p343) target = $region12
    $region11: #{rcsosa_forward.7} parent=5 // pred_region
      %s347 = ssub.s32 %s19, 1
      // Predicated region
      $region13: #{rcsosa_forward.7} parent=11 // pred_check
        %p348 = pneg %p118
      $region14: #{rcsosa_forward.7} parent=11 // pred_check_branch
        %350 = sbr.rel (%p348) target = $region16
      $region15: #{rcsosa_forward.7} parent=11 // pred_region
        _
      $region16: #{rcsosa_forward.7} parent=11 // pred_fallthru
        _
      // Predicated region
      $region17: #{rcsosa_forward.7} parent=11 // pred_check
        %p351 = pneg %p139
      $region18: #{rcsosa_forward.7} parent=11 // pred_check_branch
        %353 = sbr.rel (%p351) target = $region20
      $region19: #{rcsosa_forward.7} parent=11 // pred_region
        _
      $region20: #{rcsosa_forward.7} parent=11 // pred_fallthru
        _
      // Predicated region
      $region21: #{rcsosa_forward.7} parent=11 // pred_check
        %p354 = pneg %p160
      $region22: #{rcsosa_forward.7} parent=11 // pred_check_branch
        %356 = sbr.rel (%p354) target = $region24
      $region23: #{rcsosa_forward.7} parent=11 // pred_region
        _
      $region24: #{rcsosa_forward.7} parent=11 // pred_fallthru
        _
      // Predicated region
      $region25: #{rcsosa_forward.7} parent=11 // pred_check
        %p357 = pneg %p181
      $region26: #{rcsosa_forward.7} parent=11 // pred_check_branch
        %359 = sbr.rel (%p357) target = $region28
      $region27: #{rcsosa_forward.7} parent=11 // pred_region
        _
      $region28: #{rcsosa_forward.7} parent=11 // pred_fallthru
        _
      // Predicated region
      $region29: #{rcsosa_forward.7} parent=11 // pred_check
        %p360 = pneg %p202
      $region30: #{rcsosa_forward.7} parent=11 // pred_check_branch
        %362 = sbr.rel (%p360) target = $region32
      $region31: #{rcsosa_forward.7} parent=11 // pred_region
        _
      $region32: #{rcsosa_forward.7} parent=11 // pred_fallthru
        _
      // Predicated region
      $region33: #{rcsosa_forward.7} parent=11 // pred_check
        %p363 = pneg %p223
      $region34: #{rcsosa_forward.7} parent=11 // pred_check_branch
        %365 = sbr.rel (%p363) target = $region36
      $region35: #{rcsosa_forward.7} parent=11 // pred_region
        _
      $region36: #{rcsosa_forward.7} parent=11 // pred_fallthru
        _
      // Predicated region
      $region37: #{rcsosa_forward.7} parent=11 // pred_check
        %p366 = pneg %p244
      $region38: #{rcsosa_forward.7} parent=11 // pred_check_branch
        %368 = sbr.rel (%p366) target = $region40
      $region39: #{rcsosa_forward.7} parent=11 // pred_region
        _
      $region40: #{rcsosa_forward.7} parent=11 // pred_fallthru
        _
      // Predicated region
      $region41: #{rcsosa_forward.7} parent=11 // pred_check
        %p369 = pneg %p265
      $region42: #{rcsosa_forward.7} parent=11 // pred_check_branch
        %371 = sbr.rel (%p369) target = $region44
      $region43: #{rcsosa_forward.7} parent=11 // pred_region
        _
      $region44: #{rcsosa_forward.7} parent=11 // pred_fallthru
        _
      // Predicated region
      $region45: #{rcsosa_forward.7} parent=11 // pred_check
        %p372 = pneg %p286
      $region46: #{rcsosa_forward.7} parent=11 // pred_check_branch
        %374 = sbr.rel (%p372) target = $region48
      $region47: #{rcsosa_forward.7} parent=11 // pred_region
        _
      $region48: #{rcsosa_forward.7} parent=11 // pred_fallthru
        _
      // Predicated region
      $region49: #{rcsosa_forward.7} parent=11 // pred_check
        %p375 = pneg %p307
      $region50: #{rcsosa_forward.7} parent=11 // pred_check_branch
        %377 = sbr.rel (%p375) target = $region52
      $region51: #{rcsosa_forward.7} parent=11 // pred_region
        _
      $region52: #{rcsosa_forward.7} parent=11 // pred_fallthru
        _
    $region12: #{rcsosa_forward.7} parent=5 // pred_fallthru
      _
    %p378 = scmp.lt.s32.totalorder %s19, 2
    // Predicated region
    $region53: #{rcsosa_forward.7} parent=5 // pred_check
      %p379 = pneg %p378
    $region54: #{rcsosa_forward.7} parent=5 // pred_check_branch
      %381 = sbr.rel (%p379) target = $region56
    $region55: #{rcsosa_forward.7} parent=5 // pred_region
      // Predicated region
      $region57: #{rcsosa_forward.7} parent=55 // pred_check
        %p382 = pneg %p39
      $region58: #{rcsosa_forward.7} parent=55 // pred_check_branch
        %384 = sbr.rel (%p382) target = $region60
      $region59: #{rcsosa_forward.7} parent=55 // pred_region
        %s385 = smul.u32 2, %s19
        %p386 = scmp.lt.s32.totalorder %s385, 3
        %s387 = scalar_select %p386, %s385, 3
        %s388 = smul.addr %s387, 8
        %s389 = scalar_lea.vmem %s0, %s388
        %s390 = smul.u32 2, %s19
      $region60: #{rcsosa_forward.7} parent=55 // pred_fallthru
        _
      // Predicated region
      $region61: #{rcsosa_forward.7} parent=55 // pred_check
        %p391 = pneg %p65
      $region62: #{rcsosa_forward.7} parent=55 // pred_check_branch
        %393 = sbr.rel (%p391) target = $region64
      $region63: #{rcsosa_forward.7} parent=55 // pred_region
        %s394 = smul.u32 2, %s19
        %p395 = scmp.lt.s32.totalorder %s394, 3
        %s396 = scalar_select %p395, %s394, 3
        %s397 = smul.addr %s396, 8
        %s398 = scalar_lea.vmem %s1, %s397
        %s399 = smul.u32 2, %s19
      $region64: #{rcsosa_forward.7} parent=55 // pred_fallthru
        _
      // Predicated region
      $region65: #{rcsosa_forward.7} parent=55 // pred_check
        %p400 = pneg %p91
      $region66: #{rcsosa_forward.7} parent=55 // pred_check_branch
        %402 = sbr.rel (%p400) target = $region68
      $region67: #{rcsosa_forward.7} parent=55 // pred_region
        %s403 = smul.u32 2, %s19
        %p404 = scmp.lt.s32.totalorder %s403, 3
        %s405 = scalar_select %p404, %s403, 3
        %s406 = smul.addr %s405, 8
        %s407 = scalar_lea.vmem %s2, %s406
        %s408 = smul.u32 2, %s19
      $region68: #{rcsosa_forward.7} parent=55 // pred_fallthru
        _
    $region56: #{rcsosa_forward.7} parent=5 // pred_fallthru
      _
    %p409 = scmp.le.s32.totalorder 1, %s19
    %p410 = scmp.lt.s32.totalorder %s19, 3
    %p411 = pnand %p409, %p410
    %p412 = pneg %p411
    // Predicated region
    $region69: #{rcsosa_forward.7} parent=5 // pred_check
      _
    $region70: #{rcsosa_forward.7} parent=5 // pred_check_branch
      %414 = sbr.rel (%p411) target = $region72
    $region71: #{rcsosa_forward.7} parent=5 // pred_region
      %s415 = ssub.s32 %s19, 1
      %s416 = smul.u32 2, %s24
      %p417 = scmp.lt.s32.totalorder %s416, 3
      %s418 = scalar_select %p417, %s416, 3
      %s419 = smul.addr %s418, 8
      %s420 = scalar_lea.vmem %s0, %s419
      %p421 = pneg %p45
      %p422 = pneg %p42
      %s423 = smul.u32 2, %s24
      %p424 = scmp.lt.s32.totalorder %s423, 3
      %s425 = scalar_select %p424, %s423, 3
      %s426 = smul.addr %s425, 8
      %s427 = scalar_lea.vmem %s1, %s426
      %p428 = pneg %p71
      %p429 = pneg %p68
      %s430 = smul.u32 2, %s24
      %p431 = scmp.lt.s32.totalorder %s430, 3
      %s432 = scalar_select %p431, %s430, 3
      %s433 = smul.addr %s432, 8
      %s434 = scalar_lea.vmem %s2, %s433
      %p435 = pneg %p97
      %p436 = pneg %p94
      %p437 = pneg %p118
      %p438 = pneg %p115
      %p439 = pneg %p139
      %p440 = pneg %p136
      %p441 = pneg %p160
      %p442 = pneg %p157
      %p443 = pneg %p181
      %p444 = pneg %p178
      %p445 = pneg %p202
      %p446 = pneg %p199
      %p447 = pneg %p223
      %p448 = pneg %p220
      %p449 = pneg %p244
      %p450 = pneg %p241
      %p451 = pneg %p265
      %p452 = pneg %p262
      %p453 = pneg %p286
      %p454 = pneg %p283
      %p455 = pneg %p307
      %p456 = pneg %p304
      %p457 = pneg %p333
      %p458 = pneg %p330
      %s459 = smul.u32 2, %s24
      %p460 = scmp.lt.s32.totalorder %s459, 3
      %s461 = scalar_select %p460, %s459, 3
      %s462 = smul.addr %s461, 2
      %s463 = smul.addr %s462, 8
      %s464 = scalar_lea.vmem %s13, %s463
      %s465 = smul.u32 2, %s24
      %p466 = scmp.lt.s32.totalorder %s465, 3
      %s467 = scalar_select %p466, %s465, 3
      %s468 = smul.addr %s467, 8
      %s469 = scalar_lea.vmem %s0, %s468
      %s470 = smul.u32 2, %s24
      %s471 = smul.u32 2, %s24
      %p472 = scmp.lt.s32.totalorder %s471, 3
      %s473 = scalar_select %p472, %s471, 3
      %s474 = smul.addr %s473, 8
      %s475 = scalar_lea.vmem %s1, %s474
      %s476 = smul.u32 2, %s24
      %s477 = smul.u32 2, %s24
      %p478 = scmp.lt.s32.totalorder %s477, 3
      %s479 = scalar_select %p478, %s477, 3
      %s480 = smul.addr %s479, 8
      %s481 = scalar_lea.vmem %s2, %s480
      %s482 = smul.u32 2, %s24
      %s483 = smul.u32 2, %s24
      %p484 = scmp.lt.s32.totalorder %s483, 3
      %s485 = scalar_select %p484, %s483, 3
      %s486 = smul.addr %s485, 2
      %s487 = smul.addr %s486, 8
      %s488 = scalar_lea.vmem %s13, %s487
      %s489 = smul.u32 2, %s24
      %v490 = vlaneseq
      %vm491 = vcmp.ge.s32.totalorder %v490, 0
      %vm492 = vcmp.lt.s32.totalorder %v490, 384
      %vm493 = vmand %vm491, %vm492
      %s494 = scalar_lea.vmem [#allocation2], 7
      %495 = vst.msk [vmem:[%s494] ss:$8 sm:$0x7] %vm493, 0.0
      %496 = vst.msk [vmem:[%s494] ss:$8 sm:$0x0] %vm493, 0.0
      %s497 = scalar_lea.vmem [#allocation2], 72
      %498 = vst.msk [vmem:[%s497] ss:$8 sm:$0x7] %vm493, 0.0
      %499 = vst.msk [vmem:[%s497] ss:$8 sm:$0x0] %vm493, 0.0
      %v500 = vld [vmem:[%s469] sm:$0xff]
      %v501 = vld [vmem:[%s469 + $0x8] sm:$0xff]
      %502 = vst [vmem:[#allocation2 + $0x18] sm:$0xff] %v500
      %503 = vst [vmem:[#allocation2 + $0x30] sm:$0xff] %v501
      %v504 = vld [vmem:[%s475] sm:$0xff]
      %v505 = vld [vmem:[%s475 + $0x8] sm:$0xff]
      %506 = vst [vmem:[#allocation2 + $0x20] sm:$0xff] %v504
      %507 = vst [vmem:[#allocation2 + $0x38] sm:$0xff] %v505
      %v508 = vld [vmem:[%s481] sm:$0xff]
      %v509 = vld [vmem:[%s481 + $0x8] sm:$0xff]
      %510 = vst [vmem:[#allocation2 + $0x28] sm:$0xff] %v508
      %511 = vst [vmem:[#allocation2 + $0x40] sm:$0xff] %v509
      %v512 = vld [vmem:[#allocation2] sm:$0x80]
      %v513 = vld [vmem:[#allocation2 + $0x18] sm:$0xff]
      %v514 = vld [vmem:[#allocation2 + $0x30] sm:$0x7f]
      %v515 = vld [vmem:[%s3] sm:$0xff]
      %v516 = vld [vmem:[%s3 + $0x8] sm:$0xff]
      %v517 = vld [vmem:[%s3 + $0x10] sm:$0xff]
      %v518 = vld [vmem:[%s3 + $0x18] sm:$0xff]
      %v519 = vld [vmem:[%s3 + $0x20] sm:$0xff]
      %v520 = vld [vmem:[%s3 + $0x28] sm:$0xff]
      %v521 = vld [vmem:[%s3 + $0x30] sm:$0xff]
      %v522 = vld [vmem:[%s3 + $0x38] sm:$0xff]
      %v523 = vld [vmem:[%s3 + $0x40] sm:$0xff]
      %v524 = vld [vmem:[%s3 + $0x48] sm:$0xff]
      %v525 = vld [vmem:[%s3 + $0x50] sm:$0xff]
      %v526 = vld [vmem:[%s3 + $0x58] sm:$0xff]
      %v527 = vld [vmem:[%s3 + $0x60] sm:$0xff]
      %v528 = vld [vmem:[%s3 + $0x68] sm:$0xff]
      %v529 = vld [vmem:[%s3 + $0x70] sm:$0xff]
      %v530 = vld [vmem:[%s3 + $0x78] sm:$0xff]
      %v531 = vld [vmem:[%s3 + $0x80] sm:$0xff]
      %v532 = vld [vmem:[%s3 + $0x88] sm:$0xff]
      %v533 = vld [vmem:[%s3 + $0x90] sm:$0xff]
      %v534 = vld [vmem:[%s3 + $0x98] sm:$0xff]
      %v535 = vld [vmem:[%s3 + $0xa0] sm:$0xff]
      %v536 = vld [vmem:[%s3 + $0xa8] sm:$0xff]
      %v537 = vld [vmem:[%s3 + $0xb0] sm:$0xff]
      %v538 = vld [vmem:[%s3 + $0xb8] sm:$0xff]
      %v539 = vld [vmem:[%s3 + $0xc0] sm:$0xff]
      %v540 = vld [vmem:[%s3 + $0xc8] sm:$0xff]
      %v541 = vld [vmem:[%s3 + $0xd0] sm:$0xff]
      %v542 = vld [vmem:[%s3 + $0xd8] sm:$0xff]
      %v543 = vld [vmem:[%s3 + $0xe0] sm:$0xff]
      %v544 = vld [vmem:[%s3 + $0xe8] sm:$0xff]
      %v545 = vld [vmem:[%s3 + $0xf0] sm:$0xff]
      %v546 = vld [vmem:[%s3 + $0xf8] sm:$0xff]
      %v547 = vld [vmem:[#allocation2 + $0x30] sm:$0xff]
      %s548 = scalar_lea.vmem %s3, 256
      %v549 = vld [vmem:[%s548] sm:$0xff]
      %v550 = vld [vmem:[%s548 + $0x8] sm:$0xff]
      %v551 = vld [vmem:[%s548 + $0x10] sm:$0xff]
      %v552 = vld [vmem:[%s548 + $0x18] sm:$0xff]
      %v553 = vld [vmem:[%s548 + $0x20] sm:$0xff]
      %v554 = vld [vmem:[%s548 + $0x28] sm:$0xff]
      %v555 = vld [vmem:[%s548 + $0x30] sm:$0xff]
      %v556 = vld [vmem:[%s548 + $0x38] sm:$0xff]
      %v557 = vld [vmem:[%s548 + $0x40] sm:$0xff]
      %v558 = vld [vmem:[%s548 + $0x48] sm:$0xff]
      %v559 = vld [vmem:[%s548 + $0x50] sm:$0xff]
      %v560 = vld [vmem:[%s548 + $0x58] sm:$0xff]
      %v561 = vld [vmem:[%s548 + $0x60] sm:$0xff]
      %v562 = vld [vmem:[%s548 + $0x68] sm:$0xff]
      %v563 = vld [vmem:[%s548 + $0x70] sm:$0xff]
      %v564 = vld [vmem:[%s548 + $0x78] sm:$0xff]
      %v565 = vld [vmem:[%s548 + $0x80] sm:$0xff]
      %v566 = vld [vmem:[%s548 + $0x88] sm:$0xff]
      %v567 = vld [vmem:[%s548 + $0x90] sm:$0xff]
      %v568 = vld [vmem:[%s548 + $0x98] sm:$0xff]
      %v569 = vld [vmem:[%s548 + $0xa0] sm:$0xff]
      %v570 = vld [vmem:[%s548 + $0xa8] sm:$0xff]
      %v571 = vld [vmem:[%s548 + $0xb0] sm:$0xff]
      %v572 = vld [vmem:[%s548 + $0xb8] sm:$0xff]
      %v573 = vld [vmem:[%s548 + $0xc0] sm:$0xff]
      %v574 = vld [vmem:[%s548 + $0xc8] sm:$0xff]
      %v575 = vld [vmem:[%s548 + $0xd0] sm:$0xff]
      %v576 = vld [vmem:[%s548 + $0xd8] sm:$0xff]
      %v577 = vld [vmem:[%s548 + $0xe0] sm:$0xff]
      %v578 = vld [vmem:[%s548 + $0xe8] sm:$0xff]
      %v579 = vld [vmem:[%s548 + $0xf0] sm:$0xff]
      %v580 = vld [vmem:[%s548 + $0xf8] sm:$0xff]
      %581 = vmatprep.subr.mxu0 %v550
      %582 = vmatpush1.msra.mxu0 %v549
      %583 = vmatprep.subr.mxu0 %v552
      %584 = vmatpush1.msra.mxu0 %v551
      %585 = vmatprep.subr.mxu0 %v554
      %586 = vmatpush1.msra.mxu0 %v553
      %587 = vmatprep.subr.mxu0 %v556
      %588 = vmatpush1.msra.mxu0 %v555
      %589 = vmatprep.subr.mxu0 %v558
      %590 = vmatpush1.msra.mxu0 %v557
      %591 = vmatprep.subr.mxu0 %v560
      %592 = vmatpush1.msra.mxu0 %v559
      %593 = vmatprep.subr.mxu0 %v562
      %594 = vmatpush1.msra.mxu0 %v561
      %595 = vmatprep.subr.mxu0 %v564
      %596 = vmatpush1.msra.mxu0 %v563
      %597 = vmatprep.subr.mxu0 %v566
      %598 = vmatpush1.msra.mxu0 %v565
      %599 = vmatprep.subr.mxu0 %v568
      %600 = vmatpush1.msra.mxu0 %v567
      %601 = vmatprep.subr.mxu0 %v570
      %602 = vmatpush1.msra.mxu0 %v569
      %603 = vmatprep.subr.mxu0 %v572
      %604 = vmatpush1.msra.mxu0 %v571
      %605 = vmatprep.subr.mxu0 %v574
      %606 = vmatpush1.msra.mxu0 %v573
      %607 = vmatprep.subr.mxu0 %v576
      %608 = vmatpush1.msra.mxu0 %v575
      %609 = vmatprep.subr.mxu0 %v578
      %610 = vmatpush1.msra.mxu0 %v577
      %611 = vmatprep.subr.mxu0 %v580
      %612 = vmatpush1.msra.mxu0 %v579
      %613 = vmatprep.subr.mxu0 0.0
      %614 = vmatpush1.msra.mxu0 0.0
      %615 = vmatprep.subr.mxu0 0.0
      %616 = vmatpush1.msra.mxu0 0.0
      %617 = vmatprep.subr.mxu0 0.0
      %618 = vmatpush1.msra.mxu0 0.0
      %619 = vmatprep.subr.mxu0 0.0
      %620 = vmatpush1.msra.mxu0 0.0
      %621 = vmatprep.subr.mxu0 0.0
      %622 = vmatpush1.msra.mxu0 0.0
      %623 = vmatprep.subr.mxu0 0.0
      %624 = vmatpush1.msra.mxu0 0.0
      %625 = vmatprep.subr.mxu0 0.0
      %626 = vmatpush1.msra.mxu0 0.0
      %627 = vmatprep.subr.mxu0 0.0
      %628 = vmatpush1.msra.mxu0 0.0
      %629 = vmatprep.subr.mxu0 0.0
      %630 = vmatpush1.msra.mxu0 0.0
      %631 = vmatprep.subr.mxu0 0.0
      %632 = vmatpush1.msra.mxu0 0.0
      %633 = vmatprep.subr.mxu0 0.0
      %634 = vmatpush1.msra.mxu0 0.0
      %635 = vmatprep.subr.mxu0 0.0
      %636 = vmatpush1.msra.mxu0 0.0
      %637 = vmatprep.subr.mxu0 0.0
      %638 = vmatpush1.msra.mxu0 0.0
      %639 = vmatprep.subr.mxu0 0.0
      %640 = vmatpush1.msra.mxu0 0.0
      %641 = vmatprep.subr.mxu0 0.0
      %642 = vmatpush1.msra.mxu0 0.0
      %643 = vmatprep.subr.mxu0 0.0
      %644 = vmatpush1.msra.mxu0 0.0
      %645 = vmatprep.mubr.f32.mxu0 0.0
      %646 = vmatmul.mubr.f32.gmra.mrb[0].mxu0 %v513
      %v647 = vpop.f32.mrb[0].mxu0
      %v648 = vadd.f32 0.0, %v647
      %v649 = vpop.f32.mrb[0].mxu0
      %v650 = vadd.f32 0.0, %v649
      %651 = vmatprep.mubr.f32.mxu0 0.0
      %652 = vmatmul.mubr.f32.gmra.mrb[0].mxu0 %v547
      %v653 = vpop.f32.mrb[0].mxu0
      %v654 = vadd.f32 0.0, %v653
      %v655 = vpop.f32.mrb[0].mxu0
      %v656 = vadd.f32 0.0, %v655
      %657 = vdwg.mxu0
      %vm661 = vcmask 1040384
      %v662 = vrot.slane %v512, 7
      %v663 = vrot.slane %v513, 7
      %v664 = vsel %vm661, %v662, %v663
      %v665 = vrot.slane %v514, 7
      %v666 = vsel %vm661, %v663, %v665
      %669 = vmatprep.subr.mxu0 %v516
      %670 = vmatpush1.msra.mxu0 %v515
      %671 = vmatprep.subr.mxu0 %v518
      %672 = vmatpush1.msra.mxu0 %v517
      %673 = vmatprep.subr.mxu0 %v520
      %674 = vmatpush1.msra.mxu0 %v519
      %675 = vmatprep.subr.mxu0 %v522
      %676 = vmatpush1.msra.mxu0 %v521
      %677 = vmatprep.subr.mxu0 %v524
      %678 = vmatpush1.msra.mxu0 %v523
      %679 = vmatprep.subr.mxu0 %v526
      %680 = vmatpush1.msra.mxu0 %v525
      %681 = vmatprep.subr.mxu0 %v528
      %682 = vmatpush1.msra.mxu0 %v527
      %683 = vmatprep.subr.mxu0 %v530
      %684 = vmatpush1.msra.mxu0 %v529
      %685 = vmatprep.subr.mxu0 %v532
      %686 = vmatpush1.msra.mxu0 %v531
      %687 = vmatprep.subr.mxu0 %v534
      %688 = vmatpush1.msra.mxu0 %v533
      %689 = vmatprep.subr.mxu0 %v536
      %690 = vmatpush1.msra.mxu0 %v535
      %691 = vmatprep.subr.mxu0 %v538
      %692 = vmatpush1.msra.mxu0 %v537
      %693 = vmatprep.subr.mxu0 %v540
      %694 = vmatpush1.msra.mxu0 %v539
      %695 = vmatprep.subr.mxu0 %v542
      %696 = vmatpush1.msra.mxu0 %v541
      %697 = vmatprep.subr.mxu0 %v544
      %698 = vmatpush1.msra.mxu0 %v543
      %699 = vmatprep.subr.mxu0 %v546
      %700 = vmatpush1.msra.mxu0 %v545
      %701 = vmatprep.subr.mxu0 0.0
      %702 = vmatpush1.msra.mxu0 0.0
      %703 = vmatprep.subr.mxu0 0.0
      %704 = vmatpush1.msra.mxu0 0.0
      %705 = vmatprep.subr.mxu0 0.0
      %706 = vmatpush1.msra.mxu0 0.0
      %707 = vmatprep.subr.mxu0 0.0
      %708 = vmatpush1.msra.mxu0 0.0
      %709 = vmatprep.subr.mxu0 0.0
      %710 = vmatpush1.msra.mxu0 0.0
      %711 = vmatprep.subr.mxu0 0.0
      %712 = vmatpush1.msra.mxu0 0.0
      %713 = vmatprep.subr.mxu0 0.0
      %714 = vmatpush1.msra.mxu0 0.0
      %715 = vmatprep.subr.mxu0 0.0
      %716 = vmatpush1.msra.mxu0 0.0
      %717 = vmatprep.subr.mxu0 0.0
      %718 = vmatpush1.msra.mxu0 0.0
      %719 = vmatprep.subr.mxu0 0.0
      %720 = vmatpush1.msra.mxu0 0.0
      %721 = vmatprep.subr.mxu0 0.0
      %722 = vmatpush1.msra.mxu0 0.0
      %723 = vmatprep.subr.mxu0 0.0
      %724 = vmatpush1.msra.mxu0 0.0
      %725 = vmatprep.subr.mxu0 0.0
      %726 = vmatpush1.msra.mxu0 0.0
      %727 = vmatprep.subr.mxu0 0.0
      %728 = vmatpush1.msra.mxu0 0.0
      %729 = vmatprep.subr.mxu0 0.0
      %730 = vmatpush1.msra.mxu0 0.0
      %731 = vmatprep.subr.mxu0 0.0
      %732 = vmatpush1.msra.mxu0 0.0
      %733 = vmatprep.mubr.f32.mxu0 0.0
      %734 = vmatmul.mubr.f32.gmra.mrb[0].mxu0 %v664
      %v735 = vpop.f32.mrb[0].mxu0
      %v736 = vadd.f32 %v648, %v735
      %v737 = vpop.f32.mrb[0].mxu0
      %v738 = vadd.f32 %v650, %v737
      %739 = vmatprep.mubr.f32.mxu0 0.0
      %740 = vmatmul.mubr.f32.gmra.mrb[0].mxu0 %v666
      %v741 = vpop.f32.mrb[0].mxu0
      %v742 = vadd.f32 %v654, %v741
      %v743 = vpop.f32.mrb[0].mxu0
      %v744 = vadd.f32 %v656, %v743
      %745 = vdwg.mxu0
      %v746 = vld [vmem:[#allocation2 + $0x18] sm:$0xfe]
      %v747 = vld [vmem:[#allocation2 + $0x30] sm:$0xff]
      %v748 = vld [vmem:[#allocation2 + $0x48] sm:$0x1]
      %s749 = scalar_lea.vmem %s3, 512
      %v750 = vld [vmem:[%s749] sm:$0xff]
      %v751 = vld [vmem:[%s749 + $0x8] sm:$0xff]
      %v752 = vld [vmem:[%s749 + $0x10] sm:$0xff]
      %v753 = vld [vmem:[%s749 + $0x18] sm:$0xff]
      %v754 = vld [vmem:[%s749 + $0x20] sm:$0xff]
      %v755 = vld [vmem:[%s749 + $0x28] sm:$0xff]
      %v756 = vld [vmem:[%s749 + $0x30] sm:$0xff]
      %v757 = vld [vmem:[%s749 + $0x38] sm:$0xff]
      %v758 = vld [vmem:[%s749 + $0x40] sm:$0xff]
      %v759 = vld [vmem:[%s749 + $0x48] sm:$0xff]
      %v760 = vld [vmem:[%s749 + $0x50] sm:$0xff]
      %v761 = vld [vmem:[%s749 + $0x58] sm:$0xff]
      %v762 = vld [vmem:[%s749 + $0x60] sm:$0xff]
      %v763 = vld [vmem:[%s749 + $0x68] sm:$0xff]
      %v764 = vld [vmem:[%s749 + $0x70] sm:$0xff]
      %v765 = vld [vmem:[%s749 + $0x78] sm:$0xff]
      %v766 = vld [vmem:[%s749 + $0x80] sm:$0xff]
      %v767 = vld [vmem:[%s749 + $0x88] sm:$0xff]
      %v768 = vld [vmem:[%s749 + $0x90] sm:$0xff]
      %v769 = vld [vmem:[%s749 + $0x98] sm:$0xff]
      %v770 = vld [vmem:[%s749 + $0xa0] sm:$0xff]
      %v771 = vld [vmem:[%s749 + $0xa8] sm:$0xff]
      %v772 = vld [vmem:[%s749 + $0xb0] sm:$0xff]
      %v773 = vld [vmem:[%s749 + $0xb8] sm:$0xff]
      %v774 = vld [vmem:[%s749 + $0xc0] sm:$0xff]
      %v775 = vld [vmem:[%s749 + $0xc8] sm:$0xff]
      %v776 = vld [vmem:[%s749 + $0xd0] sm:$0xff]
      %v777 = vld [vmem:[%s749 + $0xd8] sm:$0xff]
      %v778 = vld [vmem:[%s749 + $0xe0] sm:$0xff]
      %v779 = vld [vmem:[%s749 + $0xe8] sm:$0xff]
      %v780 = vld [vmem:[%s749 + $0xf0] sm:$0xff]
      %v781 = vld [vmem:[%s749 + $0xf8] sm:$0xff]
      %vm785 = vcmask 1046528
      %v786 = vrot.slane %v746, 1
      %v787 = vrot.slane %v747, 1
      %v788 = vsel %vm785, %v786, %v787
      %v789 = vrot.slane %v748, 1
      %v790 = vsel %vm785, %v787, %v789
      %793 = vmatprep.subr.mxu0 %v751
      %794 = vmatpush1.msra.mxu0 %v750
      %795 = vmatprep.subr.mxu0 %v753
      %796 = vmatpush1.msra.mxu0 %v752
      %797 = vmatprep.subr.mxu0 %v755
      %798 = vmatpush1.msra.mxu0 %v754
      %799 = vmatprep.subr.mxu0 %v757
      %800 = vmatpush1.msra.mxu0 %v756
      %801 = vmatprep.subr.mxu0 %v759
      %802 = vmatpush1.msra.mxu0 %v758
      %803 = vmatprep.subr.mxu0 %v761
      %804 = vmatpush1.msra.mxu0 %v760
      %805 = vmatprep.subr.mxu0 %v763
      %806 = vmatpush1.msra.mxu0 %v762
      %807 = vmatprep.subr.mxu0 %v765
      %808 = vmatpush1.msra.mxu0 %v764
      %809 = vmatprep.subr.mxu0 %v767
      %810 = vmatpush1.msra.mxu0 %v766
      %811 = vmatprep.subr.mxu0 %v769
      %812 = vmatpush1.msra.mxu0 %v768
      %813 = vmatprep.subr.mxu0 %v771
      %814 = vmatpush1.msra.mxu0 %v770
      %815 = vmatprep.subr.mxu0 %v773
      %816 = vmatpush1.msra.mxu0 %v772
      %817 = vmatprep.subr.mxu0 %v775
      %818 = vmatpush1.msra.mxu0 %v774
      %819 = vmatprep.subr.mxu0 %v777
      %820 = vmatpush1.msra.mxu0 %v776
      %821 = vmatprep.subr.mxu0 %v779
      %822 = vmatpush1.msra.mxu0 %v778
      %823 = vmatprep.subr.mxu0 %v781
      %824 = vmatpush1.msra.mxu0 %v780
      %825 = vmatprep.subr.mxu0 0.0
      %826 = vmatpush1.msra.mxu0 0.0
      %827 = vmatprep.subr.mxu0 0.0
      %828 = vmatpush1.msra.mxu0 0.0
      %829 = vmatprep.subr.mxu0 0.0
      %830 = vmatpush1.msra.mxu0 0.0
      %831 = vmatprep.subr.mxu0 0.0
      %832 = vmatpush1.msra.mxu0 0.0
      %833 = vmatprep.subr.mxu0 0.0
      %834 = vmatpush1.msra.mxu0 0.0
      %835 = vmatprep.subr.mxu0 0.0
      %836 = vmatpush1.msra.mxu0 0.0
      %837 = vmatprep.subr.mxu0 0.0
      %838 = vmatpush1.msra.mxu0 0.0
      %839 = vmatprep.subr.mxu0 0.0
      %840 = vmatpush1.msra.mxu0 0.0
      %841 = vmatprep.subr.mxu0 0.0
      %842 = vmatpush1.msra.mxu0 0.0
      %843 = vmatprep.subr.mxu0 0.0
      %844 = vmatpush1.msra.mxu0 0.0
      %845 = vmatprep.subr.mxu0 0.0
      %846 = vmatpush1.msra.mxu0 0.0
      %847 = vmatprep.subr.mxu0 0.0
      %848 = vmatpush1.msra.mxu0 0.0
      %849 = vmatprep.subr.mxu0 0.0
      %850 = vmatpush1.msra.mxu0 0.0
      %851 = vmatprep.subr.mxu0 0.0
      %852 = vmatpush1.msra.mxu0 0.0
      %853 = vmatprep.subr.mxu0 0.0
      %854 = vmatpush1.msra.mxu0 0.0
      %855 = vmatprep.subr.mxu0 0.0
      %856 = vmatpush1.msra.mxu0 0.0
      %857 = vmatprep.mubr.f32.mxu0 0.0
      %858 = vmatmul.mubr.f32.gmra.mrb[0].mxu0 %v788
      %v859 = vpop.f32.mrb[0].mxu0
      %v860 = vadd.f32 0.0, %v859
      %v861 = vpop.f32.mrb[0].mxu0
      %v862 = vadd.f32 0.0, %v861
      %863 = vmatprep.mubr.f32.mxu0 0.0
      %864 = vmatmul.mubr.f32.gmra.mrb[0].mxu0 %v790
      %v865 = vpop.f32.mrb[0].mxu0
      %v866 = vadd.f32 0.0, %v865
      %v867 = vpop.f32.mrb[0].mxu0
      %v868 = vadd.f32 0.0, %v867
      %869 = vdwg.mxu0
      %v870 = vadd.f32 %v736, %v860
      %v871 = vadd.f32 %v738, %v862
      %v872 = vadd.f32 %v742, %v866
      %v873 = vadd.f32 %v744, %v868
      %v874 = vld [vmem:[#allocation2 + $0x8] sm:$0x80]
      %v875 = vld [vmem:[#allocation2 + $0x20] sm:$0xff]
      %v876 = vld [vmem:[#allocation2 + $0x38] sm:$0x7f]
      %v877 = vld [vmem:[%s4] sm:$0xff]
      %v878 = vld [vmem:[%s4 + $0x8] sm:$0xff]
      %v879 = vld [vmem:[%s4 + $0x10] sm:$0xff]
      %v880 = vld [vmem:[%s4 + $0x18] sm:$0xff]
      %v881 = vld [vmem:[%s4 + $0x20] sm:$0xff]
      %v882 = vld [vmem:[%s4 + $0x28] sm:$0xff]
      %v883 = vld [vmem:[%s4 + $0x30] sm:$0xff]
      %v884 = vld [vmem:[%s4 + $0x38] sm:$0xff]
      %v885 = vld [vmem:[%s4 + $0x40] sm:$0xff]
      %v886 = vld [vmem:[%s4 + $0x48] sm:$0xff]
      %v887 = vld [vmem:[%s4 + $0x50] sm:$0xff]
      %v888 = vld [vmem:[%s4 + $0x58] sm:$0xff]
      %v889 = vld [vmem:[%s4 + $0x60] sm:$0xff]
      %v890 = vld [vmem:[%s4 + $0x68] sm:$0xff]
      %v891 = vld [vmem:[%s4 + $0x70] sm:$0xff]
      %v892 = vld [vmem:[%s4 + $0x78] sm:$0xff]
      %v893 = vld [vmem:[%s4 + $0x80] sm:$0xff]
      %v894 = vld [vmem:[%s4 + $0x88] sm:$0xff]
      %v895 = vld [vmem:[%s4 + $0x90] sm:$0xff]
      %v896 = vld [vmem:[%s4 + $0x98] sm:$0xff]
      %v897 = vld [vmem:[%s4 + $0xa0] sm:$0xff]
      %v898 = vld [vmem:[%s4 + $0xa8] sm:$0xff]
      %v899 = vld [vmem:[%s4 + $0xb0] sm:$0xff]
      %v900 = vld [vmem:[%s4 + $0xb8] sm:$0xff]
      %v901 = vld [vmem:[%s4 + $0xc0] sm:$0xff]
      %v902 = vld [vmem:[%s4 + $0xc8] sm:$0xff]
      %v903 = vld [vmem:[%s4 + $0xd0] sm:$0xff]
      %v904 = vld [vmem:[%s4 + $0xd8] sm:$0xff]
      %v905 = vld [vmem:[%s4 + $0xe0] sm:$0xff]
      %v906 = vld [vmem:[%s4 + $0xe8] sm:$0xff]
      %v907 = vld [vmem:[%s4 + $0xf0] sm:$0xff]
      %v908 = vld [vmem:[%s4 + $0xf8] sm:$0xff]
      %v912 = vrot.slane %v874, 7
      %v913 = vrot.slane %v875, 7
      %v914 = vsel %vm661, %v912, %v913
      %v915 = vrot.slane %v876, 7
      %v916 = vsel %vm661, %v913, %v915
      %919 = vmatprep.subr.mxu0 %v878
      %920 = vmatpush1.msra.mxu0 %v877
      %921 = vmatprep.subr.mxu0 %v880
      %922 = vmatpush1.msra.mxu0 %v879
      %923 = vmatprep.subr.mxu0 %v882
      %924 = vmatpush1.msra.mxu0 %v881
      %925 = vmatprep.subr.mxu0 %v884
      %926 = vmatpush1.msra.mxu0 %v883
      %927 = vmatprep.subr.mxu0 %v886
      %928 = vmatpush1.msra.mxu0 %v885
      %929 = vmatprep.subr.mxu0 %v888
      %930 = vmatpush1.msra.mxu0 %v887
      %931 = vmatprep.subr.mxu0 %v890
      %932 = vmatpush1.msra.mxu0 %v889
      %933 = vmatprep.subr.mxu0 %v892
      %934 = vmatpush1.msra.mxu0 %v891
      %935 = vmatprep.subr.mxu0 %v894
      %936 = vmatpush1.msra.mxu0 %v893
      %937 = vmatprep.subr.mxu0 %v896
      %938 = vmatpush1.msra.mxu0 %v895
      %939 = vmatprep.subr.mxu0 %v898
      %940 = vmatpush1.msra.mxu0 %v897
      %941 = vmatprep.subr.mxu0 %v900
      %942 = vmatpush1.msra.mxu0 %v899
      %943 = vmatprep.subr.mxu0 %v902
      %944 = vmatpush1.msra.mxu0 %v901
      %945 = vmatprep.subr.mxu0 %v904
      %946 = vmatpush1.msra.mxu0 %v903
      %947 = vmatprep.subr.mxu0 %v906
      %948 = vmatpush1.msra.mxu0 %v905
      %949 = vmatprep.subr.mxu0 %v908
      %950 = vmatpush1.msra.mxu0 %v907
      %951 = vmatprep.subr.mxu0 0.0
      %952 = vmatpush1.msra.mxu0 0.0
      %953 = vmatprep.subr.mxu0 0.0
      %954 = vmatpush1.msra.mxu0 0.0
      %955 = vmatprep.subr.mxu0 0.0
      %956 = vmatpush1.msra.mxu0 0.0
      %957 = vmatprep.subr.mxu0 0.0
      %958 = vmatpush1.msra.mxu0 0.0
      %959 = vmatprep.subr.mxu0 0.0
      %960 = vmatpush1.msra.mxu0 0.0
      %961 = vmatprep.subr.mxu0 0.0
      %962 = vmatpush1.msra.mxu0 0.0
      %963 = vmatprep.subr.mxu0 0.0
      %964 = vmatpush1.msra.mxu0 0.0
      %965 = vmatprep.subr.mxu0 0.0
      %966 = vmatpush1.msra.mxu0 0.0
      %967 = vmatprep.subr.mxu0 0.0
      %968 = vmatpush1.msra.mxu0 0.0
      %969 = vmatprep.subr.mxu0 0.0
      %970 = vmatpush1.msra.mxu0 0.0
      %971 = vmatprep.subr.mxu0 0.0
      %972 = vmatpush1.msra.mxu0 0.0
      %973 = vmatprep.subr.mxu0 0.0
      %974 = vmatpush1.msra.mxu0 0.0
      %975 = vmatprep.subr.mxu0 0.0
      %976 = vmatpush1.msra.mxu0 0.0
      %977 = vmatprep.subr.mxu0 0.0
      %978 = vmatpush1.msra.mxu0 0.0
      %979 = vmatprep.subr.mxu0 0.0
      %980 = vmatpush1.msra.mxu0 0.0
      %981 = vmatprep.subr.mxu0 0.0
      %982 = vmatpush1.msra.mxu0 0.0
      %983 = vmatprep.mubr.f32.mxu0 0.0
      %984 = vmatmul.mubr.f32.gmra.mrb[0].mxu0 %v914
      %v985 = vpop.f32.mrb[0].mxu0
      %v986 = vadd.f32 0.0, %v985
      %v987 = vpop.f32.mrb[0].mxu0
      %v988 = vadd.f32 0.0, %v987
      %989 = vmatprep.mubr.f32.mxu0 0.0
      %990 = vmatmul.mubr.f32.gmra.mrb[0].mxu0 %v916
      %v991 = vpop.f32.mrb[0].mxu0
      %v992 = vadd.f32 0.0, %v991
      %v993 = vpop.f32.mrb[0].mxu0
      %v994 = vadd.f32 0.0, %v993
      %995 = vdwg.mxu0
      %v996 = vadd.f32 %v870, %v986
      %v997 = vadd.f32 %v871, %v988
      %v998 = vadd.f32 %v872, %v992
      %v999 = vadd.f32 %v873, %v994
      %v1000 = vld [vmem:[#allocation2 + $0x38] sm:$0xff]
      %s1001 = scalar_lea.vmem %s4, 256
      %v1002 = vld [vmem:[%s1001] sm:$0xff]
      %v1003 = vld [vmem:[%s1001 + $0x8] sm:$0xff]
      %v1004 = vld [vmem:[%s1001 + $0x10] sm:$0xff]
      %v1005 = vld [vmem:[%s1001 + $0x18] sm:$0xff]
      %v1006 = vld [vmem:[%s1001 + $0x20] sm:$0xff]
      %v1007 = vld [vmem:[%s1001 + $0x28] sm:$0xff]
      %v1008 = vld [vmem:[%s1001 + $0x30] sm:$0xff]
      %v1009 = vld [vmem:[%s1001 + $0x38] sm:$0xff]
      %v1010 = vld [vmem:[%s1001 + $0x40] sm:$0xff]
      %v1011 = vld [vmem:[%s1001 + $0x48] sm:$0xff]
      %v1012 = vld [vmem:[%s1001 + $0x50] sm:$0xff]
      %v1013 = vld [vmem:[%s1001 + $0x58] sm:$0xff]
      %v1014 = vld [vmem:[%s1001 + $0x60] sm:$0xff]
      %v1015 = vld [vmem:[%s1001 + $0x68] sm:$0xff]
      %v1016 = vld [vmem:[%s1001 + $0x70] sm:$0xff]
      %v1017 = vld [vmem:[%s1001 + $0x78] sm:$0xff]
      %v1018 = vld [vmem:[%s1001 + $0x80] sm:$0xff]
      %v1019 = vld [vmem:[%s1001 + $0x88] sm:$0xff]
      %v1020 = vld [vmem:[%s1001 + $0x90] sm:$0xff]
      %v1021 = vld [vmem:[%s1001 + $0x98] sm:$0xff]
      %v1022 = vld [vmem:[%s1001 + $0xa0] sm:$0xff]
      %v1023 = vld [vmem:[%s1001 + $0xa8] sm:$0xff]
      %v1024 = vld [vmem:[%s1001 + $0xb0] sm:$0xff]
      %v1025 = vld [vmem:[%s1001 + $0xb8] sm:$0xff]
      %v1026 = vld [vmem:[%s1001 + $0xc0] sm:$0xff]
      %v1027 = vld [vmem:[%s1001 + $0xc8] sm:$0xff]
      %v1028 = vld [vmem:[%s1001 + $0xd0] sm:$0xff]
      %v1029 = vld [vmem:[%s1001 + $0xd8] sm:$0xff]
      %v1030 = vld [vmem:[%s1001 + $0xe0] sm:$0xff]
      %v1031 = vld [vmem:[%s1001 + $0xe8] sm:$0xff]
      %v1032 = vld [vmem:[%s1001 + $0xf0] sm:$0xff]
      %v1033 = vld [vmem:[%s1001 + $0xf8] sm:$0xff]
      %1034 = vmatprep.subr.mxu0 %v1003
      %1035 = vmatpush1.msra.mxu0 %v1002
      %1036 = vmatprep.subr.mxu0 %v1005
      %1037 = vmatpush1.msra.mxu0 %v1004
      %1038 = vmatprep.subr.mxu0 %v1007
      %1039 = vmatpush1.msra.mxu0 %v1006
      %1040 = vmatprep.subr.mxu0 %v1009
      %1041 = vmatpush1.msra.mxu0 %v1008
      %1042 = vmatprep.subr.mxu0 %v1011
      %1043 = vmatpush1.msra.mxu0 %v1010
      %1044 = vmatprep.subr.mxu0 %v1013
      %1045 = vmatpush1.msra.mxu0 %v1012
      %1046 = vmatprep.subr.mxu0 %v1015
      %1047 = vmatpush1.msra.mxu0 %v1014
      %1048 = vmatprep.subr.mxu0 %v1017
      %1049 = vmatpush1.msra.mxu0 %v1016
      %1050 = vmatprep.subr.mxu0 %v1019
      %1051 = vmatpush1.msra.mxu0 %v1018
      %1052 = vmatprep.subr.mxu0 %v1021
      %1053 = vmatpush1.msra.mxu0 %v1020
      %1054 = vmatprep.subr.mxu0 %v1023
      %1055 = vmatpush1.msra.mxu0 %v1022
      %1056 = vmatprep.subr.mxu0 %v1025
      %1057 = vmatpush1.msra.mxu0 %v1024
      %1058 = vmatprep.subr.mxu0 %v1027
      %1059 = vmatpush1.msra.mxu0 %v1026
      %1060 = vmatprep.subr.mxu0 %v1029
      %1061 = vmatpush1.msra.mxu0 %v1028
      %1062 = vmatprep.subr.mxu0 %v1031
      %1063 = vmatpush1.msra.mxu0 %v1030
      %1064 = vmatprep.subr.mxu0 %v1033
      %1065 = vmatpush1.msra.mxu0 %v1032
      %1066 = vmatprep.subr.mxu0 0.0
      %1067 = vmatpush1.msra.mxu0 0.0
      %1068 = vmatprep.subr.mxu0 0.0
      %1069 = vmatpush1.msra.mxu0 0.0
      %1070 = vmatprep.subr.mxu0 0.0
      %1071 = vmatpush1.msra.mxu0 0.0
      %1072 = vmatprep.subr.mxu0 0.0
      %1073 = vmatpush1.msra.mxu0 0.0
      %1074 = vmatprep.subr.mxu0 0.0
      %1075 = vmatpush1.msra.mxu0 0.0
      %1076 = vmatprep.subr.mxu0 0.0
      %1077 = vmatpush1.msra.mxu0 0.0
      %1078 = vmatprep.subr.mxu0 0.0
      %1079 = vmatpush1.msra.mxu0 0.0
      %1080 = vmatprep.subr.mxu0 0.0
      %1081 = vmatpush1.msra.mxu0 0.0
      %1082 = vmatprep.subr.mxu0 0.0
      %1083 = vmatpush1.msra.mxu0 0.0
      %1084 = vmatprep.subr.mxu0 0.0
      %1085 = vmatpush1.msra.mxu0 0.0
      %1086 = vmatprep.subr.mxu0 0.0
      %1087 = vmatpush1.msra.mxu0 0.0
      %1088 = vmatprep.subr.mxu0 0.0
      %1089 = vmatpush1.msra.mxu0 0.0
      %1090 = vmatprep.subr.mxu0 0.0
      %1091 = vmatpush1.msra.mxu0 0.0
      %1092 = vmatprep.subr.mxu0 0.0
      %1093 = vmatpush1.msra.mxu0 0.0
      %1094 = vmatprep.subr.mxu0 0.0
      %1095 = vmatpush1.msra.mxu0 0.0
      %1096 = vmatprep.subr.mxu0 0.0
      %1097 = vmatpush1.msra.mxu0 0.0
      %1098 = vmatprep.mubr.f32.mxu0 0.0
      %1099 = vmatmul.mubr.f32.gmra.mrb[0].mxu0 %v875
      %v1100 = vpop.f32.mrb[0].mxu0
      %v1101 = vadd.f32 0.0, %v1100
      %v1102 = vpop.f32.mrb[0].mxu0
      %v1103 = vadd.f32 0.0, %v1102
      %1104 = vmatprep.mubr.f32.mxu0 0.0
      %1105 = vmatmul.mubr.f32.gmra.mrb[0].mxu0 %v1000
      %v1106 = vpop.f32.mrb[0].mxu0
      %v1107 = vadd.f32 0.0, %v1106
      %v1108 = vpop.f32.mrb[0].mxu0
      %v1109 = vadd.f32 0.0, %v1108
      %1110 = vdwg.mxu0
      %v1111 = vadd.f32 %v996, %v1101
      %v1112 = vadd.f32 %v997, %v1103
      %v1113 = vadd.f32 %v998, %v1107
      %v1114 = vadd.f32 %v999, %v1109
      %v1115 = vld [vmem:[#allocation2 + $0x20] sm:$0xfe]
      %v1116 = vld [vmem:[#allocation2 + $0x38] sm:$0xff]
      %v1117 = vld [vmem:[#allocation2 + $0x50] sm:$0x1]
      %s1118 = scalar_lea.vmem %s4, 512
      %v1119 = vld [vmem:[%s1118] sm:$0xff]
      %v1120 = vld [vmem:[%s1118 + $0x8] sm:$0xff]
      %v1121 = vld [vmem:[%s1118 + $0x10] sm:$0xff]
      %v1122 = vld [vmem:[%s1118 + $0x18] sm:$0xff]
      %v1123 = vld [vmem:[%s1118 + $0x20] sm:$0xff]
      %v1124 = vld [vmem:[%s1118 + $0x28] sm:$0xff]
      %v1125 = vld [vmem:[%s1118 + $0x30] sm:$0xff]
      %v1126 = vld [vmem:[%s1118 + $0x38] sm:$0xff]
      %v1127 = vld [vmem:[%s1118 + $0x40] sm:$0xff]
      %v1128 = vld [vmem:[%s1118 + $0x48] sm:$0xff]
      %v1129 = vld [vmem:[%s1118 + $0x50] sm:$0xff]
      %v1130 = vld [vmem:[%s1118 + $0x58] sm:$0xff]
      %v1131 = vld [vmem:[%s1118 + $0x60] sm:$0xff]
      %v1132 = vld [vmem:[%s1118 + $0x68] sm:$0xff]
      %v1133 = vld [vmem:[%s1118 + $0x70] sm:$0xff]
      %v1134 = vld [vmem:[%s1118 + $0x78] sm:$0xff]
      %v1135 = vld [vmem:[%s1118 + $0x80] sm:$0xff]
      %v1136 = vld [vmem:[%s1118 + $0x88] sm:$0xff]
      %v1137 = vld [vmem:[%s1118 + $0x90] sm:$0xff]
      %v1138 = vld [vmem:[%s1118 + $0x98] sm:$0xff]
      %v1139 = vld [vmem:[%s1118 + $0xa0] sm:$0xff]
      %v1140 = vld [vmem:[%s1118 + $0xa8] sm:$0xff]
      %v1141 = vld [vmem:[%s1118 + $0xb0] sm:$0xff]
      %v1142 = vld [vmem:[%s1118 + $0xb8] sm:$0xff]
      %v1143 = vld [vmem:[%s1118 + $0xc0] sm:$0xff]
      %v1144 = vld [vmem:[%s1118 + $0xc8] sm:$0xff]
      %v1145 = vld [vmem:[%s1118 + $0xd0] sm:$0xff]
      %v1146 = vld [vmem:[%s1118 + $0xd8] sm:$0xff]
      %v1147 = vld [vmem:[%s1118 + $0xe0] sm:$0xff]
      %v1148 = vld [vmem:[%s1118 + $0xe8] sm:$0xff]
      %v1149 = vld [vmem:[%s1118 + $0xf0] sm:$0xff]
      %v1150 = vld [vmem:[%s1118 + $0xf8] sm:$0xff]
      %v1154 = vrot.slane %v1115, 1
      %v1155 = vrot.slane %v1116, 1
      %v1156 = vsel %vm785, %v1154, %v1155
      %v1157 = vrot.slane %v1117, 1
      %v1158 = vsel %vm785, %v1155, %v1157
      %1161 = vmatprep.subr.mxu0 %v1120
      %1162 = vmatpush1.msra.mxu0 %v1119
      %1163 = vmatprep.subr.mxu0 %v1122
      %1164 = vmatpush1.msra.mxu0 %v1121
      %1165 = vmatprep.subr.mxu0 %v1124
      %1166 = vmatpush1.msra.mxu0 %v1123
      %1167 = vmatprep.subr.mxu0 %v1126
      %1168 = vmatpush1.msra.mxu0 %v1125
      %1169 = vmatprep.subr.mxu0 %v1128
      %1170 = vmatpush1.msra.mxu0 %v1127
      %1171 = vmatprep.subr.mxu0 %v1130
      %1172 = vmatpush1.msra.mxu0 %v1129
      %1173 = vmatprep.subr.mxu0 %v1132
      %1174 = vmatpush1.msra.mxu0 %v1131
      %1175 = vmatprep.subr.mxu0 %v1134
      %1176 = vmatpush1.msra.mxu0 %v1133
      %1177 = vmatprep.subr.mxu0 %v1136
      %1178 = vmatpush1.msra.mxu0 %v1135
      %1179 = vmatprep.subr.mxu0 %v1138
      %1180 = vmatpush1.msra.mxu0 %v1137
      %1181 = vmatprep.subr.mxu0 %v1140
      %1182 = vmatpush1.msra.mxu0 %v1139
      %1183 = vmatprep.subr.mxu0 %v1142
      %1184 = vmatpush1.msra.mxu0 %v1141
      %1185 = vmatprep.subr.mxu0 %v1144
      %1186 = vmatpush1.msra.mxu0 %v1143
      %1187 = vmatprep.subr.mxu0 %v1146
      %1188 = vmatpush1.msra.mxu0 %v1145
      %1189 = vmatprep.subr.mxu0 %v1148
      %1190 = vmatpush1.msra.mxu0 %v1147
      %1191 = vmatprep.subr.mxu0 %v1150
      %1192 = vmatpush1.msra.mxu0 %v1149
      %1193 = vmatprep.subr.mxu0 0.0
      %1194 = vmatpush1.msra.mxu0 0.0
      %1195 = vmatprep.subr.mxu0 0.0
      %1196 = vmatpush1.msra.mxu0 0.0
      %1197 = vmatprep.subr.mxu0 0.0
      %1198 = vmatpush1.msra.mxu0 0.0
      %1199 = vmatprep.subr.mxu0 0.0
      %1200 = vmatpush1.msra.mxu0 0.0
      %1201 = vmatprep.subr.mxu0 0.0
      %1202 = vmatpush1.msra.mxu0 0.0
      %1203 = vmatprep.subr.mxu0 0.0
      %1204 = vmatpush1.msra.mxu0 0.0
      %1205 = vmatprep.subr.mxu0 0.0
      %1206 = vmatpush1.msra.mxu0 0.0
      %1207 = vmatprep.subr.mxu0 0.0
      %1208 = vmatpush1.msra.mxu0 0.0
      %1209 = vmatprep.subr.mxu0 0.0
      %1210 = vmatpush1.msra.mxu0 0.0
      %1211 = vmatprep.subr.mxu0 0.0
      %1212 = vmatpush1.msra.mxu0 0.0
      %1213 = vmatprep.subr.mxu0 0.0
      %1214 = vmatpush1.msra.mxu0 0.0
      %1215 = vmatprep.subr.mxu0 0.0
      %1216 = vmatpush1.msra.mxu0 0.0
      %1217 = vmatprep.subr.mxu0 0.0
      %1218 = vmatpush1.msra.mxu0 0.0
      %1219 = vmatprep.subr.mxu0 0.0
      %1220 = vmatpush1.msra.mxu0 0.0
      %1221 = vmatprep.subr.mxu0 0.0
      %1222 = vmatpush1.msra.mxu0 0.0
      %1223 = vmatprep.subr.mxu0 0.0
      %1224 = vmatpush1.msra.mxu0 0.0
      %1225 = vmatprep.mubr.f32.mxu0 0.0
      %1226 = vmatmul.mubr.f32.gmra.mrb[0].mxu0 %v1156
      %v1227 = vpop.f32.mrb[0].mxu0
      %v1228 = vadd.f32 0.0, %v1227
      %v1229 = vpop.f32.mrb[0].mxu0
      %v1230 = vadd.f32 0.0, %v1229
      %1231 = vmatprep.mubr.f32.mxu0 0.0
      %1232 = vmatmul.mubr.f32.gmra.mrb[0].mxu0 %v1158
      %v1233 = vpop.f32.mrb[0].mxu0
      %v1234 = vadd.f32 0.0, %v1233
      %v1235 = vpop.f32.mrb[0].mxu0
      %v1236 = vadd.f32 0.0, %v1235
      %1237 = vdwg.mxu0
      %v1238 = vadd.f32 %v1111, %v1228
      %v1239 = vadd.f32 %v1112, %v1230
      %v1240 = vadd.f32 %v1113, %v1234
      %v1241 = vadd.f32 %v1114, %v1236
      %v1242 = vld [vmem:[#allocation2 + $0x10] sm:$0x80]
      %v1243 = vld [vmem:[#allocation2 + $0x28] sm:$0xff]
      %v1244 = vld [vmem:[#allocation2 + $0x40] sm:$0x7f]
      %v1245 = vld [vmem:[%s5] sm:$0xff]
      %v1246 = vld [vmem:[%s5 + $0x8] sm:$0xff]
      %v1247 = vld [vmem:[%s5 + $0x10] sm:$0xff]
      %v1248 = vld [vmem:[%s5 + $0x18] sm:$0xff]
      %v1249 = vld [vmem:[%s5 + $0x20] sm:$0xff]
      %v1250 = vld [vmem:[%s5 + $0x28] sm:$0xff]
      %v1251 = vld [vmem:[%s5 + $0x30] sm:$0xff]
      %v1252 = vld [vmem:[%s5 + $0x38] sm:$0xff]
      %v1253 = vld [vmem:[%s5 + $0x40] sm:$0xff]
      %v1254 = vld [vmem:[%s5 + $0x48] sm:$0xff]
      %v1255 = vld [vmem:[%s5 + $0x50] sm:$0xff]
      %v1256 = vld [vmem:[%s5 + $0x58] sm:$0xff]
      %v1257 = vld [vmem:[%s5 + $0x60] sm:$0xff]
      %v1258 = vld [vmem:[%s5 + $0x68] sm:$0xff]
      %v1259 = vld [vmem:[%s5 + $0x70] sm:$0xff]
      %v1260 = vld [vmem:[%s5 + $0x78] sm:$0xff]
      %v1261 = vld [vmem:[%s5 + $0x80] sm:$0xff]
      %v1262 = vld [vmem:[%s5 + $0x88] sm:$0xff]
      %v1263 = vld [vmem:[%s5 + $0x90] sm:$0xff]
      %v1264 = vld [vmem:[%s5 + $0x98] sm:$0xff]
      %v1265 = vld [vmem:[%s5 + $0xa0] sm:$0xff]
      %v1266 = vld [vmem:[%s5 + $0xa8] sm:$0xff]
      %v1267 = vld [vmem:[%s5 + $0xb0] sm:$0xff]
      %v1268 = vld [vmem:[%s5 + $0xb8] sm:$0xff]
      %v1269 = vld [vmem:[%s5 + $0xc0] sm:$0xff]
      %v1270 = vld [vmem:[%s5 + $0xc8] sm:$0xff]
      %v1271 = vld [vmem:[%s5 + $0xd0] sm:$0xff]
      %v1272 = vld [vmem:[%s5 + $0xd8] sm:$0xff]
      %v1273 = vld [vmem:[%s5 + $0xe0] sm:$0xff]
      %v1274 = vld [vmem:[%s5 + $0xe8] sm:$0xff]
      %v1275 = vld [vmem:[%s5 + $0xf0] sm:$0xff]
      %v1276 = vld [vmem:[%s5 + $0xf8] sm:$0xff]
      %v1280 = vrot.slane %v1242, 7
      %v1281 = vrot.slane %v1243, 7
      %v1282 = vsel %vm661, %v1280, %v1281
      %v1283 = vrot.slane %v1244, 7
      %v1284 = vsel %vm661, %v1281, %v1283
      %1287 = vmatprep.subr.mxu0 %v1246
      %1288 = vmatpush1.msra.mxu0 %v1245
      %1289 = vmatprep.subr.mxu0 %v1248
      %1290 = vmatpush1.msra.mxu0 %v1247
      %1291 = vmatprep.subr.mxu0 %v1250
      %1292 = vmatpush1.msra.mxu0 %v1249
      %1293 = vmatprep.subr.mxu0 %v1252
      %1294 = vmatpush1.msra.mxu0 %v1251
      %1295 = vmatprep.subr.mxu0 %v1254
      %1296 = vmatpush1.msra.mxu0 %v1253
      %1297 = vmatprep.subr.mxu0 %v1256
      %1298 = vmatpush1.msra.mxu0 %v1255
      %1299 = vmatprep.subr.mxu0 %v1258
      %1300 = vmatpush1.msra.mxu0 %v1257
      %1301 = vmatprep.subr.mxu0 %v1260
      %1302 = vmatpush1.msra.mxu0 %v1259
      %1303 = vmatprep.subr.mxu0 %v1262
      %1304 = vmatpush1.msra.mxu0 %v1261
      %1305 = vmatprep.subr.mxu0 %v1264
      %1306 = vmatpush1.msra.mxu0 %v1263
      %1307 = vmatprep.subr.mxu0 %v1266
      %1308 = vmatpush1.msra.mxu0 %v1265
      %1309 = vmatprep.subr.mxu0 %v1268
      %1310 = vmatpush1.msra.mxu0 %v1267
      %1311 = vmatprep.subr.mxu0 %v1270
      %1312 = vmatpush1.msra.mxu0 %v1269
      %1313 = vmatprep.subr.mxu0 %v1272
      %1314 = vmatpush1.msra.mxu0 %v1271
      %1315 = vmatprep.subr.mxu0 %v1274
      %1316 = vmatpush1.msra.mxu0 %v1273
      %1317 = vmatprep.subr.mxu0 %v1276
      %1318 = vmatpush1.msra.mxu0 %v1275
      %1319 = vmatprep.subr.mxu0 0.0
      %1320 = vmatpush1.msra.mxu0 0.0
      %1321 = vmatprep.subr.mxu0 0.0
      %1322 = vmatpush1.msra.mxu0 0.0
      %1323 = vmatprep.subr.mxu0 0.0
      %1324 = vmatpush1.msra.mxu0 0.0
      %1325 = vmatprep.subr.mxu0 0.0
      %1326 = vmatpush1.msra.mxu0 0.0
      %1327 = vmatprep.subr.mxu0 0.0
      %1328 = vmatpush1.msra.mxu0 0.0
      %1329 = vmatprep.subr.mxu0 0.0
      %1330 = vmatpush1.msra.mxu0 0.0
      %1331 = vmatprep.subr.mxu0 0.0
      %1332 = vmatpush1.msra.mxu0 0.0
      %1333 = vmatprep.subr.mxu0 0.0
      %1334 = vmatpush1.msra.mxu0 0.0
      %1335 = vmatprep.subr.mxu0 0.0
      %1336 = vmatpush1.msra.mxu0 0.0
      %1337 = vmatprep.subr.mxu0 0.0
      %1338 = vmatpush1.msra.mxu0 0.0
      %1339 = vmatprep.subr.mxu0 0.0
      %1340 = vmatpush1.msra.mxu0 0.0
      %1341 = vmatprep.subr.mxu0 0.0
      %1342 = vmatpush1.msra.mxu0 0.0
      %1343 = vmatprep.subr.mxu0 0.0
      %1344 = vmatpush1.msra.mxu0 0.0
      %1345 = vmatprep.subr.mxu0 0.0
      %1346 = vmatpush1.msra.mxu0 0.0
      %1347 = vmatprep.subr.mxu0 0.0
      %1348 = vmatpush1.msra.mxu0 0.0
      %1349 = vmatprep.subr.mxu0 0.0
      %1350 = vmatpush1.msra.mxu0 0.0
      %1351 = vmatprep.mubr.f32.mxu0 0.0
      %1352 = vmatmul.mubr.f32.gmra.mrb[0].mxu0 %v1282
      %v1353 = vpop.f32.mrb[0].mxu0
      %v1354 = vadd.f32 0.0, %v1353
      %v1355 = vpop.f32.mrb[0].mxu0
      %v1356 = vadd.f32 0.0, %v1355
      %1357 = vmatprep.mubr.f32.mxu0 0.0
      %1358 = vmatmul.mubr.f32.gmra.mrb[0].mxu0 %v1284
      %v1359 = vpop.f32.mrb[0].mxu0
      %v1360 = vadd.f32 0.0, %v1359
      %v1361 = vpop.f32.mrb[0].mxu0
      %v1362 = vadd.f32 0.0, %v1361
      %1363 = vdwg.mxu0
      %v1364 = vadd.f32 %v1238, %v1354
      %v1365 = vadd.f32 %v1239, %v1356
      %v1366 = vadd.f32 %v1240, %v1360
      %v1367 = vadd.f32 %v1241, %v1362
      %v1368 = vld [vmem:[#allocation2 + $0x40] sm:$0xff]
      %s1369 = scalar_lea.vmem %s5, 256
      %v1370 = vld [vmem:[%s1369] sm:$0xff]
      %v1371 = vld [vmem:[%s1369 + $0x8] sm:$0xff]
      %v1372 = vld [vmem:[%s1369 + $0x10] sm:$0xff]
      %v1373 = vld [vmem:[%s1369 + $0x18] sm:$0xff]
      %v1374 = vld [vmem:[%s1369 + $0x20] sm:$0xff]
      %v1375 = vld [vmem:[%s1369 + $0x28] sm:$0xff]
      %v1376 = vld [vmem:[%s1369 + $0x30] sm:$0xff]
      %v1377 = vld [vmem:[%s1369 + $0x38] sm:$0xff]
      %v1378 = vld [vmem:[%s1369 + $0x40] sm:$0xff]
      %v1379 = vld [vmem:[%s1369 + $0x48] sm:$0xff]
      %v1380 = vld [vmem:[%s1369 + $0x50] sm:$0xff]
      %v1381 = vld [vmem:[%s1369 + $0x58] sm:$0xff]
      %v1382 = vld [vmem:[%s1369 + $0x60] sm:$0xff]
      %v1383 = vld [vmem:[%s1369 + $0x68] sm:$0xff]
      %v1384 = vld [vmem:[%s1369 + $0x70] sm:$0xff]
      %v1385 = vld [vmem:[%s1369 + $0x78] sm:$0xff]
      %v1386 = vld [vmem:[%s1369 + $0x80] sm:$0xff]
      %v1387 = vld [vmem:[%s1369 + $0x88] sm:$0xff]
      %v1388 = vld [vmem:[%s1369 + $0x90] sm:$0xff]
      %v1389 = vld [vmem:[%s1369 + $0x98] sm:$0xff]
      %v1390 = vld [vmem:[%s1369 + $0xa0] sm:$0xff]
      %v1391 = vld [vmem:[%s1369 + $0xa8] sm:$0xff]
      %v1392 = vld [vmem:[%s1369 + $0xb0] sm:$0xff]
      %v1393 = vld [vmem:[%s1369 + $0xb8] sm:$0xff]
      %v1394 = vld [vmem:[%s1369 + $0xc0] sm:$0xff]
      %v1395 = vld [vmem:[%s1369 + $0xc8] sm:$0xff]
      %v1396 = vld [vmem:[%s1369 + $0xd0] sm:$0xff]
      %v1397 = vld [vmem:[%s1369 + $0xd8] sm:$0xff]
      %v1398 = vld [vmem:[%s1369 + $0xe0] sm:$0xff]
      %v1399 = vld [vmem:[%s1369 + $0xe8] sm:$0xff]
      %v1400 = vld [vmem:[%s1369 + $0xf0] sm:$0xff]
      %v1401 = vld [vmem:[%s1369 + $0xf8] sm:$0xff]
      %1402 = vmatprep.subr.mxu0 %v1371
      %1403 = vmatpush1.msra.mxu0 %v1370
      %1404 = vmatprep.subr.mxu0 %v1373
      %1405 = vmatpush1.msra.mxu0 %v1372
      %1406 = vmatprep.subr.mxu0 %v1375
      %1407 = vmatpush1.msra.mxu0 %v1374
      %1408 = vmatprep.subr.mxu0 %v1377
      %1409 = vmatpush1.msra.mxu0 %v1376
      %1410 = vmatprep.subr.mxu0 %v1379
      %1411 = vmatpush1.msra.mxu0 %v1378
      %1412 = vmatprep.subr.mxu0 %v1381
      %1413 = vmatpush1.msra.mxu0 %v1380
      %1414 = vmatprep.subr.mxu0 %v1383
      %1415 = vmatpush1.msra.mxu0 %v1382
      %1416 = vmatprep.subr.mxu0 %v1385
      %1417 = vmatpush1.msra.mxu0 %v1384
      %1418 = vmatprep.subr.mxu0 %v1387
      %1419 = vmatpush1.msra.mxu0 %v1386
      %1420 = vmatprep.subr.mxu0 %v1389
      %1421 = vmatpush1.msra.mxu0 %v1388
      %1422 = vmatprep.subr.mxu0 %v1391
      %1423 = vmatpush1.msra.mxu0 %v1390
      %1424 = vmatprep.subr.mxu0 %v1393
      %1425 = vmatpush1.msra.mxu0 %v1392
      %1426 = vmatprep.subr.mxu0 %v1395
      %1427 = vmatpush1.msra.mxu0 %v1394
      %1428 = vmatprep.subr.mxu0 %v1397
      %1429 = vmatpush1.msra.mxu0 %v1396
      %1430 = vmatprep.subr.mxu0 %v1399
      %1431 = vmatpush1.msra.mxu0 %v1398
      %1432 = vmatprep.subr.mxu0 %v1401
      %1433 = vmatpush1.msra.mxu0 %v1400
      %1434 = vmatprep.subr.mxu0 0.0
      %1435 = vmatpush1.msra.mxu0 0.0
      %1436 = vmatprep.subr.mxu0 0.0
      %1437 = vmatpush1.msra.mxu0 0.0
      %1438 = vmatprep.subr.mxu0 0.0
      %1439 = vmatpush1.msra.mxu0 0.0
      %1440 = vmatprep.subr.mxu0 0.0
      %1441 = vmatpush1.msra.mxu0 0.0
      %1442 = vmatprep.subr.mxu0 0.0
      %1443 = vmatpush1.msra.mxu0 0.0
      %1444 = vmatprep.subr.mxu0 0.0
      %1445 = vmatpush1.msra.mxu0 0.0
      %1446 = vmatprep.subr.mxu0 0.0
      %1447 = vmatpush1.msra.mxu0 0.0
      %1448 = vmatprep.subr.mxu0 0.0
      %1449 = vmatpush1.msra.mxu0 0.0
      %1450 = vmatprep.subr.mxu0 0.0
      %1451 = vmatpush1.msra.mxu0 0.0
      %1452 = vmatprep.subr.mxu0 0.0
      %1453 = vmatpush1.msra.mxu0 0.0
      %1454 = vmatprep.subr.mxu0 0.0
      %1455 = vmatpush1.msra.mxu0 0.0
      %1456 = vmatprep.subr.mxu0 0.0
      %1457 = vmatpush1.msra.mxu0 0.0
      %1458 = vmatprep.subr.mxu0 0.0
      %1459 = vmatpush1.msra.mxu0 0.0
      %1460 = vmatprep.subr.mxu0 0.0
      %1461 = vmatpush1.msra.mxu0 0.0
      %1462 = vmatprep.subr.mxu0 0.0
      %1463 = vmatpush1.msra.mxu0 0.0
      %1464 = vmatprep.subr.mxu0 0.0
      %1465 = vmatpush1.msra.mxu0 0.0
      %1466 = vmatprep.mubr.f32.mxu0 0.0
      %1467 = vmatmul.mubr.f32.gmra.mrb[0].mxu0 %v1243
      %v1468 = vpop.f32.mrb[0].mxu0
      %v1469 = vadd.f32 0.0, %v1468
      %v1470 = vpop.f32.mrb[0].mxu0
      %v1471 = vadd.f32 0.0, %v1470
      %1472 = vmatprep.mubr.f32.mxu0 0.0
      %1473 = vmatmul.mubr.f32.gmra.mrb[0].mxu0 %v1368
      %v1474 = vpop.f32.mrb[0].mxu0
      %v1475 = vadd.f32 0.0, %v1474
      %v1476 = vpop.f32.mrb[0].mxu0
      %v1477 = vadd.f32 0.0, %v1476
      %1478 = vdwg.mxu0
      %v1479 = vadd.f32 %v1364, %v1469
      %v1480 = vadd.f32 %v1365, %v1471
      %v1481 = vadd.f32 %v1366, %v1475
      %v1482 = vadd.f32 %v1367, %v1477
      %v1483 = vld [vmem:[#allocation2 + $0x28] sm:$0xfe]
      %v1484 = vld [vmem:[#allocation2 + $0x40] sm:$0xff]
      %v1485 = vld [vmem:[#allocation2 + $0x58] sm:$0x1]
      %s1486 = scalar_lea.vmem %s5, 512
      %v1487 = vld [vmem:[%s1486] sm:$0xff]
      %v1488 = vld [vmem:[%s1486 + $0x8] sm:$0xff]
      %v1489 = vld [vmem:[%s1486 + $0x10] sm:$0xff]
      %v1490 = vld [vmem:[%s1486 + $0x18] sm:$0xff]
      %v1491 = vld [vmem:[%s1486 + $0x20] sm:$0xff]
      %v1492 = vld [vmem:[%s1486 + $0x28] sm:$0xff]
      %v1493 = vld [vmem:[%s1486 + $0x30] sm:$0xff]
      %v1494 = vld [vmem:[%s1486 + $0x38] sm:$0xff]
      %v1495 = vld [vmem:[%s1486 + $0x40] sm:$0xff]
      %v1496 = vld [vmem:[%s1486 + $0x48] sm:$0xff]
      %v1497 = vld [vmem:[%s1486 + $0x50] sm:$0xff]
      %v1498 = vld [vmem:[%s1486 + $0x58] sm:$0xff]
      %v1499 = vld [vmem:[%s1486 + $0x60] sm:$0xff]
      %v1500 = vld [vmem:[%s1486 + $0x68] sm:$0xff]
      %v1501 = vld [vmem:[%s1486 + $0x70] sm:$0xff]
      %v1502 = vld [vmem:[%s1486 + $0x78] sm:$0xff]
      %v1503 = vld [vmem:[%s1486 + $0x80] sm:$0xff]
      %v1504 = vld [vmem:[%s1486 + $0x88] sm:$0xff]
      %v1505 = vld [vmem:[%s1486 + $0x90] sm:$0xff]
      %v1506 = vld [vmem:[%s1486 + $0x98] sm:$0xff]
      %v1507 = vld [vmem:[%s1486 + $0xa0] sm:$0xff]
      %v1508 = vld [vmem:[%s1486 + $0xa8] sm:$0xff]
      %v1509 = vld [vmem:[%s1486 + $0xb0] sm:$0xff]
      %v1510 = vld [vmem:[%s1486 + $0xb8] sm:$0xff]
      %v1511 = vld [vmem:[%s1486 + $0xc0] sm:$0xff]
      %v1512 = vld [vmem:[%s1486 + $0xc8] sm:$0xff]
      %v1513 = vld [vmem:[%s1486 + $0xd0] sm:$0xff]
      %v1514 = vld [vmem:[%s1486 + $0xd8] sm:$0xff]
      %v1515 = vld [vmem:[%s1486 + $0xe0] sm:$0xff]
      %v1516 = vld [vmem:[%s1486 + $0xe8] sm:$0xff]
      %v1517 = vld [vmem:[%s1486 + $0xf0] sm:$0xff]
      %v1518 = vld [vmem:[%s1486 + $0xf8] sm:$0xff]
      %v1522 = vrot.slane %v1483, 1
      %v1523 = vrot.slane %v1484, 1
      %v1524 = vsel %vm785, %v1522, %v1523
      %v1525 = vrot.slane %v1485, 1
      %v1526 = vsel %vm785, %v1523, %v1525
      %1529 = vmatprep.subr.mxu0 %v1488
      %1530 = vmatpush1.msra.mxu0 %v1487
      %1531 = vmatprep.subr.mxu0 %v1490
      %1532 = vmatpush1.msra.mxu0 %v1489
      %1533 = vmatprep.subr.mxu0 %v1492
      %1534 = vmatpush1.msra.mxu0 %v1491
      %1535 = vmatprep.subr.mxu0 %v1494
      %1536 = vmatpush1.msra.mxu0 %v1493
      %1537 = vmatprep.subr.mxu0 %v1496
      %1538 = vmatpush1.msra.mxu0 %v1495
      %1539 = vmatprep.subr.mxu0 %v1498
      %1540 = vmatpush1.msra.mxu0 %v1497
      %1541 = vmatprep.subr.mxu0 %v1500
      %1542 = vmatpush1.msra.mxu0 %v1499
      %1543 = vmatprep.subr.mxu0 %v1502
      %1544 = vmatpush1.msra.mxu0 %v1501
      %1545 = vmatprep.subr.mxu0 %v1504
      %1546 = vmatpush1.msra.mxu0 %v1503
      %1547 = vmatprep.subr.mxu0 %v1506
      %1548 = vmatpush1.msra.mxu0 %v1505
      %1549 = vmatprep.subr.mxu0 %v1508
      %1550 = vmatpush1.msra.mxu0 %v1507
      %1551 = vmatprep.subr.mxu0 %v1510
      %1552 = vmatpush1.msra.mxu0 %v1509
      %1553 = vmatprep.subr.mxu0 %v1512
      %1554 = vmatpush1.msra.mxu0 %v1511
      %1555 = vmatprep.subr.mxu0 %v1514
      %1556 = vmatpush1.msra.mxu0 %v1513
      %1557 = vmatprep.subr.mxu0 %v1516
      %1558 = vmatpush1.msra.mxu0 %v1515
      %1559 = vmatprep.subr.mxu0 %v1518
      %1560 = vmatpush1.msra.mxu0 %v1517
      %1561 = vmatprep.subr.mxu0 0.0
      %1562 = vmatpush1.msra.mxu0 0.0
      %1563 = vmatprep.subr.mxu0 0.0
      %1564 = vmatpush1.msra.mxu0 0.0
      %1565 = vmatprep.subr.mxu0 0.0
      %1566 = vmatpush1.msra.mxu0 0.0
      %1567 = vmatprep.subr.mxu0 0.0
      %1568 = vmatpush1.msra.mxu0 0.0
      %1569 = vmatprep.subr.mxu0 0.0
      %1570 = vmatpush1.msra.mxu0 0.0
      %1571 = vmatprep.subr.mxu0 0.0
      %1572 = vmatpush1.msra.mxu0 0.0
      %1573 = vmatprep.subr.mxu0 0.0
      %1574 = vmatpush1.msra.mxu0 0.0
      %1575 = vmatprep.subr.mxu0 0.0
      %1576 = vmatpush1.msra.mxu0 0.0
      %1577 = vmatprep.subr.mxu0 0.0
      %1578 = vmatpush1.msra.mxu0 0.0
      %1579 = vmatprep.subr.mxu0 0.0
      %1580 = vmatpush1.msra.mxu0 0.0
      %1581 = vmatprep.subr.mxu0 0.0
      %1582 = vmatpush1.msra.mxu0 0.0
      %1583 = vmatprep.subr.mxu0 0.0
      %1584 = vmatpush1.msra.mxu0 0.0
      %1585 = vmatprep.subr.mxu0 0.0
      %1586 = vmatpush1.msra.mxu0 0.0
      %1587 = vmatprep.subr.mxu0 0.0
      %1588 = vmatpush1.msra.mxu0 0.0
      %1589 = vmatprep.subr.mxu0 0.0
      %1590 = vmatpush1.msra.mxu0 0.0
      %1591 = vmatprep.subr.mxu0 0.0
      %1592 = vmatpush1.msra.mxu0 0.0
      %1593 = vmatprep.mubr.f32.mxu0 0.0
      %1594 = vmatmul.mubr.f32.gmra.mrb[0].mxu0 %v1524
      %v1595 = vpop.f32.mrb[0].mxu0
      %v1596 = vadd.f32 0.0, %v1595
      %v1597 = vpop.f32.mrb[0].mxu0
      %v1598 = vadd.f32 0.0, %v1597
      %1599 = vmatprep.mubr.f32.mxu0 0.0
      %1600 = vmatmul.mubr.f32.gmra.mrb[0].mxu0 %v1526
      %v1601 = vpop.f32.mrb[0].mxu0
      %v1602 = vadd.f32 0.0, %v1601
      %v1603 = vpop.f32.mrb[0].mxu0
      %v1604 = vadd.f32 0.0, %v1603
      %1605 = vdwg.mxu0
      %v1606 = vadd.f32 %v1479, %v1596
      %v1607 = vadd.f32 %v1480, %v1598
      %v1608 = vadd.f32 %v1481, %v1602
      %v1609 = vadd.f32 %v1482, %v1604
      %v1610 = vld [vmem:[%s6] sm:$0x3]
      %v1612 = vlaneseq
      %v1613 = vshrl.u32 %v1612, 7
      %v1614 = vsub.s32 0, %v1613
      %v1615 = vrot.slane %v1610, %v1614
      %v1616 = vlaneseq
      %v1617 = vshrl.u32 %v1616, 7
      %v1618 = vsub.s32 1, %v1617
      %v1619 = vrot.slane %v1610, %v1618
      %v1622 = vadd.f32 %v1606, %v1615
      %v1623 = vadd.f32 %v1607, %v1619
      %v1624 = vadd.f32 %v1608, %v1615
      %v1625 = vadd.f32 %v1609, %v1619
      %v1626 = vxor.u32 %v1622, 2147483648
      %v1627 = vxor.u32 %v1623, 2147483648
      %v1628 = vxor.u32 %v1624, 2147483648
      %v1629 = vxor.u32 %v1625, 2147483648
      %v1630 = vmul.f32 %v1626, 1.442695
      %v1631 = vpow.pop %v1630
      %v1632 = vmul.f32 %v1627, 1.442695
      %v1633 = vpow.pop %v1632
      %v1634 = vmul.f32 %v1628, 1.442695
      %v1635 = vpow.pop %v1634
      %v1636 = vmul.f32 %v1629, 1.442695
      %v1637 = vpow.pop %v1636
      %v1638 = vadd.f32 %v1631, 1.0
      %v1639 = vadd.f32 %v1633, 1.0
      %v1640 = vadd.f32 %v1635, 1.0
      %v1641 = vadd.f32 %v1637, 1.0
      %v1642 = vrcp.pop %v1638
      %v1643 = vmul.f32 1.0, %v1642
      %v1644 = vrcp.pop %v1639
      %v1645 = vmul.f32 1.0, %v1644
      %v1646 = vrcp.pop %v1640
      %v1647 = vmul.f32 1.0, %v1646
      %v1648 = vrcp.pop %v1641
      %v1649 = vmul.f32 1.0, %v1648
      %v1650 = vmul.f32 %v1622, %v1643
      %v1651 = vmul.f32 %v1623, %v1645
      %v1652 = vmul.f32 %v1624, %v1647
      %v1653 = vmul.f32 %v1625, %v1649
      %v1654 = vadd.f32 %v1650, %v1652
      %v1655 = vrot.slane %v1654, 4
      %v1656 = vadd.f32 %v1654, %v1655
      %v1657 = vrot.slane %v1656, 2
      %v1658 = vadd.f32 %v1656, %v1657
      %v1659 = vrot.slane %v1658, 1
      %v1660 = vadd.f32 %v1658, %v1659
      %v1661 = vadd.f32 %v1651, %v1653
      %v1662 = vrot.slane %v1661, 4
      %v1663 = vadd.f32 %v1661, %v1662
      %v1664 = vrot.slane %v1663, 2
      %v1665 = vadd.f32 %v1663, %v1664
      %v1666 = vrot.slane %v1665, 1
      %v1667 = vadd.f32 %v1665, %v1666
      %v1668 = vld [vmem:[%s7] sm:$0xff]
      %v1669 = vld [vmem:[%s7 + $0x8] sm:$0xff]
      %v1670 = vld [vmem:[%s7 + $0x10] sm:$0xff]
      %v1671 = vld [vmem:[%s7 + $0x18] sm:$0xff]
      %v1672 = vld [vmem:[%s7 + $0x20] sm:$0xff]
      %v1673 = vld [vmem:[%s7 + $0x28] sm:$0xff]
      %v1674 = vld [vmem:[%s7 + $0x30] sm:$0xff]
      %v1675 = vld [vmem:[%s7 + $0x38] sm:$0xff]
      %v1676 = vld [vmem:[%s7 + $0x40] sm:$0xff]
      %v1677 = vld [vmem:[%s7 + $0x48] sm:$0xff]
      %v1678 = vld [vmem:[%s7 + $0x50] sm:$0xff]
      %v1679 = vld [vmem:[%s7 + $0x58] sm:$0xff]
      %v1680 = vld [vmem:[%s7 + $0x60] sm:$0xff]
      %v1681 = vld [vmem:[%s7 + $0x68] sm:$0xff]
      %v1682 = vld [vmem:[%s7 + $0x70] sm:$0xff]
      %v1683 = vld [vmem:[%s7 + $0x78] sm:$0xff]
      %v1684 = vld [vmem:[%s7 + $0x80] sm:$0xff]
      %v1685 = vld [vmem:[%s7 + $0x88] sm:$0xff]
      %v1686 = vld [vmem:[%s7 + $0x90] sm:$0xff]
      %v1687 = vld [vmem:[%s7 + $0x98] sm:$0xff]
      %v1688 = vld [vmem:[%s7 + $0xa0] sm:$0xff]
      %v1689 = vld [vmem:[%s7 + $0xa8] sm:$0xff]
      %v1690 = vld [vmem:[%s7 + $0xb0] sm:$0xff]
      %v1691 = vld [vmem:[%s7 + $0xb8] sm:$0xff]
      %v1692 = vld [vmem:[%s7 + $0xc0] sm:$0xff]
      %v1693 = vld [vmem:[%s7 + $0xc8] sm:$0xff]
      %v1694 = vld [vmem:[%s7 + $0xd0] sm:$0xff]
      %v1695 = vld [vmem:[%s7 + $0xd8] sm:$0xff]
      %v1696 = vld [vmem:[%s7 + $0xe0] sm:$0xff]
      %v1697 = vld [vmem:[%s7 + $0xe8] sm:$0xff]
      %v1698 = vld [vmem:[%s7 + $0xf0] sm:$0xff]
      %v1699 = vld [vmem:[%s7 + $0xf8] sm:$0xff]
      %1700 = vmatprep.subr.mxu0 0.0
      %1701 = vmatpush1.msra.mxu0 %v1668
      %1702 = vmatprep.subr.mxu0 0.0
      %1703 = vmatpush1.msra.mxu0 %v1669
      %1704 = vmatprep.subr.mxu0 0.0
      %1705 = vmatpush1.msra.mxu0 %v1670
      %1706 = vmatprep.subr.mxu0 0.0
      %1707 = vmatpush1.msra.mxu0 %v1671
      %1708 = vmatprep.subr.mxu0 0.0
      %1709 = vmatpush1.msra.mxu0 %v1672
      %1710 = vmatprep.subr.mxu0 0.0
      %1711 = vmatpush1.msra.mxu0 %v1673
      %1712 = vmatprep.subr.mxu0 0.0
      %1713 = vmatpush1.msra.mxu0 %v1674
      %1714 = vmatprep.subr.mxu0 0.0
      %1715 = vmatpush1.msra.mxu0 %v1675
      %1716 = vmatprep.subr.mxu0 0.0
      %1717 = vmatpush1.msra.mxu0 %v1676
      %1718 = vmatprep.subr.mxu0 0.0
      %1719 = vmatpush1.msra.mxu0 %v1677
      %1720 = vmatprep.subr.mxu0 0.0
      %1721 = vmatpush1.msra.mxu0 %v1678
      %1722 = vmatprep.subr.mxu0 0.0
      %1723 = vmatpush1.msra.mxu0 %v1679
      %1724 = vmatprep.subr.mxu0 0.0
      %1725 = vmatpush1.msra.mxu0 %v1680
      %1726 = vmatprep.subr.mxu0 0.0
      %1727 = vmatpush1.msra.mxu0 %v1681
      %1728 = vmatprep.subr.mxu0 0.0
      %1729 = vmatpush1.msra.mxu0 %v1682
      %1730 = vmatprep.subr.mxu0 0.0
      %1731 = vmatpush1.msra.mxu0 %v1683
      %1732 = vmatprep.subr.mxu0 0.0
      %1733 = vmatpush1.msra.mxu0 %v1684
      %1734 = vmatprep.subr.mxu0 0.0
      %1735 = vmatpush1.msra.mxu0 %v1685
      %1736 = vmatprep.subr.mxu0 0.0
      %1737 = vmatpush1.msra.mxu0 %v1686
      %1738 = vmatprep.subr.mxu0 0.0
      %1739 = vmatpush1.msra.mxu0 %v1687
      %1740 = vmatprep.subr.mxu0 0.0
      %1741 = vmatpush1.msra.mxu0 %v1688
      %1742 = vmatprep.subr.mxu0 0.0
      %1743 = vmatpush1.msra.mxu0 %v1689
      %1744 = vmatprep.subr.mxu0 0.0
      %1745 = vmatpush1.msra.mxu0 %v1690
      %1746 = vmatprep.subr.mxu0 0.0
      %1747 = vmatpush1.msra.mxu0 %v1691
      %1748 = vmatprep.subr.mxu0 0.0
      %1749 = vmatpush1.msra.mxu0 %v1692
      %1750 = vmatprep.subr.mxu0 0.0
      %1751 = vmatpush1.msra.mxu0 %v1693
      %1752 = vmatprep.subr.mxu0 0.0
      %1753 = vmatpush1.msra.mxu0 %v1694
      %1754 = vmatprep.subr.mxu0 0.0
      %1755 = vmatpush1.msra.mxu0 %v1695
      %1756 = vmatprep.subr.mxu0 0.0
      %1757 = vmatpush1.msra.mxu0 %v1696
      %1758 = vmatprep.subr.mxu0 0.0
      %1759 = vmatpush1.msra.mxu0 %v1697
      %1760 = vmatprep.subr.mxu0 0.0
      %1761 = vmatpush1.msra.mxu0 %v1698
      %1762 = vmatprep.subr.mxu0 0.0
      %1763 = vmatpush1.msra.mxu0 %v1699
      %1764 = vmatprep.mubr.f32.mxu0 %v1667
      %1765 = vmatmul.mubr.f32.gmra.mrb[0].mxu0 %v1660
      %v1766 = vpop.f32.mrb[0].mxu0
      %v1767 = vadd.f32 0.0, %v1766
      %v1768 = vpop.f32.mrb[0].mxu0
      %1769 = vdwg.mxu0
      %v1770 = vld [vmem:[%s9] sm:$0xff]
      %v1771 = vld [vmem:[%s9 + $0x8] sm:$0xff]
      %v1772 = vld [vmem:[%s10] sm:$0x1]
      %vm1773 = vcmask 130048
      %v1775 = vsel %vm1773, %v1767, 0
      %1777 = vmatprep.subr.mxu0 0.0
      %1778 = vmatpush1.msra.mxu0 %v1770
      %1779 = vmatprep.subr.mxu0 0.0
      %1780 = vmatpush1.msra.mxu0 %v1771
      %1781 = vmatprep.subr.mxu0 0.0
      %1782 = vmatpush1.msra.mxu0 0.0
      %1783 = vmatprep.subr.mxu0 0.0
      %1784 = vmatpush1.msra.mxu0 0.0
      %1785 = vmatprep.subr.mxu0 0.0
      %1786 = vmatpush1.msra.mxu0 0.0
      %1787 = vmatprep.subr.mxu0 0.0
      %1788 = vmatpush1.msra.mxu0 0.0
      %1789 = vmatprep.subr.mxu0 0.0
      %1790 = vmatpush1.msra.mxu0 0.0
      %1791 = vmatprep.subr.mxu0 0.0
      %1792 = vmatpush1.msra.mxu0 0.0
      %1793 = vmatprep.subr.mxu0 0.0
      %1794 = vmatpush1.msra.mxu0 0.0
      %1795 = vmatprep.subr.mxu0 0.0
      %1796 = vmatpush1.msra.mxu0 0.0
      %1797 = vmatprep.subr.mxu0 0.0
      %1798 = vmatpush1.msra.mxu0 0.0
      %1799 = vmatprep.subr.mxu0 0.0
      %1800 = vmatpush1.msra.mxu0 0.0
      %1801 = vmatprep.subr.mxu0 0.0
      %1802 = vmatpush1.msra.mxu0 0.0
      %1803 = vmatprep.subr.mxu0 0.0
      %1804 = vmatpush1.msra.mxu0 0.0
      %1805 = vmatprep.subr.mxu0 0.0
      %1806 = vmatpush1.msra.mxu0 0.0
      %1807 = vmatprep.subr.mxu0 0.0
      %1808 = vmatpush1.msra.mxu0 0.0
      %1809 = vmatprep.subr.mxu0 0.0
      %1810 = vmatpush1.msra.mxu0 0.0
      %1811 = vmatprep.subr.mxu0 0.0
      %1812 = vmatpush1.msra.mxu0 0.0
      %1813 = vmatprep.subr.mxu0 0.0
      %1814 = vmatpush1.msra.mxu0 0.0
      %1815 = vmatprep.subr.mxu0 0.0
      %1816 = vmatpush1.msra.mxu0 0.0
      %1817 = vmatprep.subr.mxu0 0.0
      %1818 = vmatpush1.msra.mxu0 0.0
      %1819 = vmatprep.subr.mxu0 0.0
      %1820 = vmatpush1.msra.mxu0 0.0
      %1821 = vmatprep.subr.mxu0 0.0
      %1822 = vmatpush1.msra.mxu0 0.0
      %1823 = vmatprep.subr.mxu0 0.0
      %1824 = vmatpush1.msra.mxu0 0.0
      %1825 = vmatprep.subr.mxu0 0.0
      %1826 = vmatpush1.msra.mxu0 0.0
      %1827 = vmatprep.subr.mxu0 0.0
      %1828 = vmatpush1.msra.mxu0 0.0
      %1829 = vmatprep.subr.mxu0 0.0
      %1830 = vmatpush1.msra.mxu0 0.0
      %1831 = vmatprep.subr.mxu0 0.0
      %1832 = vmatpush1.msra.mxu0 0.0
      %1833 = vmatprep.subr.mxu0 0.0
      %1834 = vmatpush1.msra.mxu0 0.0
      %1835 = vmatprep.subr.mxu0 0.0
      %1836 = vmatpush1.msra.mxu0 0.0
      %1837 = vmatprep.subr.mxu0 0.0
      %1838 = vmatpush1.msra.mxu0 0.0
      %1839 = vmatprep.subr.mxu0 0.0
      %1840 = vmatpush1.msra.mxu0 0.0
      %1841 = vmatprep.mubr.f32.mxu0 0.0
      %1842 = vmatmul.mubr.f32.gmra.mrb[0].mxu0 %v1775
      %v1843 = vpop.f32.mrb[0].mxu0
      %v1844 = vadd.f32 %v1772, %v1843
      %v1845 = vpop.f32.mrb[0].mxu0
      %1846 = vdwg.mxu0
      %v1847 = vxor.u32 %v1844, 2147483648
      %v1848 = vmul.f32 %v1847, 1.442695
      %v1849 = vpow.pop %v1848
      %v1850 = vadd.f32 %v1849, 1.0
      %v1851 = vrcp.pop %v1850
      %v1852 = vmul.f32 1.0, %v1851
      %v1853 = vmul.f32 %v1844, %v1852
      %v1854 = vld [vmem:[%s11] sm:$0xff]
      %v1855 = vld [vmem:[%s12] sm:$0x1]
      %vm1856 = vcmask 64512
      %v1858 = vsel %vm1856, %v1853, 0
      %1860 = vmatprep.subr.mxu0 0.0
      %1861 = vmatpush1.msra.mxu0 %v1854
      %1862 = vmatprep.subr.mxu0 0.0
      %1863 = vmatpush1.msra.mxu0 0.0
      %1864 = vmatprep.subr.mxu0 0.0
      %1865 = vmatpush1.msra.mxu0 0.0
      %1866 = vmatprep.subr.mxu0 0.0
      %1867 = vmatpush1.msra.mxu0 0.0
      %1868 = vmatprep.subr.mxu0 0.0
      %1869 = vmatpush1.msra.mxu0 0.0
      %1870 = vmatprep.subr.mxu0 0.0
      %1871 = vmatpush1.msra.mxu0 0.0
      %1872 = vmatprep.subr.mxu0 0.0
      %1873 = vmatpush1.msra.mxu0 0.0
      %1874 = vmatprep.subr.mxu0 0.0
      %1875 = vmatpush1.msra.mxu0 0.0
      %1876 = vmatprep.subr.mxu0 0.0
      %1877 = vmatpush1.msra.mxu0 0.0
      %1878 = vmatprep.subr.mxu0 0.0
      %1879 = vmatpush1.msra.mxu0 0.0
      %1880 = vmatprep.subr.mxu0 0.0
      %1881 = vmatpush1.msra.mxu0 0.0
      %1882 = vmatprep.subr.mxu0 0.0
      %1883 = vmatpush1.msra.mxu0 0.0
      %1884 = vmatprep.subr.mxu0 0.0
      %1885 = vmatpush1.msra.mxu0 0.0
      %1886 = vmatprep.subr.mxu0 0.0
      %1887 = vmatpush1.msra.mxu0 0.0
      %1888 = vmatprep.subr.mxu0 0.0
      %1889 = vmatpush1.msra.mxu0 0.0
      %1890 = vmatprep.subr.mxu0 0.0
      %1891 = vmatpush1.msra.mxu0 0.0
      %1892 = vmatprep.subr.mxu0 0.0
      %1893 = vmatpush1.msra.mxu0 0.0
      %1894 = vmatprep.subr.mxu0 0.0
      %1895 = vmatpush1.msra.mxu0 0.0
      %1896 = vmatprep.subr.mxu0 0.0
      %1897 = vmatpush1.msra.mxu0 0.0
      %1898 = vmatprep.subr.mxu0 0.0
      %1899 = vmatpush1.msra.mxu0 0.0
      %1900 = vmatprep.subr.mxu0 0.0
      %1901 = vmatpush1.msra.mxu0 0.0
      %1902 = vmatprep.subr.mxu0 0.0
      %1903 = vmatpush1.msra.mxu0 0.0
      %1904 = vmatprep.subr.mxu0 0.0
      %1905 = vmatpush1.msra.mxu0 0.0
      %1906 = vmatprep.subr.mxu0 0.0
      %1907 = vmatpush1.msra.mxu0 0.0
      %1908 = vmatprep.subr.mxu0 0.0
      %1909 = vmatpush1.msra.mxu0 0.0
      %1910 = vmatprep.subr.mxu0 0.0
      %1911 = vmatpush1.msra.mxu0 0.0
      %1912 = vmatprep.subr.mxu0 0.0
      %1913 = vmatpush1.msra.mxu0 0.0
      %1914 = vmatprep.subr.mxu0 0.0
      %1915 = vmatpush1.msra.mxu0 0.0
      %1916 = vmatprep.subr.mxu0 0.0
      %1917 = vmatpush1.msra.mxu0 0.0
      %1918 = vmatprep.subr.mxu0 0.0
      %1919 = vmatpush1.msra.mxu0 0.0
      %1920 = vmatprep.subr.mxu0 0.0
      %1921 = vmatpush1.msra.mxu0 0.0
      %1922 = vmatprep.subr.mxu0 0.0
      %1923 = vmatpush1.msra.mxu0 0.0
      %1924 = vmatprep.mubr.f32.mxu0 0.0
      %1925 = vmatmul.mubr.f32.gmra.mrb[0].mxu0 %v1858
      %v1926 = vpop.f32.mrb[0].mxu0
      %v1927 = vadd.f32 %v1855, %v1926
      %v1928 = vpop.f32.mrb[0].mxu0
      %1929 = vdwg.mxu0
      %v1930 = vxor.u32 %v1927, 2147483648
      %v1931 = vmul.f32 %v1930, 1.442695
      %v1932 = vpow.pop %v1931
      %v1933 = vadd.f32 %v1932, 1.0
      %v1934 = vrcp.pop %v1933
      %v1935 = vmul.f32 1.0, %v1934
      %v1936 = vld [vmem:[%s8] sm:$0xff]
      %v1937 = vld [vmem:[%s8 + $0x8] sm:$0xff]
      %v1938 = vld [vmem:[%s8 + $0x10] sm:$0xff]
      %v1939 = vld [vmem:[%s8 + $0x18] sm:$0xff]
      %v1941 = vsel %vm1773, %v1935, 0
      %1943 = vmatprep.subr.mxu0 %v1937
      %1944 = vmatpush1.msra.mxu0 %v1936
      %1945 = vmatprep.subr.mxu0 %v1939
      %1946 = vmatpush1.msra.mxu0 %v1938
      %1947 = vmatprep.subr.mxu0 0.0
      %1948 = vmatpush1.msra.mxu0 0.0
      %1949 = vmatprep.subr.mxu0 0.0
      %1950 = vmatpush1.msra.mxu0 0.0
      %1951 = vmatprep.subr.mxu0 0.0
      %1952 = vmatpush1.msra.mxu0 0.0
      %1953 = vmatprep.subr.mxu0 0.0
      %1954 = vmatpush1.msra.mxu0 0.0
      %1955 = vmatprep.subr.mxu0 0.0
      %1956 = vmatpush1.msra.mxu0 0.0
      %1957 = vmatprep.subr.mxu0 0.0
      %1958 = vmatpush1.msra.mxu0 0.0
      %1959 = vmatprep.subr.mxu0 0.0
      %1960 = vmatpush1.msra.mxu0 0.0
      %1961 = vmatprep.subr.mxu0 0.0
      %1962 = vmatpush1.msra.mxu0 0.0
      %1963 = vmatprep.subr.mxu0 0.0
      %1964 = vmatpush1.msra.mxu0 0.0
      %1965 = vmatprep.subr.mxu0 0.0
      %1966 = vmatpush1.msra.mxu0 0.0
      %1967 = vmatprep.subr.mxu0 0.0
      %1968 = vmatpush1.msra.mxu0 0.0
      %1969 = vmatprep.subr.mxu0 0.0
      %1970 = vmatpush1.msra.mxu0 0.0
      %1971 = vmatprep.subr.mxu0 0.0
      %1972 = vmatpush1.msra.mxu0 0.0
      %1973 = vmatprep.subr.mxu0 0.0
      %1974 = vmatpush1.msra.mxu0 0.0
      %1975 = vmatprep.subr.mxu0 0.0
      %1976 = vmatpush1.msra.mxu0 0.0
      %1977 = vmatprep.subr.mxu0 0.0
      %1978 = vmatpush1.msra.mxu0 0.0
      %1979 = vmatprep.subr.mxu0 0.0
      %1980 = vmatpush1.msra.mxu0 0.0
      %1981 = vmatprep.subr.mxu0 0.0
      %1982 = vmatpush1.msra.mxu0 0.0
      %1983 = vmatprep.subr.mxu0 0.0
      %1984 = vmatpush1.msra.mxu0 0.0
      %1985 = vmatprep.subr.mxu0 0.0
      %1986 = vmatpush1.msra.mxu0 0.0
      %1987 = vmatprep.subr.mxu0 0.0
      %1988 = vmatpush1.msra.mxu0 0.0
      %1989 = vmatprep.subr.mxu0 0.0
      %1990 = vmatpush1.msra.mxu0 0.0
      %1991 = vmatprep.subr.mxu0 0.0
      %1992 = vmatpush1.msra.mxu0 0.0
      %1993 = vmatprep.subr.mxu0 0.0
      %1994 = vmatpush1.msra.mxu0 0.0
      %1995 = vmatprep.subr.mxu0 0.0
      %1996 = vmatpush1.msra.mxu0 0.0
      %1997 = vmatprep.subr.mxu0 0.0
      %1998 = vmatpush1.msra.mxu0 0.0
      %1999 = vmatprep.subr.mxu0 0.0
      %2000 = vmatpush1.msra.mxu0 0.0
      %2001 = vmatprep.subr.mxu0 0.0
      %2002 = vmatpush1.msra.mxu0 0.0
      %2003 = vmatprep.subr.mxu0 0.0
      %2004 = vmatpush1.msra.mxu0 0.0
      %2005 = vmatprep.subr.mxu0 0.0
      %2006 = vmatpush1.msra.mxu0 0.0
      %2007 = vmatprep.mubr.f32.mxu0 0.0
      %2008 = vmatmul.mubr.f32.gmra.mrb[0].mxu0 %v1941
      %v2009 = vpop.f32.mrb[0].mxu0
      %v2010 = vadd.f32 0.0, %v2009
      %v2011 = vpop.f32.mrb[0].mxu0
      %v2012 = vadd.f32 0.0, %v2011
      %2013 = vdwg.mxu0
      %v2014 = vlaneseq
      %v2015 = vshrl.u32 %v2014, 7
      %v2016 = vsub.s32 0, %v2015
      %v2017 = vrot.slane %v2010, %v2016
      %v2018 = vlaneseq
      %v2019 = vshrl.u32 %v2018, 7
      %v2020 = vsub.s32 0, %v2019
      %v2021 = vrot.slane %v2012, %v2020
      %v2022 = vmul.f32 %v1650, %v2017
      %v2023 = vmul.f32 %v1651, %v2021
      %v2024 = vmul.f32 %v1652, %v2017
      %v2025 = vmul.f32 %v1653, %v2021
      %2026 = vst [vmem:[%s488] sm:$0xff] %v2022
      %2027 = vst [vmem:[%s488 + $0x8] sm:$0xff] %v2023
      %2028 = vst [vmem:[%s488 + $0x10] sm:$0xff] %v2024
      %2029 = vst [vmem:[%s488 + $0x18] sm:$0xff] %v2025
      %s2030 = smul.u32 2, %s24
      %p2031 = scmp.lt.s32.totalorder %s2030, 3
      %s2032 = scalar_select %p2031, %s2030, 3
      %s2033 = smul.addr %s2032, 2
      %s2034 = smul.addr %s2033, 8
      %s2035 = scalar_lea.vmem %s13, %s2034
      // Predicated region
      $region73: #{rcsosa_forward.7} parent=71 // pred_check
        %p2036 = pneg %p330
      $region74: #{rcsosa_forward.7} parent=71 // pred_check_branch
        %2038 = sbr.rel (%p2036) target = $region76
      $region75: #{rcsosa_forward.7} parent=71 // pred_region
        %s2039 = smul.u32 2, %s24
      $region76: #{rcsosa_forward.7} parent=71 // pred_fallthru
        _
    $region72: #{rcsosa_forward.7} parent=5 // pred_fallthru
      _
    %p2040 = scmp.le.s32.totalorder 2, %s19
    // Predicated region
    $region77: #{rcsosa_forward.7} parent=5 // pred_check
      %p2041 = pneg %p2040
    $region78: #{rcsosa_forward.7} parent=5 // pred_check_branch
      %2043 = sbr.rel (%p2041) target = $region80
    $region79: #{rcsosa_forward.7} parent=5 // pred_region
      %s2044 = ssub.s32 %s19, 2
      // Predicated region
      $region81: #{rcsosa_forward.7} parent=79 // pred_check
        %p2045 = pneg %p336
      $region82: #{rcsosa_forward.7} parent=79 // pred_check_branch
        %2047 = sbr.rel (%p2045) target = $region84
      $region83: #{rcsosa_forward.7} parent=79 // pred_region
        %s2048 = smul.u32 2, %s25
        %p2049 = scmp.lt.s32.totalorder %s2048, 3
        %s2050 = scalar_select %p2049, %s2048, 3
        %s2051 = smul.addr %s2050, 2
        %s2052 = smul.addr %s2051, 8
        %s2053 = scalar_lea.vmem %s13, %s2052
      $region84: #{rcsosa_forward.7} parent=79 // pred_fallthru
        _
    $region80: #{rcsosa_forward.7} parent=5 // pred_fallthru
      _
  $region6: #{rcsosa_forward.7} parent=0 // loop_footer
    %s23 = sadd.s32 1, %s19
  $region7: #{rcsosa_forward.7} parent=0 // loop_footer_branch
    %18 = sbr.rel target = $region3
  $region8: #{rcsosa_forward.7} parent=0 // loop_exit
    _

</llo_original>
